<compile_context>
chip_gen: v7x
topology: tpu7x:2x2x1
jax: 0.10.0
libtpu: 0.0.40
codegen_flags: <defaults>
</compile_context>

<pallas_src>
import functools

import numpy as np

import jax
import jax.numpy as jnp
from jax import lax
from jax.experimental import pallas as pl
from jax.experimental.pallas import tpu as pltpu


# ----------------------------------------------------------------------------
# One-time weight preprocessing (host / numpy): fold the width window of every
# conv (including its width zero padding) into dense matrices so that the
# kernel body is matmul-only.
# ----------------------------------------------------------------------------
def _out_size(size, k, s, p):
    return (size + 2 * p - k) // s + 1


def _width_band_matrix(w, w_in, stride, pad):
    """w: [Cout, Cin, KH, KW] -> [KH, W_in*Cin, W_out*Cout] (numpy f32).

    band[kh, (wi, ci), (ow, co)] = w[co, ci, kh, kw]  iff  wi == stride*ow+kw-pad
    (taps that fall in the width zero padding are simply absent / zero)."""
    cout, cin, kh_, kw_ = w.shape
    w_out = _out_size(w_in, kw_, stride, pad)
    m = np.zeros((kh_, w_in, cin, w_out, cout), np.float32)
    for ow in range(w_out):
        for kw in range(kw_):
            wi = stride * ow + kw - pad
            if 0 <= wi < w_in:
                m[:, wi, :, ow, :] = np.transpose(w[:, :, :, kw], (2, 1, 0))
    return m.reshape(kh_, w_in * cin, w_out * cout)


def _dense_conv_matrix(w, h_in, w_in, stride, pad):
    """w: [Cout, Cin, KH, KW] -> dense [(h,w,ci), (oh,ow,co)] conv matrix (numpy f32)."""
    cout, cin, kh_, kw_ = w.shape
    h_out = _out_size(h_in, kh_, stride, pad)
    w_out = _out_size(w_in, kw_, stride, pad)
    m = np.zeros((h_in, w_in, cin, h_out, w_out, cout), np.float32)
    for oh in range(h_out):
        for ow in range(w_out):
            for kh in range(kh_):
                for kw in range(kw_):
                    hi = stride * oh + kh - pad
                    wi = stride * ow + kw - pad
                    if 0 <= hi < h_in and 0 <= wi < w_in:
                        m[hi, wi, :, oh, ow, :] = w[:, :, kh, kw].T
    return m.reshape(h_in * w_in * cin, h_out * w_out * cout)


# ----------------------------------------------------------------------------
# Fused Pallas kernel: conv1 -> LReLU -> conv2 -> LReLU -> conv3 -> LReLU ->
# conv4 (-> sigmoid), for one batch tile of `tb` samples per grid step.
# ----------------------------------------------------------------------------
def _disc_ecal_kernel(xe_ref, xo_ref, w1_ref, w2_ref, w3_ref, w4_ref, o_ref,
                      *, tb, h2, taps, sigmoid):
    """All 2-D activation matrices use row index = row_group * tb + sample, so a
    conv's height window is an 8-aligned unit-stride row slice and the stride-2
    height subsampling is absorbed by keeping even / odd output-row phases in
    separate matrices.  Lane dims are (w, c)-flattened feature vectors that the
    resident band matrices map between (width window + padding folded in)."""

    def mm(a, b):
        return jnp.dot(a, b, preferred_element_type=jnp.float32)

    def lrelu(y):
        return jnp.maximum(y, 0.2 * y)          # LeakyReLU(0.2), slope < 1

    w1 = w1_ref[...]
    rows2 = h2 * tb
    acc = None
    # conv1 (k=2,s=2,p=1)+LReLU per output-row phase, each phase immediately
    # consumed by its conv2 (k=4,s=2,p=1) height taps (one phase live at a time).
    for use_odd, x_ref in ((False, xe_ref), (True, xo_ref)):
        y1 = lrelu(mm(x_ref[...], w1)).astype(jnp.bfloat16)
        for kh, (tap_odd, off) in enumerate(taps):
            if tap_odd != use_odd:
                continue
            term = mm(y1[off * tb: off * tb + rows2, :], w2_ref[kh])
            acc = term if acc is None else acc + term
    y2 = lrelu(acc).astype(jnp.bfloat16)        # [h2*tb, W2*C2]

    # conv3 (k=4,s=2,p=1) as one dense per-sample matmul: gather the h2 row
    # groups into the lane dim ((h, w, c) order matches w3_ref's rows).
    ycat = jnp.concatenate([y2[r * tb:(r + 1) * tb, :] for r in range(h2)],
                           axis=-1)             # [tb, h2*W2*C2]
    y3 = lrelu(mm(ycat, w3_ref[...]))           # [tb, H3*W3*C3] f32

    # conv4 (k=4,s=1,p=0, Cout=1): per-sample dot product on the VPU/XLU,
    # then the numerically stable sigmoid for the GAN head.
    z = jnp.sum(y3 * w4_ref[...], axis=-1, keepdims=True)      # [tb, 1]
    if sigmoid:
        e = jnp.exp(-jnp.abs(z))
        z = jnp.where(z >= 0.0, 1.0 / (1.0 + e), e / (1.0 + e))
    o_ref[...] = z.astype(o_ref.dtype)


# ----------------------------------------------------------------------------
# Builder: preprocess the weights once, return a jitted forward function.
# ----------------------------------------------------------------------------
def build_disc_ecal_forward(params, img_hw, gan_type="GAN", *, tile_b=8):
    """Returns a jitted fn mapping x[N, nc, H, W] (NCHW f32) -> [N, 1, 1, 1].

    tile_b: samples per grid step; must be a multiple of 8 (sublane tiling of
    the [N, 1] output block).  On v7x (2 TensorCores) prefer N/tile_b >= 4 so
    each core pipelines >= 2 steps; on single-core v5e/v6e fewer, larger steps
    are better (each grid step costs ~0.35 us fixed overhead)."""
    w1, w2, w3, w4 = (np.asarray(jax.device_get(w), np.float32) for w in params)
    H, W = img_hw
    nc, c1, c2, c3 = w1.shape[1], w1.shape[0], w2.shape[0], w3.shape[0]

    # DiscEcal geometry (from the module's __init__).
    assert w1.shape[2:] == (2, 2) and w2.shape[2:] == (4, 4)
    assert w3.shape[2:] == (4, 4) and w4.shape[2:] == (4, 4) and w4.shape[0] == 1
    assert w2.shape[1] == c1 and w3.shape[1] == c2 and w4.shape[1] == c3
    assert H % 2 == 0, "conv1 (k=2,s=2,p=1) row-pair banding needs an even input height"
    assert tile_b % 8 == 0, "tile_b must be a multiple of 8"

    h1, w1s = _out_size(H, 2, 2, 1), _out_size(W, 2, 2, 1)      # conv1 out
    h2, w2s = _out_size(h1, 4, 2, 1), _out_size(w1s, 4, 2, 1)   # conv2 out
    h3, w3s = _out_size(h2, 4, 2, 1), _out_size(w2s, 4, 2, 1)   # conv3 out
    assert (h3, w3s) == (4, 4), "conv4 needs a 4x4 conv3 output (32x32 input)"

    n_even = (h1 + 1) // 2      # conv1 output rows 0, 2, 4, ...
    n_odd = h1 // 2 + 1         # a zero pad row + conv1 output rows 1, 3, ...
    k2 = 4                      # conv2 kernel size
    # conv2 height tap kh reads conv1 output row 2*oh + kh - 1:
    #   kh even -> odd-phase buffer at index oh + kh//2 (index 0 is the zero row)
    #   kh odd  -> even-phase buffer at index oh + (kh-1)//2
    taps = tuple((kh % 2 == 0, kh // 2 if kh % 2 == 0 else (kh - 1) // 2)
                 for kh in range(k2))
    for tap_odd, off in taps:
        assert off + h2 <= (n_odd if tap_odd else n_even)

    k1 = 2 * W * nc             # conv1 band width         (192)
    lane1 = w1s * c1            # conv1 output lane width  (544)
    lane2 = w2s * c2            # conv2 output lane width  (128)
    k3 = h2 * lane2             # conv3 dense K            (1024)
    n3 = h3 * w3s * c3          # conv3 dense N            (512)

    w1_band = jnp.asarray(
        _width_band_matrix(w1, W, 2, 1).reshape(k1, lane1), jnp.bfloat16)
    w2_band = jnp.asarray(_width_band_matrix(w2, w1s, 2, 1), jnp.bfloat16)     # [4,544,128]
    w3_dense = jnp.asarray(_dense_conv_matrix(w3, h2, w2s, 2, 1), jnp.bfloat16)  # [1024,512]
    w4_row = jnp.asarray(_dense_conv_matrix(w4, h3, w3s, 1, 0).T, jnp.float32)   # [1,512]

    tb = tile_b
    kernel = functools.partial(_disc_ecal_kernel, tb=tb, h2=h2, taps=taps,
                               sigmoid=(gan_type == "GAN"))

    def forward(x):
        n = x.shape[0]
        n_pad = -(-n // tb) * tb
        if n_pad != n:
            x = jnp.pad(x, ((0, n_pad - n), (0, 0), (0, 0), (0, 0)))
        n_tiles = n_pad // tb

        # Input banding + even/odd output-row phase split (tiny XLA glue on the
        # raw input only; conv1 has k == s == 2 so its row bands are just pairs
        # of padded rows; the width window + padding live in w1_band).
        xh = jnp.transpose(x, (0, 2, 3, 1))                         # NCHW -> NHWC
        xp = jnp.pad(xh, ((0, 0), (1, 1), (0, 0), (0, 0)))          # conv1 H padding
        bands = xp.reshape(n_pad, h1, k1)                           # (kh, w, ci) minor
        xe = bands[:, 0::2, :]                                      # even conv1 rows
        xo = jnp.pad(bands[:, 1::2, :], ((0, 0), (1, 0), (0, 0)))   # zero row + odd rows

        def tile_rows(a, rows):
            # [N, rows, k1] -> [n_tiles*rows*tb, k1], row index = (tile, row, sample)
            a = a.reshape(n_tiles, tb, rows, k1).transpose(0, 2, 1, 3)
            return a.reshape(n_tiles * rows * tb, k1).astype(jnp.bfloat16)

        xe2, xo2 = tile_rows(xe, n_even), tile_rows(xo, n_odd)

        flops = 2 * n_pad * ((n_even + n_odd) * k1 * lane1
                             + k2 * h2 * lane1 * lane2 + k3 * n3 + n3)
        bytes_accessed = int(2 * (xe2.size + xo2.size)
                             + 2 * (w1_band.size + w2_band.size + w3_dense.size)
                             + 4 * w4_row.size + 4 * n_pad)

        out = pl.pallas_call(
            kernel,
            out_shape=jax.ShapeDtypeStruct((n_pad, 1), jnp.float32),
            grid=(n_tiles,),
            in_specs=[
                pl.BlockSpec((n_even * tb, k1), lambda i: (i, 0)),      # conv1 even bands
                pl.BlockSpec((n_odd * tb, k1), lambda i: (i, 0)),       # conv1 odd bands
                pl.BlockSpec((k1, lane1), lambda i: (0, 0)),            # conv1 band matrix
                pl.BlockSpec((k2, lane1, lane2), lambda i: (0, 0, 0)),  # conv2 band matrices
                pl.BlockSpec((k3, n3), lambda i: (0, 0)),               # conv3 dense matrix
                pl.BlockSpec((1, n3), lambda i: (0, 0)),                # conv4 weight row
            ],
            out_specs=pl.BlockSpec((tb, 1), lambda i: (i, 0)),
            compiler_params=pltpu.CompilerParams(
                dimension_semantics=("parallel",)),
            cost_estimate=pl.CostEstimate(
                flops=int(flops), transcendentals=int(n_pad),
                bytes_accessed=bytes_accessed),
        )(xe2, xo2, w1_band, w2_band, w3_dense, w4_row)
        return out[:n].reshape(n, 1, 1, 1)

    return jax.jit(forward)


# ----------------------------------------------------------------------------
# Parameter init + pure-JAX reference (for verification only).
# ----------------------------------------------------------------------------
def init_disc_ecal_params(key, nc, img_size, nf, std=0.1):
    """Conv weight shapes straight from the module's __init__ ([Cout, Cin, KH, KW])."""
    k1, k2, k3, k4 = jax.random.split(key, 4)
    w1 = std * jax.random.normal(k1, (img_size, nc, 2, 2), jnp.float32)
    w2 = std * jax.random.normal(k2, (nf * 2, img_size, 4, 4), jnp.float32)
    w3 = std * jax.random.normal(k3, (nf * 4, nf * 2, 4, 4), jnp.float32)
    w4 = std * jax.random.normal(k4, (1, nf * 4, 4, 4), jnp.float32)
    return (w1, w2, w3, w4)


def disc_ecal_reference(x, params, gan_type="GAN"):
    w1, w2, w3, w4 = params
    y = x
    for w, s, p in ((w1, 2, 1), (w2, 2, 1), (w3, 2, 1)):
        y = lax.conv_general_dilated(y, w, (s, s), [(p, p), (p, p)],
                                     dimension_numbers=("NCHW", "OIHW", "NCHW"))
        y = jnp.maximum(y, 0.2 * y)
    y = lax.conv_general_dilated(y, w4, (1, 1), [(0, 0), (0, 0)],
                                 dimension_numbers=("NCHW", "OIHW", "NCHW"))
    if gan_type == "GAN":
        y = jax.nn.sigmoid(y)
    return y


if __name__ == "__main__":
    # The 4-conv stack maps spatial 32 -> 17 -> 8 -> 4 -> 1 (conv4 needs the 4x4).
    N, nc, H, W = 16, 3, 32, 32     # problem.nc = 3
    img_size = 32                   # problem.imgSize (= conv1 out channels)
    nf = 8                          # problem.nf -> nfx2 = 16, nfx4 = 32

    key = jax.random.PRNGKey(0)
    k_x, k_p = jax.random.split(key)
    x = jax.random.normal(k_x, (N, nc, H, W), jnp.float32)
    params = init_disc_ecal_params(k_p, nc, img_size, nf)

    fwd = build_disc_ecal_forward(params, (H, W), gan_type="GAN", tile_b=8)
    out = jax.block_until_ready(fwd(x))

    assert out.shape == (N, 1, 1, 1), out.shape
    assert bool(jnp.all(jnp.isfinite(out)))
    assert bool(jnp.all((out >= 0.0) & (out <= 1.0)))   # sigmoid range

    # bf16 MXU operands (f32 accumulation) vs the f32 reference -> loose tolerance.
    ref = disc_ecal_reference(x, params, gan_type="GAN")
    np.testing.assert_allclose(np.asarray(out), np.asarray(ref), atol=3e-2, rtol=3e-2)
    print("KERNEL_OK")
</pallas_src>

<mosaic_0001>
module attributes {stable_mosaic.version = 11 : i64} {
  func.func @_disc_ecal_kernel(%arg0: i32, %arg1: memref<72x192xbf16, #tpu.memory_space<vmem>>, %arg2: memref<72x192xbf16, #tpu.memory_space<vmem>>, %arg3: memref<192x544xbf16, #tpu.memory_space<vmem>>, %arg4: memref<4x544x128xbf16, #tpu.memory_space<vmem>>, %arg5: memref<1024x512xbf16, #tpu.memory_space<vmem>>, %arg6: memref<1x512xf32, #tpu.memory_space<vmem>>, %arg7: memref<8x1xf32, #tpu.memory_space<vmem>>) attributes {dimension_semantics = [#tpu.dimension_semantics<parallel>], iteration_bounds = array<i64: 2>, scalar_prefetch = 0 : i64, scratch_operands = 0 : i64, tpu.core_type = #tpu.core_type<tc>, window_params = [{transform_indices = @transform_0, window_bounds = array<i64: 72, 192>}, {transform_indices = @transform_1, window_bounds = array<i64: 72, 192>}, {pipeline_mode = #tpu.pipeline_mode<synchronous>, transform_indices = @transform_2, window_bounds = array<i64: 192, 544>}, {pipeline_mode = #tpu.pipeline_mode<synchronous>, transform_indices = @transform_3, window_bounds = array<i64: 4, 544, 128>}, {pipeline_mode = #tpu.pipeline_mode<synchronous>, transform_indices = @transform_4, window_bounds = array<i64: 1024, 512>}, {pipeline_mode = #tpu.pipeline_mode<synchronous>, transform_indices = @transform_5, window_bounds = array<i64: 1, 512>}, {transform_indices = @transform_6, window_bounds = array<i64: 8, 1>}]} {
    %c0 = arith.constant 0 : index
    %c0_0 = arith.constant 0 : index
    %0 = vector.load %arg3[%c0, %c0_0] : memref<192x544xbf16, #tpu.memory_space<vmem>>, vector<192x544xbf16>
    %c0_1 = arith.constant 0 : index
    %c0_2 = arith.constant 0 : index
    %1 = vector.load %arg1[%c0_1, %c0_2] : memref<72x192xbf16, #tpu.memory_space<vmem>>, vector<72x192xbf16>
    %cst = arith.constant dense<0.000000e+00> : vector<72x544xf32>
    %2 = tpu.matmul %1, %0, %cst {dimension_numbers = #tpu.dot_dimension_numbers<[1], [0], [0], [1], [0, 0, 1, 1], [], []>} : vector<72x192xbf16>, vector<192x544xbf16>, vector<72x544xf32> -> vector<72x544xf32>
    %cst_3 = arith.constant 2.000000e-01 : f32
    %3 = vector.broadcast %cst_3 : f32 to vector<72x544xf32>
    %4 = arith.mulf %3, %2 : vector<72x544xf32>
    %5 = arith.maximumf %2, %4 : vector<72x544xf32>
    %6 = arith.truncf %5 : vector<72x544xf32> to vector<72x544xbf16>
    %7 = vector.extract_strided_slice %6 {offsets = [0, 0], sizes = [64, 544], strides = [1, 1]} : vector<72x544xbf16> to vector<64x544xbf16>
    %c1 = arith.constant 1 : index
    %c0_4 = arith.constant 0 : index
    %c0_5 = arith.constant 0 : index
    %8 = vector.load %arg4[%c1, %c0_4, %c0_5] : memref<4x544x128xbf16, #tpu.memory_space<vmem>>, vector<1x544x128xbf16>
    %9 = vector.shape_cast %8 : vector<1x544x128xbf16> to vector<544x128xbf16>
    %cst_6 = arith.constant dense<0.000000e+00> : vector<64x128xf32>
    %10 = tpu.matmul %7, %9, %cst_6 {dimension_numbers = #tpu.dot_dimension_numbers<[1], [0], [0], [1], [0, 0, 1, 1], [], []>} : vector<64x544xbf16>, vector<544x128xbf16>, vector<64x128xf32> -> vector<64x128xf32>
    %11 = vector.extract_strided_slice %6 {offsets = [8, 0], sizes = [64, 544], strides = [1, 1]} : vector<72x544xbf16> to vector<64x544xbf16>
    %c3 = arith.constant 3 : index
    %c0_7 = arith.constant 0 : index
    %c0_8 = arith.constant 0 : index
    %12 = vector.load %arg4[%c3, %c0_7, %c0_8] : memref<4x544x128xbf16, #tpu.memory_space<vmem>>, vector<1x544x128xbf16>
    %13 = vector.shape_cast %12 : vector<1x544x128xbf16> to vector<544x128xbf16>
    %cst_9 = arith.constant dense<0.000000e+00> : vector<64x128xf32>
    %14 = tpu.matmul %11, %13, %cst_9 {dimension_numbers = #tpu.dot_dimension_numbers<[1], [0], [0], [1], [0, 0, 1, 1], [], []>} : vector<64x544xbf16>, vector<544x128xbf16>, vector<64x128xf32> -> vector<64x128xf32>
    %15 = arith.addf %10, %14 : vector<64x128xf32>
    %c0_10 = arith.constant 0 : index
    %c0_11 = arith.constant 0 : index
    %16 = vector.load %arg2[%c0_10, %c0_11] : memref<72x192xbf16, #tpu.memory_space<vmem>>, vector<72x192xbf16>
    %cst_12 = arith.constant dense<0.000000e+00> : vector<72x544xf32>
    %17 = tpu.matmul %16, %0, %cst_12 {dimension_numbers = #tpu.dot_dimension_numbers<[1], [0], [0], [1], [0, 0, 1, 1], [], []>} : vector<72x192xbf16>, vector<192x544xbf16>, vector<72x544xf32> -> vector<72x544xf32>
    %cst_13 = arith.constant 2.000000e-01 : f32
    %18 = vector.broadcast %cst_13 : f32 to vector<72x544xf32>
    %19 = arith.mulf %18, %17 : vector<72x544xf32>
    %20 = arith.maximumf %17, %19 : vector<72x544xf32>
    %21 = arith.truncf %20 : vector<72x544xf32> to vector<72x544xbf16>
    %22 = vector.extract_strided_slice %21 {offsets = [0, 0], sizes = [64, 544], strides = [1, 1]} : vector<72x544xbf16> to vector<64x544xbf16>
    %c0_14 = arith.constant 0 : index
    %c0_15 = arith.constant 0 : index
    %c0_16 = arith.constant 0 : index
    %23 = vector.load %arg4[%c0_14, %c0_15, %c0_16] : memref<4x544x128xbf16, #tpu.memory_space<vmem>>, vector<1x544x128xbf16>
    %24 = vector.shape_cast %23 : vector<1x544x128xbf16> to vector<544x128xbf16>
    %cst_17 = arith.constant dense<0.000000e+00> : vector<64x128xf32>
    %25 = tpu.matmul %22, %24, %cst_17 {dimension_numbers = #tpu.dot_dimension_numbers<[1], [0], [0], [1], [0, 0, 1, 1], [], []>} : vector<64x544xbf16>, vector<544x128xbf16>, vector<64x128xf32> -> vector<64x128xf32>
    %26 = arith.addf %15, %25 : vector<64x128xf32>
    %27 = vector.extract_strided_slice %21 {offsets = [8, 0], sizes = [64, 544], strides = [1, 1]} : vector<72x544xbf16> to vector<64x544xbf16>
    %c2 = arith.constant 2 : index
    %c0_18 = arith.constant 0 : index
    %c0_19 = arith.constant 0 : index
    %28 = vector.load %arg4[%c2, %c0_18, %c0_19] : memref<4x544x128xbf16, #tpu.memory_space<vmem>>, vector<1x544x128xbf16>
    %29 = vector.shape_cast %28 : vector<1x544x128xbf16> to vector<544x128xbf16>
    %cst_20 = arith.constant dense<0.000000e+00> : vector<64x128xf32>
    %30 = tpu.matmul %27, %29, %cst_20 {dimension_numbers = #tpu.dot_dimension_numbers<[1], [0], [0], [1], [0, 0, 1, 1], [], []>} : vector<64x544xbf16>, vector<544x128xbf16>, vector<64x128xf32> -> vector<64x128xf32>
    %31 = arith.addf %26, %30 : vector<64x128xf32>
    %cst_21 = arith.constant 2.000000e-01 : f32
    %32 = vector.broadcast %cst_21 : f32 to vector<64x128xf32>
    %33 = arith.mulf %32, %31 : vector<64x128xf32>
    %34 = arith.maximumf %31, %33 : vector<64x128xf32>
    %35 = arith.truncf %34 : vector<64x128xf32> to vector<64x128xbf16>
    %36 = vector.extract_strided_slice %35 {offsets = [0, 0], sizes = [8, 128], strides = [1, 1]} : vector<64x128xbf16> to vector<8x128xbf16>
    %37 = vector.extract_strided_slice %35 {offsets = [8, 0], sizes = [8, 128], strides = [1, 1]} : vector<64x128xbf16> to vector<8x128xbf16>
    %38 = vector.extract_strided_slice %35 {offsets = [16, 0], sizes = [8, 128], strides = [1, 1]} : vector<64x128xbf16> to vector<8x128xbf16>
    %39 = vector.extract_strided_slice %35 {offsets = [24, 0], sizes = [8, 128], strides = [1, 1]} : vector<64x128xbf16> to vector<8x128xbf16>
    %40 = vector.extract_strided_slice %35 {offsets = [32, 0], sizes = [8, 128], strides = [1, 1]} : vector<64x128xbf16> to vector<8x128xbf16>
    %41 = vector.extract_strided_slice %35 {offsets = [40, 0], sizes = [8, 128], strides = [1, 1]} : vector<64x128xbf16> to vector<8x128xbf16>
    %42 = vector.extract_strided_slice %35 {offsets = [48, 0], sizes = [8, 128], strides = [1, 1]} : vector<64x128xbf16> to vector<8x128xbf16>
    %43 = vector.extract_strided_slice %35 {offsets = [56, 0], sizes = [8, 128], strides = [1, 1]} : vector<64x128xbf16> to vector<8x128xbf16>
    %44 = tpu.concatenate %36, %37, %38, %39, %40, %41, %42, %43 in 1 : vector<8x128xbf16>, vector<8x128xbf16>, vector<8x128xbf16>, vector<8x128xbf16>, vector<8x128xbf16>, vector<8x128xbf16>, vector<8x128xbf16>, vector<8x128xbf16> -> vector<8x1024xbf16>
    %c0_22 = arith.constant 0 : index
    %c0_23 = arith.constant 0 : index
    %45 = vector.load %arg5[%c0_22, %c0_23] : memref<1024x512xbf16, #tpu.memory_space<vmem>>, vector<1024x512xbf16>
    %cst_24 = arith.constant dense<0.000000e+00> : vector<8x512xf32>
    %46 = tpu.matmul %44, %45, %cst_24 {dimension_numbers = #tpu.dot_dimension_numbers<[1], [0], [0], [1], [0, 0, 1, 1], [], []>} : vector<8x1024xbf16>, vector<1024x512xbf16>, vector<8x512xf32> -> vector<8x512xf32>
    %cst_25 = arith.constant 2.000000e-01 : f32
    %47 = vector.broadcast %cst_25 : f32 to vector<8x512xf32>
    %48 = arith.mulf %47, %46 : vector<8x512xf32>
    %49 = arith.maximumf %46, %48 : vector<8x512xf32>
    %c0_26 = arith.constant 0 : index
    %c0_27 = arith.constant 0 : index
    %50 = vector.load %arg6[%c0_26, %c0_27] : memref<1x512xf32, #tpu.memory_space<vmem>>, vector<1x512xf32>
    %51 = vector.broadcast %50 : vector<1x512xf32> to vector<8x512xf32>
    %52 = arith.mulf %49, %51 : vector<8x512xf32>
    %cst_28 = arith.constant dense<0.000000e+00> : vector<8xf32>
    %53 = vector.multi_reduction <add>, %52, %cst_28 [1] : vector<8x512xf32> to vector<8xf32>
    %54 = vector.shape_cast %53 : vector<8xf32> to vector<8x1xf32>
    %55 = math.absf %54 : vector<8x1xf32>
    %cst_29 = arith.constant 0.000000e+00 : f32
    %56 = vector.broadcast %cst_29 : f32 to vector<8x1xf32>
    %57 = arith.subf %56, %55 : vector<8x1xf32>
    %58 = math.exp %57 : vector<8x1xf32>
    %cst_30 = arith.constant 0.000000e+00 : f32
    %59 = vector.broadcast %cst_30 : f32 to vector<8x1xf32>
    %60 = arith.cmpf oge, %54, %59 : vector<8x1xf32>
    %cst_31 = arith.constant 1.000000e+00 : f32
    %61 = vector.broadcast %cst_31 : f32 to vector<8x1xf32>
    %62 = arith.addf %61, %58 : vector<8x1xf32>
    %cst_32 = arith.constant 1.000000e+00 : f32
    %63 = vector.broadcast %cst_32 : f32 to vector<8x1xf32>
    %64 = arith.divf %63, %62 : vector<8x1xf32>
    %cst_33 = arith.constant 1.000000e+00 : f32
    %65 = vector.broadcast %cst_33 : f32 to vector<8x1xf32>
    %66 = arith.addf %65, %58 : vector<8x1xf32>
    %67 = arith.divf %58, %66 : vector<8x1xf32>
    %68 = arith.select %60, %64, %67 : vector<8x1xi1>, vector<8x1xf32>
    %c0_34 = arith.constant 0 : index
    %c0_35 = arith.constant 0 : index
    %69 = vector.load %arg7[%c0_34, %c0_35] : memref<8x1xf32, #tpu.memory_space<vmem>>, vector<8x1xf32>
    tpu.vector_store %arg7[%c0_34, %c0_35], %68 {strides = array<i32>} : memref<8x1xf32, #tpu.memory_space<vmem>>, vector<8x1xf32>,
    return
  }
  func.func @transform_0(%arg0: i32) -> (i32, i32) {
    %c0_i32 = arith.constant 0 : i32
    %c0_i32_0 = arith.constant 0 : i32
    return %arg0, %c0_i32 : i32, i32
  }
  func.func @transform_1(%arg0: i32) -> (i32, i32) {
    %c0_i32 = arith.constant 0 : i32
    %c0_i32_0 = arith.constant 0 : i32
    return %arg0, %c0_i32 : i32, i32
  }
  func.func @transform_2(%arg0: i32) -> (i32, i32) {
    %c0_i32 = arith.constant 0 : i32
    %c0_i32_0 = arith.constant 0 : i32
    %c0_i32_1 = arith.constant 0 : i32
    return %c0_i32, %c0_i32_0 : i32, i32
  }
  func.func @transform_3(%arg0: i32) -> (i32, i32, i32) {
    %c0_i32 = arith.constant 0 : i32
    %c0_i32_0 = arith.constant 0 : i32
    %c0_i32_1 = arith.constant 0 : i32
    %c0_i32_2 = arith.constant 0 : i32
    return %c0_i32, %c0_i32_0, %c0_i32_1 : i32, i32, i32
  }
  func.func @transform_4(%arg0: i32) -> (i32, i32) {
    %c0_i32 = arith.constant 0 : i32
    %c0_i32_0 = arith.constant 0 : i32
    %c0_i32_1 = arith.constant 0 : i32
    return %c0_i32, %c0_i32_0 : i32, i32
  }
  func.func @transform_5(%arg0: i32) -> (i32, i32) {
    %c0_i32 = arith.constant 0 : i32
    %c0_i32_0 = arith.constant 0 : i32
    %c0_i32_1 = arith.constant 0 : i32
    return %c0_i32, %c0_i32_0 : i32, i32
  }
  func.func @transform_6(%arg0: i32) -> (i32, i32) {
    %c0_i32 = arith.constant 0 : i32
    %c0_i32_0 = arith.constant 0 : i32
    return %arg0, %c0_i32 : i32, i32
  }
}

</mosaic_0001>

<llo_original>
// kernel: forward.1
$region0: #{forward.1}
  #allocation0 [shape = 'u32[]', space=smem, size = 0x4, offset = 0x4, fixed_abs, tag = 'smem constant byte address 0x4 - core index']
  #allocation1 [shape = 'u32[144,128]{1,0:T(1,128)}', space=vmem, size = 0x12000, scoped, tag = 'internal scratch']
  %s0 = inlined_call_operand.vmem [shape: bf16[144,192], index: 0, kind: input, shape index: {}]
  %s1 = inlined_call_operand.vmem [shape: bf16[144,192], index: 1, kind: input, shape index: {}]
  %s2 = inlined_call_operand.vmem [shape: bf16[192,544], index: 2, kind: input, shape index: {}]
  %s3 = inlined_call_operand.vmem [shape: bf16[4,544,128], index: 3, kind: input, shape index: {}]
  %s4 = inlined_call_operand.vmem [shape: bf16[1024,512], index: 4, kind: input, shape index: {}]
  %s5 = inlined_call_operand.vmem [shape: f32[1,512], index: 5, kind: input, shape index: {}]
  %s6 = inlined_call_operand.vmem [shape: f32[16,1], index: 6, kind: output, shape index: {}]
  %s7 = sld [smem:[#allocation0]]
  $region57: #{forward.1} parent=0
    _
  %s9 = ssub.s32 1, %s7
  %s10 = scalar_select 0, %s9, %s7
  loop: start=0, step=1, limit=4
  $region2: #{forward.1} parent=0 // loop_pre_header
    _
  $region3: #{forward.1} parent=0 // loop_header
    %s12 = sphi 0, %s16
    %p13 = scmp.ge.s32.totalorder %s12, 4
    %s22 = sphi 0, %s24
    %s25 = sphi 0, %s22
    %s26 = sphi 0, %s25
    %s42 = sphi 0, %s26
    %s48 = sphi 0, %s50
    %s51 = sphi 0, %s48
    %s52 = sphi 0, %s51
    %s68 = sphi 0, %s52
    %s72 = sphi 0, %s72
    %s74 = sphi 0, %s72
    %s75 = sphi 0, %s74
    %s89 = sphi 0, %s75
    %s93 = sphi 0, %s93
    %s95 = sphi 0, %s93
    %s96 = sphi 0, %s95
    %s110 = sphi 0, %s96
    %s114 = sphi 0, %s114
    %s116 = sphi 0, %s114
    %s117 = sphi 0, %s116
    %s131 = sphi 0, %s117
    %s135 = sphi 0, %s135
    %s137 = sphi 0, %s135
    %s138 = sphi 0, %s137
    %s152 = sphi 0, %s138
    %s158 = sphi 0, %s160
    %s161 = sphi 0, %s158
    %s162 = sphi 0, %s161
    %s178 = sphi 0, %s162
  $region4: #{forward.1} parent=0 // loop_header_branch
    %15 = sbr.rel (%p13) target = $region8
  $region5: #{forward.1} parent=0 // loop_body
    %s17 = ssub.s32 %s12, 1
    %s18 = ssub.s32 %s12, 2
    %s19 = sadd.s32 %s12, 1
    %s20 = ssub.s32 %s12, %s19
    %p21 = scmp.eq.s32.totalorder %s20, 0
    %s23 = sadd.s32 %s22, 1
    %s24 = scalar_select %p21, %s22, %s23
    %p27 = pneg %p21
    %p28 = scmp.eq.s32.totalorder %s12, 1
    %p29 = por %p27, %p28
    %p30 = scmp.ne.s32.totalorder %s22, %s25
    %p31 = scmp.eq.s32.totalorder %s12, 0
    %p32 = por %p30, %p31
    %p33 = scmp.ne.s32.totalorder %s22, %s25
    %p34 = scmp.eq.s32.totalorder %s17, 1
    %p35 = por %p33, %p34
    %p36 = scmp.ne.s32.totalorder %s25, %s26
    %p37 = scmp.eq.s32.totalorder %s17, 0
    %p38 = por %p36, %p37
    %p39 = scmp.ne.s32.totalorder %s25, %s26
    %p40 = scmp.eq.s32.totalorder %s18, 1
    %p41 = por %p39, %p40
    %p43 = scmp.ne.s32.totalorder %s26, %s42
    %p44 = scmp.eq.s32.totalorder %s18, 0
    %p45 = por %p43, %p44
    %s46 = ssub.s32 %s12, %s19
    %p47 = scmp.eq.s32.totalorder %s46, 0
    %s49 = sadd.s32 %s48, 1
    %s50 = scalar_select %p47, %s48, %s49
    %p53 = pneg %p47
    %p54 = scmp.eq.s32.totalorder %s12, 1
    %p55 = por %p53, %p54
    %p56 = scmp.ne.s32.totalorder %s48, %s51
    %p57 = scmp.eq.s32.totalorder %s12, 0
    %p58 = por %p56, %p57
    %p59 = scmp.ne.s32.totalorder %s48, %s51
    %p60 = scmp.eq.s32.totalorder %s17, 1
    %p61 = por %p59, %p60
    %p62 = scmp.ne.s32.totalorder %s51, %s52
    %p63 = scmp.eq.s32.totalorder %s17, 0
    %p64 = por %p62, %p63
    %p65 = scmp.ne.s32.totalorder %s51, %s52
    %p66 = scmp.eq.s32.totalorder %s18, 1
    %p67 = por %p65, %p66
    %p69 = scmp.ne.s32.totalorder %s52, %s68
    %p70 = scmp.eq.s32.totalorder %s18, 0
    %p71 = por %p69, %p70
    %s73 = sadd.s32 %s72, 1
    %p76 = scmp.eq.s32.totalorder %s12, 1
    %p77 = scmp.ne.s32.totalorder %s72, %s74
    %p78 = scmp.eq.s32.totalorder %s12, 0
    %p79 = por %p77, %p78
    %p80 = scmp.ne.s32.totalorder %s72, %s74
    %p81 = scmp.eq.s32.totalorder %s17, 1
    %p82 = por %p80, %p81
    %p83 = scmp.ne.s32.totalorder %s74, %s75
    %p84 = scmp.eq.s32.totalorder %s17, 0
    %p85 = por %p83, %p84
    %p86 = scmp.ne.s32.totalorder %s74, %s75
    %p87 = scmp.eq.s32.totalorder %s18, 1
    %p88 = por %p86, %p87
    %p90 = scmp.ne.s32.totalorder %s75, %s89
    %p91 = scmp.eq.s32.totalorder %s18, 0
    %p92 = por %p90, %p91
    %s94 = sadd.s32 %s93, 1
    %p97 = scmp.eq.s32.totalorder %s12, 1
    %p98 = scmp.ne.s32.totalorder %s93, %s95
    %p99 = scmp.eq.s32.totalorder %s12, 0
    %p100 = por %p98, %p99
    %p101 = scmp.ne.s32.totalorder %s93, %s95
    %p102 = scmp.eq.s32.totalorder %s17, 1
    %p103 = por %p101, %p102
    %p104 = scmp.ne.s32.totalorder %s95, %s96
    %p105 = scmp.eq.s32.totalorder %s17, 0
    %p106 = por %p104, %p105
    %p107 = scmp.ne.s32.totalorder %s95, %s96
    %p108 = scmp.eq.s32.totalorder %s18, 1
    %p109 = por %p107, %p108
    %p111 = scmp.ne.s32.totalorder %s96, %s110
    %p112 = scmp.eq.s32.totalorder %s18, 0
    %p113 = por %p111, %p112
    %s115 = sadd.s32 %s114, 1
    %p118 = scmp.eq.s32.totalorder %s12, 1
    %p119 = scmp.ne.s32.totalorder %s114, %s116
    %p120 = scmp.eq.s32.totalorder %s12, 0
    %p121 = por %p119, %p120
    %p122 = scmp.ne.s32.totalorder %s114, %s116
    %p123 = scmp.eq.s32.totalorder %s17, 1
    %p124 = por %p122, %p123
    %p125 = scmp.ne.s32.totalorder %s116, %s117
    %p126 = scmp.eq.s32.totalorder %s17, 0
    %p127 = por %p125, %p126
    %p128 = scmp.ne.s32.totalorder %s116, %s117
    %p129 = scmp.eq.s32.totalorder %s18, 1
    %p130 = por %p128, %p129
    %p132 = scmp.ne.s32.totalorder %s117, %s131
    %p133 = scmp.eq.s32.totalorder %s18, 0
    %p134 = por %p132, %p133
    %s136 = sadd.s32 %s135, 1
    %p139 = scmp.eq.s32.totalorder %s12, 1
    %p140 = scmp.ne.s32.totalorder %s135, %s137
    %p141 = scmp.eq.s32.totalorder %s12, 0
    %p142 = por %p140, %p141
    %p143 = scmp.ne.s32.totalorder %s135, %s137
    %p144 = scmp.eq.s32.totalorder %s17, 1
    %p145 = por %p143, %p144
    %p146 = scmp.ne.s32.totalorder %s137, %s138
    %p147 = scmp.eq.s32.totalorder %s17, 0
    %p148 = por %p146, %p147
    %p149 = scmp.ne.s32.totalorder %s137, %s138
    %p150 = scmp.eq.s32.totalorder %s18, 1
    %p151 = por %p149, %p150
    %p153 = scmp.ne.s32.totalorder %s138, %s152
    %p154 = scmp.eq.s32.totalorder %s18, 0
    %p155 = por %p153, %p154
    %s156 = ssub.s32 %s12, %s19
    %p157 = scmp.eq.s32.totalorder %s156, 0
    %s159 = sadd.s32 %s158, 1
    %s160 = scalar_select %p157, %s158, %s159
    %p163 = pneg %p157
    %p164 = scmp.eq.s32.totalorder %s12, 1
    %p165 = por %p163, %p164
    %p166 = scmp.ne.s32.totalorder %s158, %s161
    %p167 = scmp.eq.s32.totalorder %s12, 0
    %p168 = por %p166, %p167
    %p169 = scmp.ne.s32.totalorder %s158, %s161
    %p170 = scmp.eq.s32.totalorder %s17, 1
    %p171 = por %p169, %p170
    %p172 = scmp.ne.s32.totalorder %s161, %s162
    %p173 = scmp.eq.s32.totalorder %s17, 0
    %p174 = por %p172, %p173
    %p175 = scmp.ne.s32.totalorder %s161, %s162
    %p176 = scmp.eq.s32.totalorder %s18, 1
    %p177 = por %p175, %p176
    %p179 = scmp.ne.s32.totalorder %s162, %s178
    %p180 = scmp.eq.s32.totalorder %s18, 0
    %p181 = por %p179, %p180
    %p182 = scmp.le.s32.totalorder 1, %s12
    %p183 = scmp.lt.s32.totalorder %s12, 3
    %p184 = pnand %p182, %p183
    %p185 = pneg %p184
    // Predicated region
    $region9: #{forward.1} parent=5 // pred_check
      _
    $region10: #{forward.1} parent=5 // pred_check_branch
      %187 = sbr.rel (%p184) target = $region12
    $region11: #{forward.1} parent=5 // pred_region
      %s188 = ssub.s32 %s12, 1
      // Predicated region
      $region13: #{forward.1} parent=11 // pred_check
        %p189 = pneg %p85
      $region14: #{forward.1} parent=11 // pred_check_branch
        %191 = sbr.rel (%p189) target = $region16
      $region15: #{forward.1} parent=11 // pred_region
        _
      $region16: #{forward.1} parent=11 // pred_fallthru
        _
      // Predicated region
      $region17: #{forward.1} parent=11 // pred_check
        %p192 = pneg %p106
      $region18: #{forward.1} parent=11 // pred_check_branch
        %194 = sbr.rel (%p192) target = $region20
      $region19: #{forward.1} parent=11 // pred_region
        _
      $region20: #{forward.1} parent=11 // pred_fallthru
        _
      // Predicated region
      $region21: #{forward.1} parent=11 // pred_check
        %p195 = pneg %p127
      $region22: #{forward.1} parent=11 // pred_check_branch
        %197 = sbr.rel (%p195) target = $region24
      $region23: #{forward.1} parent=11 // pred_region
        _
      $region24: #{forward.1} parent=11 // pred_fallthru
        _
      // Predicated region
      $region25: #{forward.1} parent=11 // pred_check
        %p198 = pneg %p148
      $region26: #{forward.1} parent=11 // pred_check_branch
        %200 = sbr.rel (%p198) target = $region28
      $region27: #{forward.1} parent=11 // pred_region
        _
      $region28: #{forward.1} parent=11 // pred_fallthru
        _
    $region12: #{forward.1} parent=5 // pred_fallthru
      _
    %p201 = scmp.lt.s32.totalorder %s12, 2
    // Predicated region
    $region29: #{forward.1} parent=5 // pred_check
      %p202 = pneg %p201
    $region30: #{forward.1} parent=5 // pred_check_branch
      %204 = sbr.rel (%p202) target = $region32
    $region31: #{forward.1} parent=5 // pred_region
      // Predicated region
      $region33: #{forward.1} parent=31 // pred_check
        %p205 = pneg %p32
      $region34: #{forward.1} parent=31 // pred_check_branch
        %207 = sbr.rel (%p205) target = $region36
      $region35: #{forward.1} parent=31 // pred_region
        %s208 = smul.u32 9, %s12
        %p209 = scmp.lt.s32.totalorder %s208, 17
        %s210 = scalar_select %p209, %s208, 17
        %s211 = smul.addr %s210, 2
        %s212 = smul.addr %s211, 4
        %s213 = scalar_lea.vmem %s0, %s212
        %s214 = smul.u32 9, %s12
      $region36: #{forward.1} parent=31 // pred_fallthru
        _
      // Predicated region
      $region37: #{forward.1} parent=31 // pred_check
        %p215 = pneg %p58
      $region38: #{forward.1} parent=31 // pred_check_branch
        %217 = sbr.rel (%p215) target = $region40
      $region39: #{forward.1} parent=31 // pred_region
        %s218 = smul.u32 9, %s12
        %p219 = scmp.lt.s32.totalorder %s218, 17
        %s220 = scalar_select %p219, %s218, 17
        %s221 = smul.addr %s220, 2
        %s222 = smul.addr %s221, 4
        %s223 = scalar_lea.vmem %s1, %s222
        %s224 = smul.u32 9, %s12
      $region40: #{forward.1} parent=31 // pred_fallthru
        _
    $region32: #{forward.1} parent=5 // pred_fallthru
      _
    %p225 = scmp.le.s32.totalorder 1, %s12
    %p226 = scmp.lt.s32.totalorder %s12, 3
    %p227 = pnand %p225, %p226
    %p228 = pneg %p227
    // Predicated region
    $region41: #{forward.1} parent=5 // pred_check
      _
    $region42: #{forward.1} parent=5 // pred_check_branch
      %230 = sbr.rel (%p227) target = $region44
    $region43: #{forward.1} parent=5 // pred_region
      %s231 = ssub.s32 %s12, 1
      %s232 = smul.u32 9, %s17
      %p233 = scmp.lt.s32.totalorder %s232, 17
      %s234 = scalar_select %p233, %s232, 17
      %s235 = smul.addr %s234, 2
      %s236 = smul.addr %s235, 4
      %s237 = scalar_lea.vmem %s0, %s236
      %p238 = pneg %p38
      %p239 = pneg %p35
      %s240 = smul.u32 9, %s17
      %p241 = scmp.lt.s32.totalorder %s240, 17
      %s242 = scalar_select %p241, %s240, 17
      %s243 = smul.addr %s242, 2
      %s244 = smul.addr %s243, 4
      %s245 = scalar_lea.vmem %s1, %s244
      %p246 = pneg %p64
      %p247 = pneg %p61
      %p248 = pneg %p85
      %p249 = pneg %p82
      %p250 = pneg %p106
      %p251 = pneg %p103
      %p252 = pneg %p127
      %p253 = pneg %p124
      %p254 = pneg %p148
      %p255 = pneg %p145
      %p256 = pneg %p174
      %p257 = pneg %p171
      %p258 = scmp.lt.s32.totalorder %s17, 1
      %s259 = scalar_select %p258, %s17, 1
      %s260 = smul.addr %s259, 8
      %s261 = scalar_lea.vmem %s6, %s260
      %s262 = smul.u32 9, %s17
      %p263 = scmp.lt.s32.totalorder %s262, 17
      %s264 = scalar_select %p263, %s262, 17
      %s265 = smul.addr %s264, 2
      %s266 = smul.addr %s265, 4
      %s267 = scalar_lea.vmem %s0, %s266
      %s268 = smul.u32 9, %s17
      %s269 = smul.u32 9, %s17
      %p270 = scmp.lt.s32.totalorder %s269, 17
      %s271 = scalar_select %p270, %s269, 17
      %s272 = smul.addr %s271, 2
      %s273 = smul.addr %s272, 4
      %s274 = scalar_lea.vmem %s1, %s273
      %s275 = smul.u32 9, %s17
      %p276 = scmp.lt.s32.totalorder %s17, 1
      %s277 = scalar_select %p276, %s17, 1
      %s278 = smul.addr %s277, 8
      %s279 = scalar_lea.vmem %s6, %s278
      %v281 = vld [vmem:[%s2] sm:$0xff]
      %v282 = vld [vmem:[%s2 + $0x8] sm:$0xff]
      %v283 = vld [vmem:[%s2 + $0x10] sm:$0xf]
      %v284 = vld [vmem:[%s2 + $0x14] sm:$0xff]
      %v285 = vld [vmem:[%s2 + $0x1c] sm:$0xff]
      %v286 = vld [vmem:[%s2 + $0x24] sm:$0xf]
      %v287 = vld [vmem:[%s2 + $0x28] sm:$0xff]
      %v288 = vld [vmem:[%s2 + $0x30] sm:$0xff]
      %v289 = vld [vmem:[%s2 + $0x38] sm:$0xf]
      %v290 = vld [vmem:[%s2 + $0x3c] sm:$0xff]
      %v291 = vld [vmem:[%s2 + $0x44] sm:$0xff]
      %v292 = vld [vmem:[%s2 + $0x4c] sm:$0xf]
      %v293 = vld [vmem:[%s2 + $0x50] sm:$0xff]
      %v294 = vld [vmem:[%s2 + $0x58] sm:$0xff]
      %v295 = vld [vmem:[%s2 + $0x60] sm:$0xf]
      %v296 = vld [vmem:[%s2 + $0x64] sm:$0xff]
      %v297 = vld [vmem:[%s2 + $0x6c] sm:$0xff]
      %v298 = vld [vmem:[%s2 + $0x74] sm:$0xf]
      %v299 = vld [vmem:[%s2 + $0x78] sm:$0xff]
      %v300 = vld [vmem:[%s2 + $0x80] sm:$0xff]
      %v301 = vld [vmem:[%s2 + $0x88] sm:$0xf]
      %v302 = vld [vmem:[%s2 + $0x8c] sm:$0xff]
      %v303 = vld [vmem:[%s2 + $0x94] sm:$0xff]
      %v304 = vld [vmem:[%s2 + $0x9c] sm:$0xf]
      %v305 = vld [vmem:[%s2 + $0xa0] sm:$0xff]
      %v306 = vld [vmem:[%s2 + $0xa8] sm:$0xff]
      %v307 = vld [vmem:[%s2 + $0xb0] sm:$0xf]
      %v308 = vld [vmem:[%s2 + $0xb4] sm:$0xff]
      %v309 = vld [vmem:[%s2 + $0xbc] sm:$0xff]
      %v310 = vld [vmem:[%s2 + $0xc4] sm:$0xf]
      %v311 = vld [vmem:[%s2 + $0xc8] sm:$0xff]
      %v312 = vld [vmem:[%s2 + $0xd0] sm:$0xff]
      %v313 = vld [vmem:[%s2 + $0xd8] sm:$0xf]
      %v314 = vld [vmem:[%s2 + $0xdc] sm:$0xff]
      %v315 = vld [vmem:[%s2 + $0xe4] sm:$0xff]
      %v316 = vld [vmem:[%s2 + $0xec] sm:$0xf]
      %v317 = vld [vmem:[%s2 + $0xf0] sm:$0xff]
      %v318 = vld [vmem:[%s2 + $0xf8] sm:$0xff]
      %v319 = vld [vmem:[%s2 + $0x100] sm:$0xf]
      %v320 = vld [vmem:[%s2 + $0x104] sm:$0xff]
      %v321 = vld [vmem:[%s2 + $0x10c] sm:$0xff]
      %v322 = vld [vmem:[%s2 + $0x114] sm:$0xf]
      %v323 = vld [vmem:[%s2 + $0x118] sm:$0xff]
      %v324 = vld [vmem:[%s2 + $0x120] sm:$0xff]
      %v325 = vld [vmem:[%s2 + $0x128] sm:$0xf]
      %v326 = vld [vmem:[%s2 + $0x12c] sm:$0xff]
      %v327 = vld [vmem:[%s2 + $0x134] sm:$0xff]
      %v328 = vld [vmem:[%s2 + $0x13c] sm:$0xf]
      %v329 = vld [vmem:[%s2 + $0x140] sm:$0xff]
      %v330 = vld [vmem:[%s2 + $0x148] sm:$0xff]
      %v331 = vld [vmem:[%s2 + $0x150] sm:$0xf]
      %v332 = vld [vmem:[%s2 + $0x154] sm:$0xff]
      %v333 = vld [vmem:[%s2 + $0x15c] sm:$0xff]
      %v334 = vld [vmem:[%s2 + $0x164] sm:$0xf]
      %v335 = vld [vmem:[%s2 + $0x168] sm:$0xff]
      %v336 = vld [vmem:[%s2 + $0x170] sm:$0xff]
      %v337 = vld [vmem:[%s2 + $0x178] sm:$0xf]
      %v338 = vld [vmem:[%s2 + $0x17c] sm:$0xff]
      %v339 = vld [vmem:[%s2 + $0x184] sm:$0xff]
      %v340 = vld [vmem:[%s2 + $0x18c] sm:$0xf]
      %v341 = vld [vmem:[%s2 + $0x190] sm:$0xff]
      %v342 = vld [vmem:[%s2 + $0x198] sm:$0xff]
      %v343 = vld [vmem:[%s2 + $0x1a0] sm:$0xf]
      %v344 = vld [vmem:[%s2 + $0x1a4] sm:$0xff]
      %v345 = vld [vmem:[%s2 + $0x1ac] sm:$0xff]
      %v346 = vld [vmem:[%s2 + $0x1b4] sm:$0xf]
      %v347 = vld [vmem:[%s2 + $0x1b8] sm:$0xff]
      %v348 = vld [vmem:[%s2 + $0x1c0] sm:$0xff]
      %v349 = vld [vmem:[%s2 + $0x1c8] sm:$0xf]
      %v350 = vld [vmem:[%s2 + $0x1cc] sm:$0xff]
      %v351 = vld [vmem:[%s2 + $0x1d4] sm:$0xff]
      %v352 = vld [vmem:[%s2 + $0x1dc] sm:$0xf]
      %v353 = vld [vmem:[%s267] sm:$0xff]
      %v354 = vld [vmem:[%s267 + $0x8] sm:$0xff]
      %v355 = vld [vmem:[%s267 + $0x10] sm:$0xff]
      %v356 = vld [vmem:[%s267 + $0x18] sm:$0xff]
      %v357 = vld [vmem:[%s267 + $0x20] sm:$0xff]
      %v358 = vld [vmem:[%s267 + $0x28] sm:$0xff]
      %v359 = vld [vmem:[%s267 + $0x30] sm:$0xff]
      %v360 = vld [vmem:[%s267 + $0x38] sm:$0xff]
      %v361 = vld [vmem:[%s267 + $0x40] sm:$0xff]
      %v371 = vunpack.c.l.b16 %v353
      %v372 = vunpack.c.h.b16 %v353
      %v373 = vunpack.c.l.b16 %v354
      %v374 = vunpack.c.h.b16 %v354
      %v375 = vunpack.c.l.b16 %v355
      %v376 = vunpack.c.h.b16 %v355
      %v377 = vunpack.c.l.b16 %v356
      %v378 = vunpack.c.h.b16 %v356
      %v379 = vunpack.c.l.b16 %v357
      %v380 = vunpack.c.h.b16 %v357
      %v381 = vunpack.c.l.b16 %v358
      %v382 = vunpack.c.h.b16 %v358
      %v383 = vunpack.c.l.b16 %v359
      %v384 = vunpack.c.h.b16 %v359
      %v385 = vunpack.c.l.b16 %v360
      %v386 = vunpack.c.h.b16 %v360
      %v387 = vunpack.c.l.b16 %v361
      %v388 = vunpack.c.h.b16 %v361
      %v389 = vpack.c.b16 %v373, %v371
      %v390 = vpack.c.b16 %v374, %v372
      %v391 = vpack.c.b16 %v377, %v375
      %v392 = vpack.c.b16 %v378, %v376
      %v393 = vpack.c.b16 %v381, %v379
      %v394 = vpack.c.b16 %v382, %v380
      %v395 = vpack.c.b16 %v385, %v383
      %v396 = vpack.c.b16 %v386, %v384
      %v397 = vpack.c.b16 %v387, %v387
      %v398 = vpack.c.b16 %v388, %v388
      %v476 = vunpack.c.l.b16 %v281
      %v477 = vunpack.c.h.b16 %v281
      %v478 = vunpack.c.l.b16 %v282
      %v479 = vunpack.c.h.b16 %v282
      %v480 = vunpack.c.l.b16 %v283
      %v481 = vunpack.c.l.b16 %v284
      %v482 = vunpack.c.h.b16 %v284
      %v483 = vunpack.c.l.b16 %v285
      %v484 = vunpack.c.h.b16 %v285
      %v485 = vunpack.c.l.b16 %v286
      %v486 = vunpack.c.l.b16 %v287
      %v487 = vunpack.c.h.b16 %v287
      %v488 = vunpack.c.l.b16 %v288
      %v489 = vunpack.c.h.b16 %v288
      %v490 = vunpack.c.l.b16 %v289
      %v491 = vunpack.c.l.b16 %v290
      %v492 = vunpack.c.h.b16 %v290
      %v493 = vunpack.c.l.b16 %v291
      %v494 = vunpack.c.h.b16 %v291
      %v495 = vunpack.c.l.b16 %v292
      %v496 = vunpack.c.l.b16 %v293
      %v497 = vunpack.c.h.b16 %v293
      %v498 = vunpack.c.l.b16 %v294
      %v499 = vunpack.c.h.b16 %v294
      %v500 = vunpack.c.l.b16 %v295
      %v501 = vunpack.c.l.b16 %v296
      %v502 = vunpack.c.h.b16 %v296
      %v503 = vunpack.c.l.b16 %v297
      %v504 = vunpack.c.h.b16 %v297
      %v505 = vunpack.c.l.b16 %v298
      %v506 = vunpack.c.l.b16 %v299
      %v507 = vunpack.c.h.b16 %v299
      %v508 = vunpack.c.l.b16 %v300
      %v509 = vunpack.c.h.b16 %v300
      %v510 = vunpack.c.l.b16 %v301
      %v511 = vunpack.c.l.b16 %v302
      %v512 = vunpack.c.h.b16 %v302
      %v513 = vunpack.c.l.b16 %v303
      %v514 = vunpack.c.h.b16 %v303
      %v515 = vunpack.c.l.b16 %v304
      %v516 = vunpack.c.l.b16 %v305
      %v517 = vunpack.c.h.b16 %v305
      %v518 = vunpack.c.l.b16 %v306
      %v519 = vunpack.c.h.b16 %v306
      %v520 = vunpack.c.l.b16 %v307
      %v521 = vunpack.c.l.b16 %v308
      %v522 = vunpack.c.h.b16 %v308
      %v523 = vunpack.c.l.b16 %v309
      %v524 = vunpack.c.h.b16 %v309
      %v525 = vunpack.c.l.b16 %v310
      %v526 = vunpack.c.l.b16 %v311
      %v527 = vunpack.c.h.b16 %v311
      %v528 = vunpack.c.l.b16 %v312
      %v529 = vunpack.c.h.b16 %v312
      %v530 = vunpack.c.l.b16 %v313
      %v531 = vunpack.c.l.b16 %v314
      %v532 = vunpack.c.h.b16 %v314
      %v533 = vunpack.c.l.b16 %v315
      %v534 = vunpack.c.h.b16 %v315
      %v535 = vunpack.c.l.b16 %v316
      %v536 = vunpack.c.l.b16 %v317
      %v537 = vunpack.c.h.b16 %v317
      %v538 = vunpack.c.l.b16 %v318
      %v539 = vunpack.c.h.b16 %v318
      %v540 = vunpack.c.l.b16 %v319
      %v541 = vunpack.c.l.b16 %v320
      %v542 = vunpack.c.h.b16 %v320
      %v543 = vunpack.c.l.b16 %v321
      %v544 = vunpack.c.h.b16 %v321
      %v545 = vunpack.c.l.b16 %v322
      %v546 = vunpack.c.l.b16 %v323
      %v547 = vunpack.c.h.b16 %v323
      %v548 = vunpack.c.l.b16 %v324
      %v549 = vunpack.c.h.b16 %v324
      %v550 = vunpack.c.l.b16 %v325
      %v551 = vunpack.c.l.b16 %v326
      %v552 = vunpack.c.h.b16 %v326
      %v553 = vunpack.c.l.b16 %v327
      %v554 = vunpack.c.h.b16 %v327
      %v555 = vunpack.c.l.b16 %v328
      %v556 = vunpack.c.l.b16 %v329
      %v557 = vunpack.c.h.b16 %v329
      %v558 = vunpack.c.l.b16 %v330
      %v559 = vunpack.c.h.b16 %v330
      %v560 = vunpack.c.l.b16 %v331
      %v561 = vunpack.c.l.b16 %v332
      %v562 = vunpack.c.h.b16 %v332
      %v563 = vunpack.c.l.b16 %v333
      %v564 = vunpack.c.h.b16 %v333
      %v565 = vunpack.c.l.b16 %v334
      %v566 = vunpack.c.l.b16 %v335
      %v567 = vunpack.c.h.b16 %v335
      %v568 = vunpack.c.l.b16 %v336
      %v569 = vunpack.c.h.b16 %v336
      %v570 = vunpack.c.l.b16 %v337
      %v571 = vunpack.c.l.b16 %v338
      %v572 = vunpack.c.h.b16 %v338
      %v573 = vunpack.c.l.b16 %v339
      %v574 = vunpack.c.h.b16 %v339
      %v575 = vunpack.c.l.b16 %v340
      %v576 = vunpack.c.l.b16 %v341
      %v577 = vunpack.c.h.b16 %v341
      %v578 = vunpack.c.l.b16 %v342
      %v579 = vunpack.c.h.b16 %v342
      %v580 = vunpack.c.l.b16 %v343
      %v581 = vunpack.c.l.b16 %v344
      %v582 = vunpack.c.h.b16 %v344
      %v583 = vunpack.c.l.b16 %v345
      %v584 = vunpack.c.h.b16 %v345
      %v585 = vunpack.c.l.b16 %v346
      %v586 = vunpack.c.l.b16 %v347
      %v587 = vunpack.c.h.b16 %v347
      %v588 = vunpack.c.l.b16 %v348
      %v589 = vunpack.c.h.b16 %v348
      %v590 = vunpack.c.l.b16 %v349
      %v591 = vunpack.c.l.b16 %v350
      %v592 = vunpack.c.h.b16 %v350
      %v593 = vunpack.c.l.b16 %v351
      %v594 = vunpack.c.h.b16 %v351
      %v595 = vunpack.c.l.b16 %v352
      %v596 = vpack.c.b16 %v481, %v476
      %v597 = vpack.c.b16 %v482, %v477
      %v598 = vpack.c.b16 %v483, %v478
      %v599 = vpack.c.b16 %v484, %v479
      %v600 = vpack.c.b16 %v485, %v480
      %v601 = vpack.c.b16 %v491, %v486
      %v602 = vpack.c.b16 %v492, %v487
      %v603 = vpack.c.b16 %v493, %v488
      %v604 = vpack.c.b16 %v494, %v489
      %v605 = vpack.c.b16 %v495, %v490
      %v606 = vpack.c.b16 %v501, %v496
      %v607 = vpack.c.b16 %v502, %v497
      %v608 = vpack.c.b16 %v503, %v498
      %v609 = vpack.c.b16 %v504, %v499
      %v610 = vpack.c.b16 %v505, %v500
      %v611 = vpack.c.b16 %v511, %v506
      %v612 = vpack.c.b16 %v512, %v507
      %v613 = vpack.c.b16 %v513, %v508
      %v614 = vpack.c.b16 %v514, %v509
      %v615 = vpack.c.b16 %v515, %v510
      %v616 = vpack.c.b16 %v521, %v516
      %v617 = vpack.c.b16 %v522, %v517
      %v618 = vpack.c.b16 %v523, %v518
      %v619 = vpack.c.b16 %v524, %v519
      %v620 = vpack.c.b16 %v525, %v520
      %v621 = vpack.c.b16 %v531, %v526
      %v622 = vpack.c.b16 %v532, %v527
      %v623 = vpack.c.b16 %v533, %v528
      %v624 = vpack.c.b16 %v534, %v529
      %v625 = vpack.c.b16 %v535, %v530
      %v626 = vpack.c.b16 %v541, %v536
      %v627 = vpack.c.b16 %v542, %v537
      %v628 = vpack.c.b16 %v543, %v538
      %v629 = vpack.c.b16 %v544, %v539
      %v630 = vpack.c.b16 %v545, %v540
      %v631 = vpack.c.b16 %v551, %v546
      %v632 = vpack.c.b16 %v552, %v547
      %v633 = vpack.c.b16 %v553, %v548
      %v634 = vpack.c.b16 %v554, %v549
      %v635 = vpack.c.b16 %v555, %v550
      %v636 = vpack.c.b16 %v561, %v556
      %v637 = vpack.c.b16 %v562, %v557
      %v638 = vpack.c.b16 %v563, %v558
      %v639 = vpack.c.b16 %v564, %v559
      %v640 = vpack.c.b16 %v565, %v560
      %v641 = vpack.c.b16 %v571, %v566
      %v642 = vpack.c.b16 %v572, %v567
      %v643 = vpack.c.b16 %v573, %v568
      %v644 = vpack.c.b16 %v574, %v569
      %v645 = vpack.c.b16 %v575, %v570
      %v646 = vpack.c.b16 %v581, %v576
      %v647 = vpack.c.b16 %v582, %v577
      %v648 = vpack.c.b16 %v583, %v578
      %v649 = vpack.c.b16 %v584, %v579
      %v650 = vpack.c.b16 %v585, %v580
      %v651 = vpack.c.b16 %v591, %v586
      %v652 = vpack.c.b16 %v592, %v587
      %v653 = vpack.c.b16 %v593, %v588
      %v654 = vpack.c.b16 %v594, %v589
      %v655 = vpack.c.b16 %v595, %v590
      %vm716 = vcmask 523264
      %v718 = vsel %vm716, %v390, 0
      %v721 = vsel %vm716, %v392, 0
      %v724 = vsel %vm716, %v394, 0
      %v727 = vsel %vm716, %v396, 0
      %v730 = vsel %vm716, %v398, 0
      %732 = vmatprep.subr.bf16.mxu0 %v597
      %733 = vmatpush1.bf16.msra.mxu0 %v596
      %734 = vmatprep.subr.bf16.mxu0 %v602
      %735 = vmatpush1.bf16.msra.mxu0 %v601
      %736 = vmatprep.subr.bf16.mxu0 %v607
      %737 = vmatpush1.bf16.msra.mxu0 %v606
      %738 = vmatprep.subr.bf16.mxu0 %v612
      %739 = vmatpush1.bf16.msra.mxu0 %v611
      %740 = vmatprep.subr.bf16.mxu0 %v617
      %741 = vmatpush1.bf16.msra.mxu0 %v616
      %742 = vmatprep.subr.bf16.mxu0 %v622
      %743 = vmatpush1.bf16.msra.mxu0 %v621
      %744 = vmatprep.subr.bf16.mxu0 %v627
      %745 = vmatpush1.bf16.msra.mxu0 %v626
      %746 = vmatprep.subr.bf16.mxu0 %v632
      %747 = vmatpush1.bf16.msra.mxu0 %v631
      %748 = vmatprep.subr.bf16.mxu0 %v637
      %749 = vmatpush1.bf16.msra.mxu0 %v636
      %750 = vmatprep.subr.bf16.mxu0 %v642
      %751 = vmatpush1.bf16.msra.mxu0 %v641
      %752 = vmatprep.subr.bf16.mxu0 %v647
      %753 = vmatpush1.bf16.msra.mxu0 %v646
      %754 = vmatprep.subr.bf16.mxu0 %v652
      %755 = vmatpush1.bf16.msra.mxu0 %v651
      %756 = vmatprep.subr.bf16.mxu0 0
      %757 = vmatpush1.bf16.msra.mxu0 0
      %758 = vmatprep.subr.bf16.mxu0 0
      %759 = vmatpush1.bf16.msra.mxu0 0
      %760 = vmatprep.subr.bf16.mxu0 0
      %761 = vmatpush1.bf16.msra.mxu0 0
      %762 = vmatprep.subr.bf16.mxu0 0
      %763 = vmatpush1.bf16.msra.mxu0 0
      %764 = vmatprep.mubr.bf16.mxu0 %v718
      %765 = vmatmul.mubr.bf16.gmra.mrb[0].mxu0 %v389
      %v766 = vpop.f32.mrb[0].mxu0
      %v767 = vadd.f32 0.0, %v766
      %v768 = vpop.f32.mrb[0].mxu0
      %v769 = vadd.f32 0.0, %v768
      %v770 = vpop.f32.mrb[0].mxu0
      %v771 = vadd.f32 0.0, %v770
      %v772 = vpop.f32.mrb[0].mxu0
      %v773 = vadd.f32 0.0, %v772
      %774 = vmatprep.mubr.bf16.mxu0 %v721
      %775 = vmatmul.mubr.bf16.gmra.mrb[0].mxu0 %v391
      %v776 = vpop.f32.mrb[0].mxu0
      %v777 = vadd.f32 0.0, %v776
      %v778 = vpop.f32.mrb[0].mxu0
      %v779 = vadd.f32 0.0, %v778
      %v780 = vpop.f32.mrb[0].mxu0
      %v781 = vadd.f32 0.0, %v780
      %v782 = vpop.f32.mrb[0].mxu0
      %v783 = vadd.f32 0.0, %v782
      %784 = vmatprep.mubr.bf16.mxu0 %v724
      %785 = vmatmul.mubr.bf16.gmra.mrb[0].mxu0 %v393
      %v786 = vpop.f32.mrb[0].mxu0
      %v787 = vadd.f32 0.0, %v786
      %v788 = vpop.f32.mrb[0].mxu0
      %v789 = vadd.f32 0.0, %v788
      %v790 = vpop.f32.mrb[0].mxu0
      %v791 = vadd.f32 0.0, %v790
      %v792 = vpop.f32.mrb[0].mxu0
      %v793 = vadd.f32 0.0, %v792
      %794 = vmatprep.mubr.bf16.mxu0 %v727
      %795 = vmatmul.mubr.bf16.gmra.mrb[0].mxu0 %v395
      %v796 = vpop.f32.mrb[0].mxu0
      %v797 = vadd.f32 0.0, %v796
      %v798 = vpop.f32.mrb[0].mxu0
      %v799 = vadd.f32 0.0, %v798
      %v800 = vpop.f32.mrb[0].mxu0
      %v801 = vadd.f32 0.0, %v800
      %v802 = vpop.f32.mrb[0].mxu0
      %v803 = vadd.f32 0.0, %v802
      %804 = vmatprep.mubr.bf16.mxu0 %v730
      %805 = vmatmul.mubr.bf16.gmra.mrb[0].mxu0 %v397
      %v806 = vpop.f32.mrb[0].mxu0
      %v807 = vadd.f32 0.0, %v806
      %v808 = vpop.f32.mrb[0].mxu0
      %v809 = vadd.f32 0.0, %v808
      %v810 = vpop.f32.mrb[0].mxu0
      %v811 = vpop.f32.mrb[0].mxu0
      %812 = vdwg.mxu0
      %813 = vmatprep.subr.bf16.mxu0 %v599
      %814 = vmatpush1.bf16.msra.mxu0 %v598
      %815 = vmatprep.subr.bf16.mxu0 %v604
      %816 = vmatpush1.bf16.msra.mxu0 %v603
      %817 = vmatprep.subr.bf16.mxu0 %v609
      %818 = vmatpush1.bf16.msra.mxu0 %v608
      %819 = vmatprep.subr.bf16.mxu0 %v614
      %820 = vmatpush1.bf16.msra.mxu0 %v613
      %821 = vmatprep.subr.bf16.mxu0 %v619
      %822 = vmatpush1.bf16.msra.mxu0 %v618
      %823 = vmatprep.subr.bf16.mxu0 %v624
      %824 = vmatpush1.bf16.msra.mxu0 %v623
      %825 = vmatprep.subr.bf16.mxu0 %v629
      %826 = vmatpush1.bf16.msra.mxu0 %v628
      %827 = vmatprep.subr.bf16.mxu0 %v634
      %828 = vmatpush1.bf16.msra.mxu0 %v633
      %829 = vmatprep.subr.bf16.mxu0 %v639
      %830 = vmatpush1.bf16.msra.mxu0 %v638
      %831 = vmatprep.subr.bf16.mxu0 %v644
      %832 = vmatpush1.bf16.msra.mxu0 %v643
      %833 = vmatprep.subr.bf16.mxu0 %v649
      %834 = vmatpush1.bf16.msra.mxu0 %v648
      %835 = vmatprep.subr.bf16.mxu0 %v654
      %836 = vmatpush1.bf16.msra.mxu0 %v653
      %837 = vmatprep.subr.bf16.mxu0 0
      %838 = vmatpush1.bf16.msra.mxu0 0
      %839 = vmatprep.subr.bf16.mxu0 0
      %840 = vmatpush1.bf16.msra.mxu0 0
      %841 = vmatprep.subr.bf16.mxu0 0
      %842 = vmatpush1.bf16.msra.mxu0 0
      %843 = vmatprep.subr.bf16.mxu0 0
      %844 = vmatpush1.bf16.msra.mxu0 0
      %845 = vmatprep.mubr.bf16.mxu0 %v718
      %846 = vmatmul.mubr.bf16.gmra.mrb[0].mxu0 %v389
      %v847 = vpop.f32.mrb[0].mxu0
      %v848 = vadd.f32 0.0, %v847
      %v849 = vpop.f32.mrb[0].mxu0
      %v850 = vadd.f32 0.0, %v849
      %v851 = vpop.f32.mrb[0].mxu0
      %v852 = vadd.f32 0.0, %v851
      %v853 = vpop.f32.mrb[0].mxu0
      %v854 = vadd.f32 0.0, %v853
      %855 = vmatprep.mubr.bf16.mxu0 %v721
      %856 = vmatmul.mubr.bf16.gmra.mrb[0].mxu0 %v391
      %v857 = vpop.f32.mrb[0].mxu0
      %v858 = vadd.f32 0.0, %v857
      %v859 = vpop.f32.mrb[0].mxu0
      %v860 = vadd.f32 0.0, %v859
      %v861 = vpop.f32.mrb[0].mxu0
      %v862 = vadd.f32 0.0, %v861
      %v863 = vpop.f32.mrb[0].mxu0
      %v864 = vadd.f32 0.0, %v863
      %865 = vmatprep.mubr.bf16.mxu0 %v724
      %866 = vmatmul.mubr.bf16.gmra.mrb[0].mxu0 %v393
      %v867 = vpop.f32.mrb[0].mxu0
      %v868 = vadd.f32 0.0, %v867
      %v869 = vpop.f32.mrb[0].mxu0
      %v870 = vadd.f32 0.0, %v869
      %v871 = vpop.f32.mrb[0].mxu0
      %v872 = vadd.f32 0.0, %v871
      %v873 = vpop.f32.mrb[0].mxu0
      %v874 = vadd.f32 0.0, %v873
      %875 = vmatprep.mubr.bf16.mxu0 %v727
      %876 = vmatmul.mubr.bf16.gmra.mrb[0].mxu0 %v395
      %v877 = vpop.f32.mrb[0].mxu0
      %v878 = vadd.f32 0.0, %v877
      %v879 = vpop.f32.mrb[0].mxu0
      %v880 = vadd.f32 0.0, %v879
      %v881 = vpop.f32.mrb[0].mxu0
      %v882 = vadd.f32 0.0, %v881
      %v883 = vpop.f32.mrb[0].mxu0
      %v884 = vadd.f32 0.0, %v883
      %885 = vmatprep.mubr.bf16.mxu0 %v730
      %886 = vmatmul.mubr.bf16.gmra.mrb[0].mxu0 %v397
      %v887 = vpop.f32.mrb[0].mxu0
      %v888 = vadd.f32 0.0, %v887
      %v889 = vpop.f32.mrb[0].mxu0
      %v890 = vadd.f32 0.0, %v889
      %v891 = vpop.f32.mrb[0].mxu0
      %v892 = vpop.f32.mrb[0].mxu0
      %893 = vdwg.mxu0
      %894 = vmatprep.subr.bf16.mxu0 0
      %895 = vmatpush1.bf16.msra.mxu0 %v600
      %896 = vmatprep.subr.bf16.mxu0 0
      %897 = vmatpush1.bf16.msra.mxu0 %v605
      %898 = vmatprep.subr.bf16.mxu0 0
      %899 = vmatpush1.bf16.msra.mxu0 %v610
      %900 = vmatprep.subr.bf16.mxu0 0
      %901 = vmatpush1.bf16.msra.mxu0 %v615
      %902 = vmatprep.subr.bf16.mxu0 0
      %903 = vmatpush1.bf16.msra.mxu0 %v620
      %904 = vmatprep.subr.bf16.mxu0 0
      %905 = vmatpush1.bf16.msra.mxu0 %v625
      %906 = vmatprep.subr.bf16.mxu0 0
      %907 = vmatpush1.bf16.msra.mxu0 %v630
      %908 = vmatprep.subr.bf16.mxu0 0
      %909 = vmatpush1.bf16.msra.mxu0 %v635
      %910 = vmatprep.subr.bf16.mxu0 0
      %911 = vmatpush1.bf16.msra.mxu0 %v640
      %912 = vmatprep.subr.bf16.mxu0 0
      %913 = vmatpush1.bf16.msra.mxu0 %v645
      %914 = vmatprep.subr.bf16.mxu0 0
      %915 = vmatpush1.bf16.msra.mxu0 %v650
      %916 = vmatprep.subr.bf16.mxu0 0
      %917 = vmatpush1.bf16.msra.mxu0 %v655
      %918 = vmatprep.subr.bf16.mxu0 0
      %919 = vmatpush1.bf16.msra.mxu0 0
      %920 = vmatprep.subr.bf16.mxu0 0
      %921 = vmatpush1.bf16.msra.mxu0 0
      %922 = vmatprep.subr.bf16.mxu0 0
      %923 = vmatpush1.bf16.msra.mxu0 0
      %924 = vmatprep.subr.bf16.mxu0 0
      %925 = vmatpush1.bf16.msra.mxu0 0
      %926 = vmatprep.mubr.bf16.mxu0 %v718
      %927 = vmatmul.mubr.bf16.gmra.mrb[0].mxu0 %v389
      %v928 = vpop.f32.mrb[0].mxu0
      %v929 = vadd.f32 0.0, %v928
      %v930 = vpop.f32.mrb[0].mxu0
      %v931 = vpop.f32.mrb[0].mxu0
      %v932 = vadd.f32 0.0, %v931
      %v933 = vpop.f32.mrb[0].mxu0
      %934 = vmatprep.mubr.bf16.mxu0 %v721
      %935 = vmatmul.mubr.bf16.gmra.mrb[0].mxu0 %v391
      %v936 = vpop.f32.mrb[0].mxu0
      %v937 = vadd.f32 0.0, %v936
      %v938 = vpop.f32.mrb[0].mxu0
      %v939 = vpop.f32.mrb[0].mxu0
      %v940 = vadd.f32 0.0, %v939
      %v941 = vpop.f32.mrb[0].mxu0
      %942 = vmatprep.mubr.bf16.mxu0 %v724
      %943 = vmatmul.mubr.bf16.gmra.mrb[0].mxu0 %v393
      %v944 = vpop.f32.mrb[0].mxu0
      %v945 = vadd.f32 0.0, %v944
      %v946 = vpop.f32.mrb[0].mxu0
      %v947 = vpop.f32.mrb[0].mxu0
      %v948 = vadd.f32 0.0, %v947
      %v949 = vpop.f32.mrb[0].mxu0
      %950 = vmatprep.mubr.bf16.mxu0 %v727
      %951 = vmatmul.mubr.bf16.gmra.mrb[0].mxu0 %v395
      %v952 = vpop.f32.mrb[0].mxu0
      %v953 = vadd.f32 0.0, %v952
      %v954 = vpop.f32.mrb[0].mxu0
      %v955 = vpop.f32.mrb[0].mxu0
      %v956 = vadd.f32 0.0, %v955
      %v957 = vpop.f32.mrb[0].mxu0
      %958 = vmatprep.mubr.bf16.mxu0 %v730
      %959 = vmatmul.mubr.bf16.gmra.mrb[0].mxu0 %v397
      %v960 = vpop.f32.mrb[0].mxu0
      %v961 = vadd.f32 0.0, %v960
      %v962 = vpop.f32.mrb[0].mxu0
      %v963 = vpop.f32.mrb[0].mxu0
      %v964 = vpop.f32.mrb[0].mxu0
      %965 = vdwg.mxu0
      %v966 = vmul.f32 %v767, 0.2
      %v967 = vmul.f32 %v769, 0.2
      %v968 = vmul.f32 %v848, 0.2
      %v969 = vmul.f32 %v850, 0.2
      %v970 = vmul.f32 %v929, 0.2
      %v971 = vmul.f32 %v771, 0.2
      %v972 = vmul.f32 %v773, 0.2
      %v973 = vmul.f32 %v852, 0.2
      %v974 = vmul.f32 %v854, 0.2
      %v975 = vmul.f32 %v932, 0.2
      %v976 = vmul.f32 %v777, 0.2
      %v977 = vmul.f32 %v779, 0.2
      %v978 = vmul.f32 %v858, 0.2
      %v979 = vmul.f32 %v860, 0.2
      %v980 = vmul.f32 %v937, 0.2
      %v981 = vmul.f32 %v781, 0.2
      %v982 = vmul.f32 %v783, 0.2
      %v983 = vmul.f32 %v862, 0.2
      %v984 = vmul.f32 %v864, 0.2
      %v985 = vmul.f32 %v940, 0.2
      %v986 = vmul.f32 %v787, 0.2
      %v987 = vmul.f32 %v789, 0.2
      %v988 = vmul.f32 %v868, 0.2
      %v989 = vmul.f32 %v870, 0.2
      %v990 = vmul.f32 %v945, 0.2
      %v991 = vmul.f32 %v791, 0.2
      %v992 = vmul.f32 %v793, 0.2
      %v993 = vmul.f32 %v872, 0.2
      %v994 = vmul.f32 %v874, 0.2
      %v995 = vmul.f32 %v948, 0.2
      %v996 = vmul.f32 %v797, 0.2
      %v997 = vmul.f32 %v799, 0.2
      %v998 = vmul.f32 %v878, 0.2
      %v999 = vmul.f32 %v880, 0.2
      %v1000 = vmul.f32 %v953, 0.2
      %v1001 = vmul.f32 %v801, 0.2
      %v1002 = vmul.f32 %v803, 0.2
      %v1003 = vmul.f32 %v882, 0.2
      %v1004 = vmul.f32 %v884, 0.2
      %v1005 = vmul.f32 %v956, 0.2
      %v1006 = vmul.f32 %v807, 0.2
      %v1007 = vmul.f32 %v809, 0.2
      %v1008 = vmul.f32 %v888, 0.2
      %v1009 = vmul.f32 %v890, 0.2
      %v1010 = vmul.f32 %v961, 0.2
      %v1011 = vmax.f32 %v767, %v966
      %v1012 = vmax.f32 %v769, %v967
      %v1013 = vmax.f32 %v848, %v968
      %v1014 = vmax.f32 %v850, %v969
      %v1015 = vmax.f32 %v929, %v970
      %v1016 = vmax.f32 %v771, %v971
      %v1017 = vmax.f32 %v773, %v972
      %v1018 = vmax.f32 %v852, %v973
      %v1019 = vmax.f32 %v854, %v974
      %v1020 = vmax.f32 %v932, %v975
      %v1021 = vmax.f32 %v777, %v976
      %v1022 = vmax.f32 %v779, %v977
      %v1023 = vmax.f32 %v858, %v978
      %v1024 = vmax.f32 %v860, %v979
      %v1025 = vmax.f32 %v937, %v980
      %v1026 = vmax.f32 %v781, %v981
      %v1027 = vmax.f32 %v783, %v982
      %v1028 = vmax.f32 %v862, %v983
      %v1029 = vmax.f32 %v864, %v984
      %v1030 = vmax.f32 %v940, %v985
      %v1031 = vmax.f32 %v787, %v986
      %v1032 = vmax.f32 %v789, %v987
      %v1033 = vmax.f32 %v868, %v988
      %v1034 = vmax.f32 %v870, %v989
      %v1035 = vmax.f32 %v945, %v990
      %v1036 = vmax.f32 %v791, %v991
      %v1037 = vmax.f32 %v793, %v992
      %v1038 = vmax.f32 %v872, %v993
      %v1039 = vmax.f32 %v874, %v994
      %v1040 = vmax.f32 %v948, %v995
      %v1041 = vmax.f32 %v797, %v996
      %v1042 = vmax.f32 %v799, %v997
      %v1043 = vmax.f32 %v878, %v998
      %v1044 = vmax.f32 %v880, %v999
      %v1045 = vmax.f32 %v953, %v1000
      %v1046 = vmax.f32 %v801, %v1001
      %v1047 = vmax.f32 %v803, %v1002
      %v1048 = vmax.f32 %v882, %v1003
      %v1049 = vmax.f32 %v884, %v1004
      %v1050 = vmax.f32 %v956, %v1005
      %v1051 = vmax.f32 %v807, %v1006
      %v1052 = vmax.f32 %v809, %v1007
      %v1053 = vmax.f32 %v888, %v1008
      %v1054 = vmax.f32 %v890, %v1009
      %v1055 = vmax.f32 %v961, %v1010
      %v1056 = vpack.c.bf16 %v1016, %v1011
      %v1057 = vpack.c.bf16 %v1017, %v1012
      %v1058 = vpack.c.bf16 %v1018, %v1013
      %v1059 = vpack.c.bf16 %v1019, %v1014
      %v1060 = vpack.c.bf16 %v1020, %v1015
      %v1061 = vpack.c.bf16 %v1026, %v1021
      %v1062 = vpack.c.bf16 %v1027, %v1022
      %v1063 = vpack.c.bf16 %v1028, %v1023
      %v1064 = vpack.c.bf16 %v1029, %v1024
      %v1065 = vpack.c.bf16 %v1030, %v1025
      %v1066 = vpack.c.bf16 %v1036, %v1031
      %v1067 = vpack.c.bf16 %v1037, %v1032
      %v1068 = vpack.c.bf16 %v1038, %v1033
      %v1069 = vpack.c.bf16 %v1039, %v1034
      %v1070 = vpack.c.bf16 %v1040, %v1035
      %v1071 = vpack.c.bf16 %v1046, %v1041
      %v1072 = vpack.c.bf16 %v1047, %v1042
      %v1073 = vpack.c.bf16 %v1048, %v1043
      %v1074 = vpack.c.bf16 %v1049, %v1044
      %v1075 = vpack.c.bf16 %v1050, %v1045
      %v1076 = vpack.c.bf16 %v1051, %v1051
      %v1077 = vpack.c.bf16 %v1052, %v1052
      %v1078 = vpack.c.bf16 %v1053, %v1053
      %v1079 = vpack.c.bf16 %v1054, %v1054
      %v1080 = vpack.c.bf16 %v1055, %v1055
      %s1081 = scalar_lea.vmem %s3, 272
      %v1082 = vld [vmem:[%s1081] sm:$0xf]
      %v1083 = vld [vmem:[%s1081 + $0x4] sm:$0xf]
      %v1084 = vld [vmem:[%s1081 + $0x8] sm:$0xf]
      %v1085 = vld [vmem:[%s1081 + $0xc] sm:$0xf]
      %v1086 = vld [vmem:[%s1081 + $0x10] sm:$0xf]
      %v1087 = vld [vmem:[%s1081 + $0x14] sm:$0xf]
      %v1088 = vld [vmem:[%s1081 + $0x18] sm:$0xf]
      %v1089 = vld [vmem:[%s1081 + $0x1c] sm:$0xf]
      %v1090 = vld [vmem:[%s1081 + $0x20] sm:$0xf]
      %v1091 = vld [vmem:[%s1081 + $0x24] sm:$0xf]
      %v1092 = vld [vmem:[%s1081 + $0x28] sm:$0xf]
      %v1093 = vld [vmem:[%s1081 + $0x2c] sm:$0xf]
      %v1094 = vld [vmem:[%s1081 + $0x30] sm:$0xf]
      %v1095 = vld [vmem:[%s1081 + $0x34] sm:$0xf]
      %v1096 = vld [vmem:[%s1081 + $0x38] sm:$0xf]
      %v1097 = vld [vmem:[%s1081 + $0x3c] sm:$0xf]
      %v1098 = vld [vmem:[%s1081 + $0x40] sm:$0xf]
      %v1099 = vld [vmem:[%s1081 + $0x44] sm:$0xf]
      %v1100 = vld [vmem:[%s1081 + $0x48] sm:$0xf]
      %v1101 = vld [vmem:[%s1081 + $0x4c] sm:$0xf]
      %v1102 = vld [vmem:[%s1081 + $0x50] sm:$0xf]
      %v1103 = vld [vmem:[%s1081 + $0x54] sm:$0xf]
      %v1104 = vld [vmem:[%s1081 + $0x58] sm:$0xf]
      %v1105 = vld [vmem:[%s1081 + $0x5c] sm:$0xf]
      %v1106 = vld [vmem:[%s1081 + $0x60] sm:$0xf]
      %v1107 = vld [vmem:[%s1081 + $0x64] sm:$0xf]
      %v1108 = vld [vmem:[%s1081 + $0x68] sm:$0xf]
      %v1109 = vld [vmem:[%s1081 + $0x6c] sm:$0xf]
      %v1110 = vld [vmem:[%s1081 + $0x70] sm:$0xf]
      %v1111 = vld [vmem:[%s1081 + $0x74] sm:$0xf]
      %v1112 = vld [vmem:[%s1081 + $0x78] sm:$0xf]
      %v1113 = vld [vmem:[%s1081 + $0x7c] sm:$0xf]
      %v1114 = vld [vmem:[%s1081 + $0x80] sm:$0xf]
      %v1115 = vld [vmem:[%s1081 + $0x84] sm:$0xf]
      %v1116 = vld [vmem:[%s1081 + $0x88] sm:$0xf]
      %v1117 = vld [vmem:[%s1081 + $0x8c] sm:$0xf]
      %v1118 = vld [vmem:[%s1081 + $0x90] sm:$0xf]
      %v1119 = vld [vmem:[%s1081 + $0x94] sm:$0xf]
      %v1120 = vld [vmem:[%s1081 + $0x98] sm:$0xf]
      %v1121 = vld [vmem:[%s1081 + $0x9c] sm:$0xf]
      %v1122 = vld [vmem:[%s1081 + $0xa0] sm:$0xf]
      %v1123 = vld [vmem:[%s1081 + $0xa4] sm:$0xf]
      %v1124 = vld [vmem:[%s1081 + $0xa8] sm:$0xf]
      %v1125 = vld [vmem:[%s1081 + $0xac] sm:$0xf]
      %v1126 = vld [vmem:[%s1081 + $0xb0] sm:$0xf]
      %v1127 = vld [vmem:[%s1081 + $0xb4] sm:$0xf]
      %v1128 = vld [vmem:[%s1081 + $0xb8] sm:$0xf]
      %v1129 = vld [vmem:[%s1081 + $0xbc] sm:$0xf]
      %v1130 = vld [vmem:[%s1081 + $0xc0] sm:$0xf]
      %v1131 = vld [vmem:[%s1081 + $0xc4] sm:$0xf]
      %v1132 = vld [vmem:[%s1081 + $0xc8] sm:$0xf]
      %v1133 = vld [vmem:[%s1081 + $0xcc] sm:$0xf]
      %v1134 = vld [vmem:[%s1081 + $0xd0] sm:$0xf]
      %v1135 = vld [vmem:[%s1081 + $0xd4] sm:$0xf]
      %v1136 = vld [vmem:[%s1081 + $0xd8] sm:$0xf]
      %v1137 = vld [vmem:[%s1081 + $0xdc] sm:$0xf]
      %v1138 = vld [vmem:[%s1081 + $0xe0] sm:$0xf]
      %v1139 = vld [vmem:[%s1081 + $0xe4] sm:$0xf]
      %v1140 = vld [vmem:[%s1081 + $0xe8] sm:$0xf]
      %v1141 = vld [vmem:[%s1081 + $0xec] sm:$0xf]
      %v1142 = vld [vmem:[%s1081 + $0xf0] sm:$0xf]
      %v1143 = vld [vmem:[%s1081 + $0xf4] sm:$0xf]
      %v1144 = vld [vmem:[%s1081 + $0xf8] sm:$0xf]
      %v1145 = vld [vmem:[%s1081 + $0xfc] sm:$0xf]
      %v1146 = vld [vmem:[%s1081 + $0x100] sm:$0xf]
      %v1147 = vld [vmem:[%s1081 + $0x104] sm:$0xf]
      %v1148 = vld [vmem:[%s1081 + $0x108] sm:$0xf]
      %v1149 = vld [vmem:[%s1081 + $0x10c] sm:$0xf]
      %s1150 = scalar_lea.vmem %s3, 816
      %v1151 = vld [vmem:[%s1150] sm:$0xf]
      %v1152 = vld [vmem:[%s1150 + $0x4] sm:$0xf]
      %v1153 = vld [vmem:[%s1150 + $0x8] sm:$0xf]
      %v1154 = vld [vmem:[%s1150 + $0xc] sm:$0xf]
      %v1155 = vld [vmem:[%s1150 + $0x10] sm:$0xf]
      %v1156 = vld [vmem:[%s1150 + $0x14] sm:$0xf]
      %v1157 = vld [vmem:[%s1150 + $0x18] sm:$0xf]
      %v1158 = vld [vmem:[%s1150 + $0x1c] sm:$0xf]
      %v1159 = vld [vmem:[%s1150 + $0x20] sm:$0xf]
      %v1160 = vld [vmem:[%s1150 + $0x24] sm:$0xf]
      %v1161 = vld [vmem:[%s1150 + $0x28] sm:$0xf]
      %v1162 = vld [vmem:[%s1150 + $0x2c] sm:$0xf]
      %v1163 = vld [vmem:[%s1150 + $0x30] sm:$0xf]
      %v1164 = vld [vmem:[%s1150 + $0x34] sm:$0xf]
      %v1165 = vld [vmem:[%s1150 + $0x38] sm:$0xf]
      %v1166 = vld [vmem:[%s1150 + $0x3c] sm:$0xf]
      %v1167 = vld [vmem:[%s1150 + $0x40] sm:$0xf]
      %v1168 = vld [vmem:[%s1150 + $0x44] sm:$0xf]
      %v1169 = vld [vmem:[%s1150 + $0x48] sm:$0xf]
      %v1170 = vld [vmem:[%s1150 + $0x4c] sm:$0xf]
      %v1171 = vld [vmem:[%s1150 + $0x50] sm:$0xf]
      %v1172 = vld [vmem:[%s1150 + $0x54] sm:$0xf]
      %v1173 = vld [vmem:[%s1150 + $0x58] sm:$0xf]
      %v1174 = vld [vmem:[%s1150 + $0x5c] sm:$0xf]
      %v1175 = vld [vmem:[%s1150 + $0x60] sm:$0xf]
      %v1176 = vld [vmem:[%s1150 + $0x64] sm:$0xf]
      %v1177 = vld [vmem:[%s1150 + $0x68] sm:$0xf]
      %v1178 = vld [vmem:[%s1150 + $0x6c] sm:$0xf]
      %v1179 = vld [vmem:[%s1150 + $0x70] sm:$0xf]
      %v1180 = vld [vmem:[%s1150 + $0x74] sm:$0xf]
      %v1181 = vld [vmem:[%s1150 + $0x78] sm:$0xf]
      %v1182 = vld [vmem:[%s1150 + $0x7c] sm:$0xf]
      %v1183 = vld [vmem:[%s1150 + $0x80] sm:$0xf]
      %v1184 = vld [vmem:[%s1150 + $0x84] sm:$0xf]
      %v1185 = vld [vmem:[%s1150 + $0x88] sm:$0xf]
      %v1186 = vld [vmem:[%s1150 + $0x8c] sm:$0xf]
      %v1187 = vld [vmem:[%s1150 + $0x90] sm:$0xf]
      %v1188 = vld [vmem:[%s1150 + $0x94] sm:$0xf]
      %v1189 = vld [vmem:[%s1150 + $0x98] sm:$0xf]
      %v1190 = vld [vmem:[%s1150 + $0x9c] sm:$0xf]
      %v1191 = vld [vmem:[%s1150 + $0xa0] sm:$0xf]
      %v1192 = vld [vmem:[%s1150 + $0xa4] sm:$0xf]
      %v1193 = vld [vmem:[%s1150 + $0xa8] sm:$0xf]
      %v1194 = vld [vmem:[%s1150 + $0xac] sm:$0xf]
      %v1195 = vld [vmem:[%s1150 + $0xb0] sm:$0xf]
      %v1196 = vld [vmem:[%s1150 + $0xb4] sm:$0xf]
      %v1197 = vld [vmem:[%s1150 + $0xb8] sm:$0xf]
      %v1198 = vld [vmem:[%s1150 + $0xbc] sm:$0xf]
      %v1199 = vld [vmem:[%s1150 + $0xc0] sm:$0xf]
      %v1200 = vld [vmem:[%s1150 + $0xc4] sm:$0xf]
      %v1201 = vld [vmem:[%s1150 + $0xc8] sm:$0xf]
      %v1202 = vld [vmem:[%s1150 + $0xcc] sm:$0xf]
      %v1203 = vld [vmem:[%s1150 + $0xd0] sm:$0xf]
      %v1204 = vld [vmem:[%s1150 + $0xd4] sm:$0xf]
      %v1205 = vld [vmem:[%s1150 + $0xd8] sm:$0xf]
      %v1206 = vld [vmem:[%s1150 + $0xdc] sm:$0xf]
      %v1207 = vld [vmem:[%s1150 + $0xe0] sm:$0xf]
      %v1208 = vld [vmem:[%s1150 + $0xe4] sm:$0xf]
      %v1209 = vld [vmem:[%s1150 + $0xe8] sm:$0xf]
      %v1210 = vld [vmem:[%s1150 + $0xec] sm:$0xf]
      %v1211 = vld [vmem:[%s1150 + $0xf0] sm:$0xf]
      %v1212 = vld [vmem:[%s1150 + $0xf4] sm:$0xf]
      %v1213 = vld [vmem:[%s1150 + $0xf8] sm:$0xf]
      %v1214 = vld [vmem:[%s1150 + $0xfc] sm:$0xf]
      %v1215 = vld [vmem:[%s1150 + $0x100] sm:$0xf]
      %v1216 = vld [vmem:[%s1150 + $0x104] sm:$0xf]
      %v1217 = vld [vmem:[%s1150 + $0x108] sm:$0xf]
      %v1218 = vld [vmem:[%s1150 + $0x10c] sm:$0xf]
      %vm1244 = vcmask 1043456
      %v1245 = vrot.slane %v1056, 4
      %v1246 = vrot.slane %v1061, 4
      %v1247 = vsel %vm1244, %v1245, %v1246
      %v1248 = vrot.slane %v1057, 4
      %v1249 = vrot.slane %v1062, 4
      %v1250 = vsel %vm1244, %v1248, %v1249
      %v1251 = vrot.slane %v1058, 4
      %v1252 = vrot.slane %v1063, 4
      %v1253 = vsel %vm1244, %v1251, %v1252
      %v1254 = vrot.slane %v1059, 4
      %v1255 = vrot.slane %v1064, 4
      %v1256 = vsel %vm1244, %v1254, %v1255
      %v1257 = vrot.slane %v1060, 4
      %v1258 = vrot.slane %v1065, 4
      %v1259 = vsel %vm1244, %v1257, %v1258
      %v1260 = vrot.slane %v1066, 4
      %v1261 = vsel %vm1244, %v1246, %v1260
      %v1262 = vrot.slane %v1067, 4
      %v1263 = vsel %vm1244, %v1249, %v1262
      %v1264 = vrot.slane %v1068, 4
      %v1265 = vsel %vm1244, %v1252, %v1264
      %v1266 = vrot.slane %v1069, 4
      %v1267 = vsel %vm1244, %v1255, %v1266
      %v1268 = vrot.slane %v1070, 4
      %v1269 = vsel %vm1244, %v1258, %v1268
      %v1270 = vrot.slane %v1071, 4
      %v1271 = vsel %vm1244, %v1260, %v1270
      %v1272 = vrot.slane %v1072, 4
      %v1273 = vsel %vm1244, %v1262, %v1272
      %v1274 = vrot.slane %v1073, 4
      %v1275 = vsel %vm1244, %v1264, %v1274
      %v1276 = vrot.slane %v1074, 4
      %v1277 = vsel %vm1244, %v1266, %v1276
      %v1278 = vrot.slane %v1075, 4
      %v1279 = vsel %vm1244, %v1268, %v1278
      %v1280 = vrot.slane %v1076, 4
      %v1281 = vsel %vm1244, %v1270, %v1280
      %v1282 = vrot.slane %v1077, 4
      %v1283 = vsel %vm1244, %v1272, %v1282
      %v1284 = vrot.slane %v1078, 4
      %v1285 = vsel %vm1244, %v1274, %v1284
      %v1286 = vrot.slane %v1079, 4
      %v1287 = vsel %vm1244, %v1276, %v1286
      %v1288 = vrot.slane %v1080, 4
      %v1289 = vsel %vm1244, %v1278, %v1288
      %v1374 = vunpack.c.l.b16 %v1151
      %v1375 = vunpack.c.l.b16 %v1152
      %v1376 = vunpack.c.l.b16 %v1153
      %v1377 = vunpack.c.l.b16 %v1154
      %v1378 = vunpack.c.l.b16 %v1155
      %v1379 = vunpack.c.l.b16 %v1156
      %v1380 = vunpack.c.l.b16 %v1157
      %v1381 = vunpack.c.l.b16 %v1158
      %v1382 = vunpack.c.l.b16 %v1159
      %v1383 = vunpack.c.l.b16 %v1160
      %v1384 = vunpack.c.l.b16 %v1161
      %v1385 = vunpack.c.l.b16 %v1162
      %v1386 = vunpack.c.l.b16 %v1163
      %v1387 = vunpack.c.l.b16 %v1164
      %v1388 = vunpack.c.l.b16 %v1165
      %v1389 = vunpack.c.l.b16 %v1166
      %v1390 = vunpack.c.l.b16 %v1167
      %v1391 = vunpack.c.l.b16 %v1168
      %v1392 = vunpack.c.l.b16 %v1169
      %v1393 = vunpack.c.l.b16 %v1170
      %v1394 = vunpack.c.l.b16 %v1171
      %v1395 = vunpack.c.l.b16 %v1172
      %v1396 = vunpack.c.l.b16 %v1173
      %v1397 = vunpack.c.l.b16 %v1174
      %v1398 = vunpack.c.l.b16 %v1175
      %v1399 = vunpack.c.l.b16 %v1176
      %v1400 = vunpack.c.l.b16 %v1177
      %v1401 = vunpack.c.l.b16 %v1178
      %v1402 = vunpack.c.l.b16 %v1179
      %v1403 = vunpack.c.l.b16 %v1180
      %v1404 = vunpack.c.l.b16 %v1181
      %v1405 = vunpack.c.l.b16 %v1182
      %v1406 = vunpack.c.l.b16 %v1183
      %v1407 = vunpack.c.l.b16 %v1184
      %v1408 = vunpack.c.l.b16 %v1185
      %v1409 = vunpack.c.l.b16 %v1186
      %v1410 = vunpack.c.l.b16 %v1187
      %v1411 = vunpack.c.l.b16 %v1188
      %v1412 = vunpack.c.l.b16 %v1189
      %v1413 = vunpack.c.l.b16 %v1190
      %v1414 = vunpack.c.l.b16 %v1191
      %v1415 = vunpack.c.l.b16 %v1192
      %v1416 = vunpack.c.l.b16 %v1193
      %v1417 = vunpack.c.l.b16 %v1194
      %v1418 = vunpack.c.l.b16 %v1195
      %v1419 = vunpack.c.l.b16 %v1196
      %v1420 = vunpack.c.l.b16 %v1197
      %v1421 = vunpack.c.l.b16 %v1198
      %v1422 = vunpack.c.l.b16 %v1199
      %v1423 = vunpack.c.l.b16 %v1200
      %v1424 = vunpack.c.l.b16 %v1201
      %v1425 = vunpack.c.l.b16 %v1202
      %v1426 = vunpack.c.l.b16 %v1203
      %v1427 = vunpack.c.l.b16 %v1204
      %v1428 = vunpack.c.l.b16 %v1205
      %v1429 = vunpack.c.l.b16 %v1206
      %v1430 = vunpack.c.l.b16 %v1207
      %v1431 = vunpack.c.l.b16 %v1208
      %v1432 = vunpack.c.l.b16 %v1209
      %v1433 = vunpack.c.l.b16 %v1210
      %v1434 = vunpack.c.l.b16 %v1211
      %v1435 = vunpack.c.l.b16 %v1212
      %v1436 = vunpack.c.l.b16 %v1213
      %v1437 = vunpack.c.l.b16 %v1214
      %v1438 = vunpack.c.l.b16 %v1215
      %v1439 = vunpack.c.l.b16 %v1216
      %v1440 = vunpack.c.l.b16 %v1217
      %v1441 = vunpack.c.l.b16 %v1218
      %v1442 = vpack.c.b16 %v1375, %v1374
      %v1443 = vpack.c.b16 %v1377, %v1376
      %v1444 = vpack.c.b16 %v1379, %v1378
      %v1445 = vpack.c.b16 %v1381, %v1380
      %v1446 = vpack.c.b16 %v1383, %v1382
      %v1447 = vpack.c.b16 %v1385, %v1384
      %v1448 = vpack.c.b16 %v1387, %v1386
      %v1449 = vpack.c.b16 %v1389, %v1388
      %v1450 = vpack.c.b16 %v1391, %v1390
      %v1451 = vpack.c.b16 %v1393, %v1392
      %v1452 = vpack.c.b16 %v1395, %v1394
      %v1453 = vpack.c.b16 %v1397, %v1396
      %v1454 = vpack.c.b16 %v1399, %v1398
      %v1455 = vpack.c.b16 %v1401, %v1400
      %v1456 = vpack.c.b16 %v1403, %v1402
      %v1457 = vpack.c.b16 %v1405, %v1404
      %v1458 = vpack.c.b16 %v1407, %v1406
      %v1459 = vpack.c.b16 %v1409, %v1408
      %v1460 = vpack.c.b16 %v1411, %v1410
      %v1461 = vpack.c.b16 %v1413, %v1412
      %v1462 = vpack.c.b16 %v1415, %v1414
      %v1463 = vpack.c.b16 %v1417, %v1416
      %v1464 = vpack.c.b16 %v1419, %v1418
      %v1465 = vpack.c.b16 %v1421, %v1420
      %v1466 = vpack.c.b16 %v1423, %v1422
      %v1467 = vpack.c.b16 %v1425, %v1424
      %v1468 = vpack.c.b16 %v1427, %v1426
      %v1469 = vpack.c.b16 %v1429, %v1428
      %v1470 = vpack.c.b16 %v1431, %v1430
      %v1471 = vpack.c.b16 %v1433, %v1432
      %v1472 = vpack.c.b16 %v1435, %v1434
      %v1473 = vpack.c.b16 %v1437, %v1436
      %v1474 = vpack.c.b16 %v1439, %v1438
      %v1475 = vpack.c.b16 %v1441, %v1440
      %vm1510 = vcmask 261120
      %v1512 = vsel %vm1510, %v1259, 0
      %v1515 = vsel %vm1510, %v1269, 0
      %v1518 = vsel %vm1510, %v1279, 0
      %v1521 = vsel %vm1510, %v1289, 0
      %1523 = vmatprep.subr.bf16.mxu0 0
      %1524 = vmatpush1.bf16.msra.mxu0 %v1442
      %1525 = vmatprep.subr.bf16.mxu0 0
      %1526 = vmatpush1.bf16.msra.mxu0 %v1443
      %1527 = vmatprep.subr.bf16.mxu0 0
      %1528 = vmatpush1.bf16.msra.mxu0 %v1444
      %1529 = vmatprep.subr.bf16.mxu0 0
      %1530 = vmatpush1.bf16.msra.mxu0 %v1445
      %1531 = vmatprep.subr.bf16.mxu0 0
      %1532 = vmatpush1.bf16.msra.mxu0 %v1446
      %1533 = vmatprep.subr.bf16.mxu0 0
      %1534 = vmatpush1.bf16.msra.mxu0 %v1447
      %1535 = vmatprep.subr.bf16.mxu0 0
      %1536 = vmatpush1.bf16.msra.mxu0 %v1448
      %1537 = vmatprep.subr.bf16.mxu0 0
      %1538 = vmatpush1.bf16.msra.mxu0 %v1449
      %1539 = vmatprep.subr.bf16.mxu0 0
      %1540 = vmatpush1.bf16.msra.mxu0 %v1450
      %1541 = vmatprep.subr.bf16.mxu0 0
      %1542 = vmatpush1.bf16.msra.mxu0 %v1451
      %1543 = vmatprep.subr.bf16.mxu0 0
      %1544 = vmatpush1.bf16.msra.mxu0 %v1452
      %1545 = vmatprep.subr.bf16.mxu0 0
      %1546 = vmatpush1.bf16.msra.mxu0 %v1453
      %1547 = vmatprep.subr.bf16.mxu0 0
      %1548 = vmatpush1.bf16.msra.mxu0 %v1454
      %1549 = vmatprep.subr.bf16.mxu0 0
      %1550 = vmatpush1.bf16.msra.mxu0 %v1455
      %1551 = vmatprep.subr.bf16.mxu0 0
      %1552 = vmatpush1.bf16.msra.mxu0 %v1456
      %1553 = vmatprep.subr.bf16.mxu0 0
      %1554 = vmatpush1.bf16.msra.mxu0 %v1457
      %1555 = vmatprep.mubr.bf16.mxu0 %v1250
      %1556 = vmatmul.mubr.bf16.gmra.mrb[0].mxu0 %v1247
      %v1557 = vpop.f32.mrb[0].mxu0
      %v1558 = vadd.f32 0.0, %v1557
      %v1559 = vpop.f32.mrb[0].mxu0
      %v1560 = vpop.f32.mrb[0].mxu0
      %v1561 = vadd.f32 0.0, %v1560
      %v1562 = vpop.f32.mrb[0].mxu0
      %1563 = vmatprep.mubr.bf16.mxu0 %v1263
      %1564 = vmatmul.mubr.bf16.gmra.mrb[0].mxu0 %v1261
      %v1565 = vpop.f32.mrb[0].mxu0
      %v1566 = vadd.f32 0.0, %v1565
      %v1567 = vpop.f32.mrb[0].mxu0
      %v1568 = vpop.f32.mrb[0].mxu0
      %v1569 = vadd.f32 0.0, %v1568
      %v1570 = vpop.f32.mrb[0].mxu0
      %1571 = vmatprep.mubr.bf16.mxu0 %v1273
      %1572 = vmatmul.mubr.bf16.gmra.mrb[0].mxu0 %v1271
      %v1573 = vpop.f32.mrb[0].mxu0
      %v1574 = vadd.f32 0.0, %v1573
      %v1575 = vpop.f32.mrb[0].mxu0
      %v1576 = vpop.f32.mrb[0].mxu0
      %v1577 = vadd.f32 0.0, %v1576
      %v1578 = vpop.f32.mrb[0].mxu0
      %1579 = vmatprep.mubr.bf16.mxu0 %v1283
      %1580 = vmatmul.mubr.bf16.gmra.mrb[0].mxu0 %v1281
      %v1581 = vpop.f32.mrb[0].mxu0
      %v1582 = vadd.f32 0.0, %v1581
      %v1583 = vpop.f32.mrb[0].mxu0
      %v1584 = vpop.f32.mrb[0].mxu0
      %v1585 = vadd.f32 0.0, %v1584
      %v1586 = vpop.f32.mrb[0].mxu0
      %1587 = vdwg.mxu0
      %1588 = vmatprep.subr.bf16.mxu0 0
      %1589 = vmatpush1.bf16.msra.mxu0 %v1458
      %1590 = vmatprep.subr.bf16.mxu0 0
      %1591 = vmatpush1.bf16.msra.mxu0 %v1459
      %1592 = vmatprep.subr.bf16.mxu0 0
      %1593 = vmatpush1.bf16.msra.mxu0 %v1460
      %1594 = vmatprep.subr.bf16.mxu0 0
      %1595 = vmatpush1.bf16.msra.mxu0 %v1461
      %1596 = vmatprep.subr.bf16.mxu0 0
      %1597 = vmatpush1.bf16.msra.mxu0 %v1462
      %1598 = vmatprep.subr.bf16.mxu0 0
      %1599 = vmatpush1.bf16.msra.mxu0 %v1463
      %1600 = vmatprep.subr.bf16.mxu0 0
      %1601 = vmatpush1.bf16.msra.mxu0 %v1464
      %1602 = vmatprep.subr.bf16.mxu0 0
      %1603 = vmatpush1.bf16.msra.mxu0 %v1465
      %1604 = vmatprep.subr.bf16.mxu0 0
      %1605 = vmatpush1.bf16.msra.mxu0 %v1466
      %1606 = vmatprep.subr.bf16.mxu0 0
      %1607 = vmatpush1.bf16.msra.mxu0 %v1467
      %1608 = vmatprep.subr.bf16.mxu0 0
      %1609 = vmatpush1.bf16.msra.mxu0 %v1468
      %1610 = vmatprep.subr.bf16.mxu0 0
      %1611 = vmatpush1.bf16.msra.mxu0 %v1469
      %1612 = vmatprep.subr.bf16.mxu0 0
      %1613 = vmatpush1.bf16.msra.mxu0 %v1470
      %1614 = vmatprep.subr.bf16.mxu0 0
      %1615 = vmatpush1.bf16.msra.mxu0 %v1471
      %1616 = vmatprep.subr.bf16.mxu0 0
      %1617 = vmatpush1.bf16.msra.mxu0 %v1472
      %1618 = vmatprep.subr.bf16.mxu0 0
      %1619 = vmatpush1.bf16.msra.mxu0 %v1473
      %1620 = vmatprep.mubr.bf16.mxu0 %v1256
      %1621 = vmatmul.mubr.bf16.gmra.mrb[0].mxu0 %v1253
      %v1622 = vpop.f32.mrb[0].mxu0
      %v1623 = vadd.f32 %v1558, %v1622
      %v1624 = vpop.f32.mrb[0].mxu0
      %v1625 = vpop.f32.mrb[0].mxu0
      %v1626 = vadd.f32 %v1561, %v1625
      %v1627 = vpop.f32.mrb[0].mxu0
      %1628 = vmatprep.mubr.bf16.mxu0 %v1267
      %1629 = vmatmul.mubr.bf16.gmra.mrb[0].mxu0 %v1265
      %v1630 = vpop.f32.mrb[0].mxu0
      %v1631 = vadd.f32 %v1566, %v1630
      %v1632 = vpop.f32.mrb[0].mxu0
      %v1633 = vpop.f32.mrb[0].mxu0
      %v1634 = vadd.f32 %v1569, %v1633
      %v1635 = vpop.f32.mrb[0].mxu0
      %1636 = vmatprep.mubr.bf16.mxu0 %v1277
      %1637 = vmatmul.mubr.bf16.gmra.mrb[0].mxu0 %v1275
      %v1638 = vpop.f32.mrb[0].mxu0
      %v1639 = vadd.f32 %v1574, %v1638
      %v1640 = vpop.f32.mrb[0].mxu0
      %v1641 = vpop.f32.mrb[0].mxu0
      %v1642 = vadd.f32 %v1577, %v1641
      %v1643 = vpop.f32.mrb[0].mxu0
      %1644 = vmatprep.mubr.bf16.mxu0 %v1287
      %1645 = vmatmul.mubr.bf16.gmra.mrb[0].mxu0 %v1285
      %v1646 = vpop.f32.mrb[0].mxu0
      %v1647 = vadd.f32 %v1582, %v1646
      %v1648 = vpop.f32.mrb[0].mxu0
      %v1649 = vpop.f32.mrb[0].mxu0
      %v1650 = vadd.f32 %v1585, %v1649
      %v1651 = vpop.f32.mrb[0].mxu0
      %1652 = vdwg.mxu0
      %1653 = vmatprep.subr.bf16.mxu0 0
      %1654 = vmatpush1.bf16.msra.mxu0 %v1474
      %1655 = vmatprep.subr.bf16.mxu0 0
      %1656 = vmatpush1.bf16.msra.mxu0 %v1475
      %1657 = vmatprep.subr.bf16.mxu0 0
      %1658 = vmatpush1.bf16.msra.mxu0 0
      %1659 = vmatprep.subr.bf16.mxu0 0
      %1660 = vmatpush1.bf16.msra.mxu0 0
      %1661 = vmatprep.subr.bf16.mxu0 0
      %1662 = vmatpush1.bf16.msra.mxu0 0
      %1663 = vmatprep.subr.bf16.mxu0 0
      %1664 = vmatpush1.bf16.msra.mxu0 0
      %1665 = vmatprep.subr.bf16.mxu0 0
      %1666 = vmatpush1.bf16.msra.mxu0 0
      %1667 = vmatprep.subr.bf16.mxu0 0
      %1668 = vmatpush1.bf16.msra.mxu0 0
      %1669 = vmatprep.subr.bf16.mxu0 0
      %1670 = vmatpush1.bf16.msra.mxu0 0
      %1671 = vmatprep.subr.bf16.mxu0 0
      %1672 = vmatpush1.bf16.msra.mxu0 0
      %1673 = vmatprep.subr.bf16.mxu0 0
      %1674 = vmatpush1.bf16.msra.mxu0 0
      %1675 = vmatprep.subr.bf16.mxu0 0
      %1676 = vmatpush1.bf16.msra.mxu0 0
      %1677 = vmatprep.subr.bf16.mxu0 0
      %1678 = vmatpush1.bf16.msra.mxu0 0
      %1679 = vmatprep.subr.bf16.mxu0 0
      %1680 = vmatpush1.bf16.msra.mxu0 0
      %1681 = vmatprep.subr.bf16.mxu0 0
      %1682 = vmatpush1.bf16.msra.mxu0 0
      %1683 = vmatprep.subr.bf16.mxu0 0
      %1684 = vmatpush1.bf16.msra.mxu0 0
      %1685 = vmatprep.mubr.bf16.mxu0 0
      %1686 = vmatmul.mubr.bf16.gmra.mrb[0].mxu0 %v1512
      %v1687 = vpop.f32.mrb[0].mxu0
      %v1688 = vadd.f32 %v1623, %v1687
      %v1689 = vpop.f32.mrb[0].mxu0
      %v1690 = vpop.f32.mrb[0].mxu0
      %v1691 = vadd.f32 %v1626, %v1690
      %v1692 = vpop.f32.mrb[0].mxu0
      %1693 = vmatprep.mubr.bf16.mxu0 0
      %1694 = vmatmul.mubr.bf16.gmra.mrb[0].mxu0 %v1515
      %v1695 = vpop.f32.mrb[0].mxu0
      %v1696 = vadd.f32 %v1631, %v1695
      %v1697 = vpop.f32.mrb[0].mxu0
      %v1698 = vpop.f32.mrb[0].mxu0
      %v1699 = vadd.f32 %v1634, %v1698
      %v1700 = vpop.f32.mrb[0].mxu0
      %1701 = vmatprep.mubr.bf16.mxu0 0
      %1702 = vmatmul.mubr.bf16.gmra.mrb[0].mxu0 %v1518
      %v1703 = vpop.f32.mrb[0].mxu0
      %v1704 = vadd.f32 %v1639, %v1703
      %v1705 = vpop.f32.mrb[0].mxu0
      %v1706 = vpop.f32.mrb[0].mxu0
      %v1707 = vadd.f32 %v1642, %v1706
      %v1708 = vpop.f32.mrb[0].mxu0
      %1709 = vmatprep.mubr.bf16.mxu0 0
      %1710 = vmatmul.mubr.bf16.gmra.mrb[0].mxu0 %v1521
      %v1711 = vpop.f32.mrb[0].mxu0
      %v1712 = vadd.f32 %v1647, %v1711
      %v1713 = vpop.f32.mrb[0].mxu0
      %v1714 = vpop.f32.mrb[0].mxu0
      %v1715 = vadd.f32 %v1650, %v1714
      %v1716 = vpop.f32.mrb[0].mxu0
      %1717 = vdwg.mxu0
      %v1786 = vunpack.c.l.b16 %v1082
      %v1787 = vunpack.c.l.b16 %v1083
      %v1788 = vunpack.c.l.b16 %v1084
      %v1789 = vunpack.c.l.b16 %v1085
      %v1790 = vunpack.c.l.b16 %v1086
      %v1791 = vunpack.c.l.b16 %v1087
      %v1792 = vunpack.c.l.b16 %v1088
      %v1793 = vunpack.c.l.b16 %v1089
      %v1794 = vunpack.c.l.b16 %v1090
      %v1795 = vunpack.c.l.b16 %v1091
      %v1796 = vunpack.c.l.b16 %v1092
      %v1797 = vunpack.c.l.b16 %v1093
      %v1798 = vunpack.c.l.b16 %v1094
      %v1799 = vunpack.c.l.b16 %v1095
      %v1800 = vunpack.c.l.b16 %v1096
      %v1801 = vunpack.c.l.b16 %v1097
      %v1802 = vunpack.c.l.b16 %v1098
      %v1803 = vunpack.c.l.b16 %v1099
      %v1804 = vunpack.c.l.b16 %v1100
      %v1805 = vunpack.c.l.b16 %v1101
      %v1806 = vunpack.c.l.b16 %v1102
      %v1807 = vunpack.c.l.b16 %v1103
      %v1808 = vunpack.c.l.b16 %v1104
      %v1809 = vunpack.c.l.b16 %v1105
      %v1810 = vunpack.c.l.b16 %v1106
      %v1811 = vunpack.c.l.b16 %v1107
      %v1812 = vunpack.c.l.b16 %v1108
      %v1813 = vunpack.c.l.b16 %v1109
      %v1814 = vunpack.c.l.b16 %v1110
      %v1815 = vunpack.c.l.b16 %v1111
      %v1816 = vunpack.c.l.b16 %v1112
      %v1817 = vunpack.c.l.b16 %v1113
      %v1818 = vunpack.c.l.b16 %v1114
      %v1819 = vunpack.c.l.b16 %v1115
      %v1820 = vunpack.c.l.b16 %v1116
      %v1821 = vunpack.c.l.b16 %v1117
      %v1822 = vunpack.c.l.b16 %v1118
      %v1823 = vunpack.c.l.b16 %v1119
      %v1824 = vunpack.c.l.b16 %v1120
      %v1825 = vunpack.c.l.b16 %v1121
      %v1826 = vunpack.c.l.b16 %v1122
      %v1827 = vunpack.c.l.b16 %v1123
      %v1828 = vunpack.c.l.b16 %v1124
      %v1829 = vunpack.c.l.b16 %v1125
      %v1830 = vunpack.c.l.b16 %v1126
      %v1831 = vunpack.c.l.b16 %v1127
      %v1832 = vunpack.c.l.b16 %v1128
      %v1833 = vunpack.c.l.b16 %v1129
      %v1834 = vunpack.c.l.b16 %v1130
      %v1835 = vunpack.c.l.b16 %v1131
      %v1836 = vunpack.c.l.b16 %v1132
      %v1837 = vunpack.c.l.b16 %v1133
      %v1838 = vunpack.c.l.b16 %v1134
      %v1839 = vunpack.c.l.b16 %v1135
      %v1840 = vunpack.c.l.b16 %v1136
      %v1841 = vunpack.c.l.b16 %v1137
      %v1842 = vunpack.c.l.b16 %v1138
      %v1843 = vunpack.c.l.b16 %v1139
      %v1844 = vunpack.c.l.b16 %v1140
      %v1845 = vunpack.c.l.b16 %v1141
      %v1846 = vunpack.c.l.b16 %v1142
      %v1847 = vunpack.c.l.b16 %v1143
      %v1848 = vunpack.c.l.b16 %v1144
      %v1849 = vunpack.c.l.b16 %v1145
      %v1850 = vunpack.c.l.b16 %v1146
      %v1851 = vunpack.c.l.b16 %v1147
      %v1852 = vunpack.c.l.b16 %v1148
      %v1853 = vunpack.c.l.b16 %v1149
      %v1854 = vpack.c.b16 %v1787, %v1786
      %v1855 = vpack.c.b16 %v1789, %v1788
      %v1856 = vpack.c.b16 %v1791, %v1790
      %v1857 = vpack.c.b16 %v1793, %v1792
      %v1858 = vpack.c.b16 %v1795, %v1794
      %v1859 = vpack.c.b16 %v1797, %v1796
      %v1860 = vpack.c.b16 %v1799, %v1798
      %v1861 = vpack.c.b16 %v1801, %v1800
      %v1862 = vpack.c.b16 %v1803, %v1802
      %v1863 = vpack.c.b16 %v1805, %v1804
      %v1864 = vpack.c.b16 %v1807, %v1806
      %v1865 = vpack.c.b16 %v1809, %v1808
      %v1866 = vpack.c.b16 %v1811, %v1810
      %v1867 = vpack.c.b16 %v1813, %v1812
      %v1868 = vpack.c.b16 %v1815, %v1814
      %v1869 = vpack.c.b16 %v1817, %v1816
      %v1870 = vpack.c.b16 %v1819, %v1818
      %v1871 = vpack.c.b16 %v1821, %v1820
      %v1872 = vpack.c.b16 %v1823, %v1822
      %v1873 = vpack.c.b16 %v1825, %v1824
      %v1874 = vpack.c.b16 %v1827, %v1826
      %v1875 = vpack.c.b16 %v1829, %v1828
      %v1876 = vpack.c.b16 %v1831, %v1830
      %v1877 = vpack.c.b16 %v1833, %v1832
      %v1878 = vpack.c.b16 %v1835, %v1834
      %v1879 = vpack.c.b16 %v1837, %v1836
      %v1880 = vpack.c.b16 %v1839, %v1838
      %v1881 = vpack.c.b16 %v1841, %v1840
      %v1882 = vpack.c.b16 %v1843, %v1842
      %v1883 = vpack.c.b16 %v1845, %v1844
      %v1884 = vpack.c.b16 %v1847, %v1846
      %v1885 = vpack.c.b16 %v1849, %v1848
      %v1886 = vpack.c.b16 %v1851, %v1850
      %v1887 = vpack.c.b16 %v1853, %v1852
      %v1923 = vsel %vm1510, %v1060, 0
      %v1926 = vsel %vm1510, %v1065, 0
      %v1929 = vsel %vm1510, %v1070, 0
      %v1932 = vsel %vm1510, %v1075, 0
      %1934 = vmatprep.subr.bf16.mxu0 0
      %1935 = vmatpush1.bf16.msra.mxu0 %v1854
      %1936 = vmatprep.subr.bf16.mxu0 0
      %1937 = vmatpush1.bf16.msra.mxu0 %v1855
      %1938 = vmatprep.subr.bf16.mxu0 0
      %1939 = vmatpush1.bf16.msra.mxu0 %v1856
      %1940 = vmatprep.subr.bf16.mxu0 0
      %1941 = vmatpush1.bf16.msra.mxu0 %v1857
      %1942 = vmatprep.subr.bf16.mxu0 0
      %1943 = vmatpush1.bf16.msra.mxu0 %v1858
      %1944 = vmatprep.subr.bf16.mxu0 0
      %1945 = vmatpush1.bf16.msra.mxu0 %v1859
      %1946 = vmatprep.subr.bf16.mxu0 0
      %1947 = vmatpush1.bf16.msra.mxu0 %v1860
      %1948 = vmatprep.subr.bf16.mxu0 0
      %1949 = vmatpush1.bf16.msra.mxu0 %v1861
      %1950 = vmatprep.subr.bf16.mxu0 0
      %1951 = vmatpush1.bf16.msra.mxu0 %v1862
      %1952 = vmatprep.subr.bf16.mxu0 0
      %1953 = vmatpush1.bf16.msra.mxu0 %v1863
      %1954 = vmatprep.subr.bf16.mxu0 0
      %1955 = vmatpush1.bf16.msra.mxu0 %v1864
      %1956 = vmatprep.subr.bf16.mxu0 0
      %1957 = vmatpush1.bf16.msra.mxu0 %v1865
      %1958 = vmatprep.subr.bf16.mxu0 0
      %1959 = vmatpush1.bf16.msra.mxu0 %v1866
      %1960 = vmatprep.subr.bf16.mxu0 0
      %1961 = vmatpush1.bf16.msra.mxu0 %v1867
      %1962 = vmatprep.subr.bf16.mxu0 0
      %1963 = vmatpush1.bf16.msra.mxu0 %v1868
      %1964 = vmatprep.subr.bf16.mxu0 0
      %1965 = vmatpush1.bf16.msra.mxu0 %v1869
      %1966 = vmatprep.mubr.bf16.mxu0 %v1057
      %1967 = vmatmul.mubr.bf16.gmra.mrb[0].mxu0 %v1056
      %v1968 = vpop.f32.mrb[0].mxu0
      %v1969 = vadd.f32 %v1688, %v1968
      %v1970 = vpop.f32.mrb[0].mxu0
      %v1971 = vpop.f32.mrb[0].mxu0
      %v1972 = vadd.f32 %v1691, %v1971
      %v1973 = vpop.f32.mrb[0].mxu0
      %1974 = vmatprep.mubr.bf16.mxu0 %v1062
      %1975 = vmatmul.mubr.bf16.gmra.mrb[0].mxu0 %v1061
      %v1976 = vpop.f32.mrb[0].mxu0
      %v1977 = vadd.f32 %v1696, %v1976
      %v1978 = vpop.f32.mrb[0].mxu0
      %v1979 = vpop.f32.mrb[0].mxu0
      %v1980 = vadd.f32 %v1699, %v1979
      %v1981 = vpop.f32.mrb[0].mxu0
      %1982 = vmatprep.mubr.bf16.mxu0 %v1067
      %1983 = vmatmul.mubr.bf16.gmra.mrb[0].mxu0 %v1066
      %v1984 = vpop.f32.mrb[0].mxu0
      %v1985 = vadd.f32 %v1704, %v1984
      %v1986 = vpop.f32.mrb[0].mxu0
      %v1987 = vpop.f32.mrb[0].mxu0
      %v1988 = vadd.f32 %v1707, %v1987
      %v1989 = vpop.f32.mrb[0].mxu0
      %1990 = vmatprep.mubr.bf16.mxu0 %v1072
      %1991 = vmatmul.mubr.bf16.gmra.mrb[0].mxu0 %v1071
      %v1992 = vpop.f32.mrb[0].mxu0
      %v1993 = vadd.f32 %v1712, %v1992
      %v1994 = vpop.f32.mrb[0].mxu0
      %v1995 = vpop.f32.mrb[0].mxu0
      %v1996 = vadd.f32 %v1715, %v1995
      %v1997 = vpop.f32.mrb[0].mxu0
      %1998 = vdwg.mxu0
      %1999 = vmatprep.subr.bf16.mxu0 0
      %2000 = vmatpush1.bf16.msra.mxu0 %v1870
      %2001 = vmatprep.subr.bf16.mxu0 0
      %2002 = vmatpush1.bf16.msra.mxu0 %v1871
      %2003 = vmatprep.subr.bf16.mxu0 0
      %2004 = vmatpush1.bf16.msra.mxu0 %v1872
      %2005 = vmatprep.subr.bf16.mxu0 0
      %2006 = vmatpush1.bf16.msra.mxu0 %v1873
      %2007 = vmatprep.subr.bf16.mxu0 0
      %2008 = vmatpush1.bf16.msra.mxu0 %v1874
      %2009 = vmatprep.subr.bf16.mxu0 0
      %2010 = vmatpush1.bf16.msra.mxu0 %v1875
      %2011 = vmatprep.subr.bf16.mxu0 0
      %2012 = vmatpush1.bf16.msra.mxu0 %v1876
      %2013 = vmatprep.subr.bf16.mxu0 0
      %2014 = vmatpush1.bf16.msra.mxu0 %v1877
      %2015 = vmatprep.subr.bf16.mxu0 0
      %2016 = vmatpush1.bf16.msra.mxu0 %v1878
      %2017 = vmatprep.subr.bf16.mxu0 0
      %2018 = vmatpush1.bf16.msra.mxu0 %v1879
      %2019 = vmatprep.subr.bf16.mxu0 0
      %2020 = vmatpush1.bf16.msra.mxu0 %v1880
      %2021 = vmatprep.subr.bf16.mxu0 0
      %2022 = vmatpush1.bf16.msra.mxu0 %v1881
      %2023 = vmatprep.subr.bf16.mxu0 0
      %2024 = vmatpush1.bf16.msra.mxu0 %v1882
      %2025 = vmatprep.subr.bf16.mxu0 0
      %2026 = vmatpush1.bf16.msra.mxu0 %v1883
      %2027 = vmatprep.subr.bf16.mxu0 0
      %2028 = vmatpush1.bf16.msra.mxu0 %v1884
      %2029 = vmatprep.subr.bf16.mxu0 0
      %2030 = vmatpush1.bf16.msra.mxu0 %v1885
      %2031 = vmatprep.mubr.bf16.mxu0 %v1059
      %2032 = vmatmul.mubr.bf16.gmra.mrb[0].mxu0 %v1058
      %v2033 = vpop.f32.mrb[0].mxu0
      %v2034 = vadd.f32 %v1969, %v2033
      %v2035 = vpop.f32.mrb[0].mxu0
      %v2036 = vpop.f32.mrb[0].mxu0
      %v2037 = vadd.f32 %v1972, %v2036
      %v2038 = vpop.f32.mrb[0].mxu0
      %2039 = vmatprep.mubr.bf16.mxu0 %v1064
      %2040 = vmatmul.mubr.bf16.gmra.mrb[0].mxu0 %v1063
      %v2041 = vpop.f32.mrb[0].mxu0
      %v2042 = vadd.f32 %v1977, %v2041
      %v2043 = vpop.f32.mrb[0].mxu0
      %v2044 = vpop.f32.mrb[0].mxu0
      %v2045 = vadd.f32 %v1980, %v2044
      %v2046 = vpop.f32.mrb[0].mxu0
      %2047 = vmatprep.mubr.bf16.mxu0 %v1069
      %2048 = vmatmul.mubr.bf16.gmra.mrb[0].mxu0 %v1068
      %v2049 = vpop.f32.mrb[0].mxu0
      %v2050 = vadd.f32 %v1985, %v2049
      %v2051 = vpop.f32.mrb[0].mxu0
      %v2052 = vpop.f32.mrb[0].mxu0
      %v2053 = vadd.f32 %v1988, %v2052
      %v2054 = vpop.f32.mrb[0].mxu0
      %2055 = vmatprep.mubr.bf16.mxu0 %v1074
      %2056 = vmatmul.mubr.bf16.gmra.mrb[0].mxu0 %v1073
      %v2057 = vpop.f32.mrb[0].mxu0
      %v2058 = vadd.f32 %v1993, %v2057
      %v2059 = vpop.f32.mrb[0].mxu0
      %v2060 = vpop.f32.mrb[0].mxu0
      %v2061 = vadd.f32 %v1996, %v2060
      %v2062 = vpop.f32.mrb[0].mxu0
      %2063 = vdwg.mxu0
      %2064 = vmatprep.subr.bf16.mxu0 0
      %2065 = vmatpush1.bf16.msra.mxu0 %v1886
      %2066 = vmatprep.subr.bf16.mxu0 0
      %2067 = vmatpush1.bf16.msra.mxu0 %v1887
      %2068 = vmatprep.subr.bf16.mxu0 0
      %2069 = vmatpush1.bf16.msra.mxu0 0
      %2070 = vmatprep.subr.bf16.mxu0 0
      %2071 = vmatpush1.bf16.msra.mxu0 0
      %2072 = vmatprep.subr.bf16.mxu0 0
      %2073 = vmatpush1.bf16.msra.mxu0 0
      %2074 = vmatprep.subr.bf16.mxu0 0
      %2075 = vmatpush1.bf16.msra.mxu0 0
      %2076 = vmatprep.subr.bf16.mxu0 0
      %2077 = vmatpush1.bf16.msra.mxu0 0
      %2078 = vmatprep.subr.bf16.mxu0 0
      %2079 = vmatpush1.bf16.msra.mxu0 0
      %2080 = vmatprep.subr.bf16.mxu0 0
      %2081 = vmatpush1.bf16.msra.mxu0 0
      %2082 = vmatprep.subr.bf16.mxu0 0
      %2083 = vmatpush1.bf16.msra.mxu0 0
      %2084 = vmatprep.subr.bf16.mxu0 0
      %2085 = vmatpush1.bf16.msra.mxu0 0
      %2086 = vmatprep.subr.bf16.mxu0 0
      %2087 = vmatpush1.bf16.msra.mxu0 0
      %2088 = vmatprep.subr.bf16.mxu0 0
      %2089 = vmatpush1.bf16.msra.mxu0 0
      %2090 = vmatprep.subr.bf16.mxu0 0
      %2091 = vmatpush1.bf16.msra.mxu0 0
      %2092 = vmatprep.subr.bf16.mxu0 0
      %2093 = vmatpush1.bf16.msra.mxu0 0
      %2094 = vmatprep.subr.bf16.mxu0 0
      %2095 = vmatpush1.bf16.msra.mxu0 0
      %2096 = vmatprep.mubr.bf16.mxu0 0
      %2097 = vmatmul.mubr.bf16.gmra.mrb[0].mxu0 %v1923
      %v2098 = vpop.f32.mrb[0].mxu0
      %v2099 = vadd.f32 %v2034, %v2098
      %v2100 = vpop.f32.mrb[0].mxu0
      %v2101 = vpop.f32.mrb[0].mxu0
      %v2102 = vadd.f32 %v2037, %v2101
      %v2103 = vpop.f32.mrb[0].mxu0
      %2104 = vmatprep.mubr.bf16.mxu0 0
      %2105 = vmatmul.mubr.bf16.gmra.mrb[0].mxu0 %v1926
      %v2106 = vpop.f32.mrb[0].mxu0
      %v2107 = vadd.f32 %v2042, %v2106
      %v2108 = vpop.f32.mrb[0].mxu0
      %v2109 = vpop.f32.mrb[0].mxu0
      %v2110 = vadd.f32 %v2045, %v2109
      %v2111 = vpop.f32.mrb[0].mxu0
      %2112 = vmatprep.mubr.bf16.mxu0 0
      %2113 = vmatmul.mubr.bf16.gmra.mrb[0].mxu0 %v1929
      %v2114 = vpop.f32.mrb[0].mxu0
      %v2115 = vadd.f32 %v2050, %v2114
      %v2116 = vpop.f32.mrb[0].mxu0
      %v2117 = vpop.f32.mrb[0].mxu0
      %v2118 = vadd.f32 %v2053, %v2117
      %v2119 = vpop.f32.mrb[0].mxu0
      %2120 = vmatprep.mubr.bf16.mxu0 0
      %2121 = vmatmul.mubr.bf16.gmra.mrb[0].mxu0 %v1932
      %v2122 = vpop.f32.mrb[0].mxu0
      %v2123 = vadd.f32 %v2058, %v2122
      %v2124 = vpop.f32.mrb[0].mxu0
      %v2125 = vpop.f32.mrb[0].mxu0
      %v2126 = vadd.f32 %v2061, %v2125
      %v2127 = vpop.f32.mrb[0].mxu0
      %2128 = vdwg.mxu0
      %v2129 = vld [vmem:[%s274] sm:$0xff]
      %v2130 = vld [vmem:[%s274 + $0x8] sm:$0xff]
      %v2131 = vld [vmem:[%s274 + $0x10] sm:$0xff]
      %v2132 = vld [vmem:[%s274 + $0x18] sm:$0xff]
      %v2133 = vld [vmem:[%s274 + $0x20] sm:$0xff]
      %v2134 = vld [vmem:[%s274 + $0x28] sm:$0xff]
      %v2135 = vld [vmem:[%s274 + $0x30] sm:$0xff]
      %v2136 = vld [vmem:[%s274 + $0x38] sm:$0xff]
      %v2137 = vld [vmem:[%s274 + $0x40] sm:$0xff]
      %v2147 = vunpack.c.l.b16 %v2129
      %v2148 = vunpack.c.h.b16 %v2129
      %v2149 = vunpack.c.l.b16 %v2130
      %v2150 = vunpack.c.h.b16 %v2130
      %v2151 = vunpack.c.l.b16 %v2131
      %v2152 = vunpack.c.h.b16 %v2131
      %v2153 = vunpack.c.l.b16 %v2132
      %v2154 = vunpack.c.h.b16 %v2132
      %v2155 = vunpack.c.l.b16 %v2133
      %v2156 = vunpack.c.h.b16 %v2133
      %v2157 = vunpack.c.l.b16 %v2134
      %v2158 = vunpack.c.h.b16 %v2134
      %v2159 = vunpack.c.l.b16 %v2135
      %v2160 = vunpack.c.h.b16 %v2135
      %v2161 = vunpack.c.l.b16 %v2136
      %v2162 = vunpack.c.h.b16 %v2136
      %v2163 = vunpack.c.l.b16 %v2137
      %v2164 = vunpack.c.h.b16 %v2137
      %v2165 = vpack.c.b16 %v2149, %v2147
      %v2166 = vpack.c.b16 %v2150, %v2148
      %v2167 = vpack.c.b16 %v2153, %v2151
      %v2168 = vpack.c.b16 %v2154, %v2152
      %v2169 = vpack.c.b16 %v2157, %v2155
      %v2170 = vpack.c.b16 %v2158, %v2156
      %v2171 = vpack.c.b16 %v2161, %v2159
      %v2172 = vpack.c.b16 %v2162, %v2160
      %v2173 = vpack.c.b16 %v2163, %v2163
      %v2174 = vpack.c.b16 %v2164, %v2164
      %v2181 = vsel %vm716, %v2166, 0
      %v2184 = vsel %vm716, %v2168, 0
      %v2187 = vsel %vm716, %v2170, 0
      %v2190 = vsel %vm716, %v2172, 0
      %v2193 = vsel %vm716, %v2174, 0
      %2195 = vmatprep.subr.bf16.mxu0 %v597
      %2196 = vmatpush1.bf16.msra.mxu0 %v596
      %2197 = vmatprep.subr.bf16.mxu0 %v602
      %2198 = vmatpush1.bf16.msra.mxu0 %v601
      %2199 = vmatprep.subr.bf16.mxu0 %v607
      %2200 = vmatpush1.bf16.msra.mxu0 %v606
      %2201 = vmatprep.subr.bf16.mxu0 %v612
      %2202 = vmatpush1.bf16.msra.mxu0 %v611
      %2203 = vmatprep.subr.bf16.mxu0 %v617
      %2204 = vmatpush1.bf16.msra.mxu0 %v616
      %2205 = vmatprep.subr.bf16.mxu0 %v622
      %2206 = vmatpush1.bf16.msra.mxu0 %v621
      %2207 = vmatprep.subr.bf16.mxu0 %v627
      %2208 = vmatpush1.bf16.msra.mxu0 %v626
      %2209 = vmatprep.subr.bf16.mxu0 %v632
      %2210 = vmatpush1.bf16.msra.mxu0 %v631
      %2211 = vmatprep.subr.bf16.mxu0 %v637
      %2212 = vmatpush1.bf16.msra.mxu0 %v636
      %2213 = vmatprep.subr.bf16.mxu0 %v642
      %2214 = vmatpush1.bf16.msra.mxu0 %v641
      %2215 = vmatprep.subr.bf16.mxu0 %v647
      %2216 = vmatpush1.bf16.msra.mxu0 %v646
      %2217 = vmatprep.subr.bf16.mxu0 %v652
      %2218 = vmatpush1.bf16.msra.mxu0 %v651
      %2219 = vmatprep.subr.bf16.mxu0 0
      %2220 = vmatpush1.bf16.msra.mxu0 0
      %2221 = vmatprep.subr.bf16.mxu0 0
      %2222 = vmatpush1.bf16.msra.mxu0 0
      %2223 = vmatprep.subr.bf16.mxu0 0
      %2224 = vmatpush1.bf16.msra.mxu0 0
      %2225 = vmatprep.subr.bf16.mxu0 0
      %2226 = vmatpush1.bf16.msra.mxu0 0
      %2227 = vmatprep.mubr.bf16.mxu0 %v2181
      %2228 = vmatmul.mubr.bf16.gmra.mrb[0].mxu0 %v2165
      %v2229 = vpop.f32.mrb[0].mxu0
      %v2230 = vadd.f32 0.0, %v2229
      %v2231 = vpop.f32.mrb[0].mxu0
      %v2232 = vadd.f32 0.0, %v2231
      %v2233 = vpop.f32.mrb[0].mxu0
      %v2234 = vadd.f32 0.0, %v2233
      %v2235 = vpop.f32.mrb[0].mxu0
      %v2236 = vadd.f32 0.0, %v2235
      %2237 = vmatprep.mubr.bf16.mxu0 %v2184
      %2238 = vmatmul.mubr.bf16.gmra.mrb[0].mxu0 %v2167
      %v2239 = vpop.f32.mrb[0].mxu0
      %v2240 = vadd.f32 0.0, %v2239
      %v2241 = vpop.f32.mrb[0].mxu0
      %v2242 = vadd.f32 0.0, %v2241
      %v2243 = vpop.f32.mrb[0].mxu0
      %v2244 = vadd.f32 0.0, %v2243
      %v2245 = vpop.f32.mrb[0].mxu0
      %v2246 = vadd.f32 0.0, %v2245
      %2247 = vmatprep.mubr.bf16.mxu0 %v2187
      %2248 = vmatmul.mubr.bf16.gmra.mrb[0].mxu0 %v2169
      %v2249 = vpop.f32.mrb[0].mxu0
      %v2250 = vadd.f32 0.0, %v2249
      %v2251 = vpop.f32.mrb[0].mxu0
      %v2252 = vadd.f32 0.0, %v2251
      %v2253 = vpop.f32.mrb[0].mxu0
      %v2254 = vadd.f32 0.0, %v2253
      %v2255 = vpop.f32.mrb[0].mxu0
      %v2256 = vadd.f32 0.0, %v2255
      %2257 = vmatprep.mubr.bf16.mxu0 %v2190
      %2258 = vmatmul.mubr.bf16.gmra.mrb[0].mxu0 %v2171
      %v2259 = vpop.f32.mrb[0].mxu0
      %v2260 = vadd.f32 0.0, %v2259
      %v2261 = vpop.f32.mrb[0].mxu0
      %v2262 = vadd.f32 0.0, %v2261
      %v2263 = vpop.f32.mrb[0].mxu0
      %v2264 = vadd.f32 0.0, %v2263
      %v2265 = vpop.f32.mrb[0].mxu0
      %v2266 = vadd.f32 0.0, %v2265
      %2267 = vmatprep.mubr.bf16.mxu0 %v2193
      %2268 = vmatmul.mubr.bf16.gmra.mrb[0].mxu0 %v2173
      %v2269 = vpop.f32.mrb[0].mxu0
      %v2270 = vadd.f32 0.0, %v2269
      %v2271 = vpop.f32.mrb[0].mxu0
      %v2272 = vadd.f32 0.0, %v2271
      %v2273 = vpop.f32.mrb[0].mxu0
      %v2274 = vpop.f32.mrb[0].mxu0
      %2275 = vdwg.mxu0
      %2276 = vmatprep.subr.bf16.mxu0 %v599
      %2277 = vmatpush1.bf16.msra.mxu0 %v598
      %2278 = vmatprep.subr.bf16.mxu0 %v604
      %2279 = vmatpush1.bf16.msra.mxu0 %v603
      %2280 = vmatprep.subr.bf16.mxu0 %v609
      %2281 = vmatpush1.bf16.msra.mxu0 %v608
      %2282 = vmatprep.subr.bf16.mxu0 %v614
      %2283 = vmatpush1.bf16.msra.mxu0 %v613
      %2284 = vmatprep.subr.bf16.mxu0 %v619
      %2285 = vmatpush1.bf16.msra.mxu0 %v618
      %2286 = vmatprep.subr.bf16.mxu0 %v624
      %2287 = vmatpush1.bf16.msra.mxu0 %v623
      %2288 = vmatprep.subr.bf16.mxu0 %v629
      %2289 = vmatpush1.bf16.msra.mxu0 %v628
      %2290 = vmatprep.subr.bf16.mxu0 %v634
      %2291 = vmatpush1.bf16.msra.mxu0 %v633
      %2292 = vmatprep.subr.bf16.mxu0 %v639
      %2293 = vmatpush1.bf16.msra.mxu0 %v638
      %2294 = vmatprep.subr.bf16.mxu0 %v644
      %2295 = vmatpush1.bf16.msra.mxu0 %v643
      %2296 = vmatprep.subr.bf16.mxu0 %v649
      %2297 = vmatpush1.bf16.msra.mxu0 %v648
      %2298 = vmatprep.subr.bf16.mxu0 %v654
      %2299 = vmatpush1.bf16.msra.mxu0 %v653
      %2300 = vmatprep.subr.bf16.mxu0 0
      %2301 = vmatpush1.bf16.msra.mxu0 0
      %2302 = vmatprep.subr.bf16.mxu0 0
      %2303 = vmatpush1.bf16.msra.mxu0 0
      %2304 = vmatprep.subr.bf16.mxu0 0
      %2305 = vmatpush1.bf16.msra.mxu0 0
      %2306 = vmatprep.subr.bf16.mxu0 0
      %2307 = vmatpush1.bf16.msra.mxu0 0
      %2308 = vmatprep.mubr.bf16.mxu0 %v2181
      %2309 = vmatmul.mubr.bf16.gmra.mrb[0].mxu0 %v2165
      %v2310 = vpop.f32.mrb[0].mxu0
      %v2311 = vadd.f32 0.0, %v2310
      %v2312 = vpop.f32.mrb[0].mxu0
      %v2313 = vadd.f32 0.0, %v2312
      %v2314 = vpop.f32.mrb[0].mxu0
      %v2315 = vadd.f32 0.0, %v2314
      %v2316 = vpop.f32.mrb[0].mxu0
      %v2317 = vadd.f32 0.0, %v2316
      %2318 = vmatprep.mubr.bf16.mxu0 %v2184
      %2319 = vmatmul.mubr.bf16.gmra.mrb[0].mxu0 %v2167
      %v2320 = vpop.f32.mrb[0].mxu0
      %v2321 = vadd.f32 0.0, %v2320
      %v2322 = vpop.f32.mrb[0].mxu0
      %v2323 = vadd.f32 0.0, %v2322
      %v2324 = vpop.f32.mrb[0].mxu0
      %v2325 = vadd.f32 0.0, %v2324
      %v2326 = vpop.f32.mrb[0].mxu0
      %v2327 = vadd.f32 0.0, %v2326
      %2328 = vmatprep.mubr.bf16.mxu0 %v2187
      %2329 = vmatmul.mubr.bf16.gmra.mrb[0].mxu0 %v2169
      %v2330 = vpop.f32.mrb[0].mxu0
      %v2331 = vadd.f32 0.0, %v2330
      %v2332 = vpop.f32.mrb[0].mxu0
      %v2333 = vadd.f32 0.0, %v2332
      %v2334 = vpop.f32.mrb[0].mxu0
      %v2335 = vadd.f32 0.0, %v2334
      %v2336 = vpop.f32.mrb[0].mxu0
      %v2337 = vadd.f32 0.0, %v2336
      %2338 = vmatprep.mubr.bf16.mxu0 %v2190
      %2339 = vmatmul.mubr.bf16.gmra.mrb[0].mxu0 %v2171
      %v2340 = vpop.f32.mrb[0].mxu0
      %v2341 = vadd.f32 0.0, %v2340
      %v2342 = vpop.f32.mrb[0].mxu0
      %v2343 = vadd.f32 0.0, %v2342
      %v2344 = vpop.f32.mrb[0].mxu0
      %v2345 = vadd.f32 0.0, %v2344
      %v2346 = vpop.f32.mrb[0].mxu0
      %v2347 = vadd.f32 0.0, %v2346
      %2348 = vmatprep.mubr.bf16.mxu0 %v2193
      %2349 = vmatmul.mubr.bf16.gmra.mrb[0].mxu0 %v2173
      %v2350 = vpop.f32.mrb[0].mxu0
      %v2351 = vadd.f32 0.0, %v2350
      %v2352 = vpop.f32.mrb[0].mxu0
      %v2353 = vadd.f32 0.0, %v2352
      %v2354 = vpop.f32.mrb[0].mxu0
      %v2355 = vpop.f32.mrb[0].mxu0
      %2356 = vdwg.mxu0
      %2357 = vmatprep.subr.bf16.mxu0 0
      %2358 = vmatpush1.bf16.msra.mxu0 %v600
      %2359 = vmatprep.subr.bf16.mxu0 0
      %2360 = vmatpush1.bf16.msra.mxu0 %v605
      %2361 = vmatprep.subr.bf16.mxu0 0
      %2362 = vmatpush1.bf16.msra.mxu0 %v610
      %2363 = vmatprep.subr.bf16.mxu0 0
      %2364 = vmatpush1.bf16.msra.mxu0 %v615
      %2365 = vmatprep.subr.bf16.mxu0 0
      %2366 = vmatpush1.bf16.msra.mxu0 %v620
      %2367 = vmatprep.subr.bf16.mxu0 0
      %2368 = vmatpush1.bf16.msra.mxu0 %v625
      %2369 = vmatprep.subr.bf16.mxu0 0
      %2370 = vmatpush1.bf16.msra.mxu0 %v630
      %2371 = vmatprep.subr.bf16.mxu0 0
      %2372 = vmatpush1.bf16.msra.mxu0 %v635
      %2373 = vmatprep.subr.bf16.mxu0 0
      %2374 = vmatpush1.bf16.msra.mxu0 %v640
      %2375 = vmatprep.subr.bf16.mxu0 0
      %2376 = vmatpush1.bf16.msra.mxu0 %v645
      %2377 = vmatprep.subr.bf16.mxu0 0
      %2378 = vmatpush1.bf16.msra.mxu0 %v650
      %2379 = vmatprep.subr.bf16.mxu0 0
      %2380 = vmatpush1.bf16.msra.mxu0 %v655
      %2381 = vmatprep.subr.bf16.mxu0 0
      %2382 = vmatpush1.bf16.msra.mxu0 0
      %2383 = vmatprep.subr.bf16.mxu0 0
      %2384 = vmatpush1.bf16.msra.mxu0 0
      %2385 = vmatprep.subr.bf16.mxu0 0
      %2386 = vmatpush1.bf16.msra.mxu0 0
      %2387 = vmatprep.subr.bf16.mxu0 0
      %2388 = vmatpush1.bf16.msra.mxu0 0
      %2389 = vmatprep.mubr.bf16.mxu0 %v2181
      %2390 = vmatmul.mubr.bf16.gmra.mrb[0].mxu0 %v2165
      %v2391 = vpop.f32.mrb[0].mxu0
      %v2392 = vadd.f32 0.0, %v2391
      %v2393 = vpop.f32.mrb[0].mxu0
      %v2394 = vpop.f32.mrb[0].mxu0
      %v2395 = vadd.f32 0.0, %v2394
      %v2396 = vpop.f32.mrb[0].mxu0
      %2397 = vmatprep.mubr.bf16.mxu0 %v2184
      %2398 = vmatmul.mubr.bf16.gmra.mrb[0].mxu0 %v2167
      %v2399 = vpop.f32.mrb[0].mxu0
      %v2400 = vadd.f32 0.0, %v2399
      %v2401 = vpop.f32.mrb[0].mxu0
      %v2402 = vpop.f32.mrb[0].mxu0
      %v2403 = vadd.f32 0.0, %v2402
      %v2404 = vpop.f32.mrb[0].mxu0
      %2405 = vmatprep.mubr.bf16.mxu0 %v2187
      %2406 = vmatmul.mubr.bf16.gmra.mrb[0].mxu0 %v2169
      %v2407 = vpop.f32.mrb[0].mxu0
      %v2408 = vadd.f32 0.0, %v2407
      %v2409 = vpop.f32.mrb[0].mxu0
      %v2410 = vpop.f32.mrb[0].mxu0
      %v2411 = vadd.f32 0.0, %v2410
      %v2412 = vpop.f32.mrb[0].mxu0
      %2413 = vmatprep.mubr.bf16.mxu0 %v2190
      %2414 = vmatmul.mubr.bf16.gmra.mrb[0].mxu0 %v2171
      %v2415 = vpop.f32.mrb[0].mxu0
      %v2416 = vadd.f32 0.0, %v2415
      %v2417 = vpop.f32.mrb[0].mxu0
      %v2418 = vpop.f32.mrb[0].mxu0
      %v2419 = vadd.f32 0.0, %v2418
      %v2420 = vpop.f32.mrb[0].mxu0
      %2421 = vmatprep.mubr.bf16.mxu0 %v2193
      %2422 = vmatmul.mubr.bf16.gmra.mrb[0].mxu0 %v2173
      %v2423 = vpop.f32.mrb[0].mxu0
      %v2424 = vadd.f32 0.0, %v2423
      %v2425 = vpop.f32.mrb[0].mxu0
      %v2426 = vpop.f32.mrb[0].mxu0
      %v2427 = vpop.f32.mrb[0].mxu0
      %2428 = vdwg.mxu0
      %v2429 = vmul.f32 %v2230, 0.2
      %v2430 = vmul.f32 %v2232, 0.2
      %v2431 = vmul.f32 %v2311, 0.2
      %v2432 = vmul.f32 %v2313, 0.2
      %v2433 = vmul.f32 %v2392, 0.2
      %v2434 = vmul.f32 %v2234, 0.2
      %v2435 = vmul.f32 %v2236, 0.2
      %v2436 = vmul.f32 %v2315, 0.2
      %v2437 = vmul.f32 %v2317, 0.2
      %v2438 = vmul.f32 %v2395, 0.2
      %v2439 = vmul.f32 %v2240, 0.2
      %v2440 = vmul.f32 %v2242, 0.2
      %v2441 = vmul.f32 %v2321, 0.2
      %v2442 = vmul.f32 %v2323, 0.2
      %v2443 = vmul.f32 %v2400, 0.2
      %v2444 = vmul.f32 %v2244, 0.2
      %v2445 = vmul.f32 %v2246, 0.2
      %v2446 = vmul.f32 %v2325, 0.2
      %v2447 = vmul.f32 %v2327, 0.2
      %v2448 = vmul.f32 %v2403, 0.2
      %v2449 = vmul.f32 %v2250, 0.2
      %v2450 = vmul.f32 %v2252, 0.2
      %v2451 = vmul.f32 %v2331, 0.2
      %v2452 = vmul.f32 %v2333, 0.2
      %v2453 = vmul.f32 %v2408, 0.2
      %v2454 = vmul.f32 %v2254, 0.2
      %v2455 = vmul.f32 %v2256, 0.2
      %v2456 = vmul.f32 %v2335, 0.2
      %v2457 = vmul.f32 %v2337, 0.2
      %v2458 = vmul.f32 %v2411, 0.2
      %v2459 = vmul.f32 %v2260, 0.2
      %v2460 = vmul.f32 %v2262, 0.2
      %v2461 = vmul.f32 %v2341, 0.2
      %v2462 = vmul.f32 %v2343, 0.2
      %v2463 = vmul.f32 %v2416, 0.2
      %v2464 = vmul.f32 %v2264, 0.2
      %v2465 = vmul.f32 %v2266, 0.2
      %v2466 = vmul.f32 %v2345, 0.2
      %v2467 = vmul.f32 %v2347, 0.2
      %v2468 = vmul.f32 %v2419, 0.2
      %v2469 = vmul.f32 %v2270, 0.2
      %v2470 = vmul.f32 %v2272, 0.2
      %v2471 = vmul.f32 %v2351, 0.2
      %v2472 = vmul.f32 %v2353, 0.2
      %v2473 = vmul.f32 %v2424, 0.2
      %v2474 = vmax.f32 %v2230, %v2429
      %v2475 = vmax.f32 %v2232, %v2430
      %v2476 = vmax.f32 %v2311, %v2431
      %v2477 = vmax.f32 %v2313, %v2432
      %v2478 = vmax.f32 %v2392, %v2433
      %v2479 = vmax.f32 %v2234, %v2434
      %v2480 = vmax.f32 %v2236, %v2435
      %v2481 = vmax.f32 %v2315, %v2436
      %v2482 = vmax.f32 %v2317, %v2437
      %v2483 = vmax.f32 %v2395, %v2438
      %v2484 = vmax.f32 %v2240, %v2439
      %v2485 = vmax.f32 %v2242, %v2440
      %v2486 = vmax.f32 %v2321, %v2441
      %v2487 = vmax.f32 %v2323, %v2442
      %v2488 = vmax.f32 %v2400, %v2443
      %v2489 = vmax.f32 %v2244, %v2444
      %v2490 = vmax.f32 %v2246, %v2445
      %v2491 = vmax.f32 %v2325, %v2446
      %v2492 = vmax.f32 %v2327, %v2447
      %v2493 = vmax.f32 %v2403, %v2448
      %v2494 = vmax.f32 %v2250, %v2449
      %v2495 = vmax.f32 %v2252, %v2450
      %v2496 = vmax.f32 %v2331, %v2451
      %v2497 = vmax.f32 %v2333, %v2452
      %v2498 = vmax.f32 %v2408, %v2453
      %v2499 = vmax.f32 %v2254, %v2454
      %v2500 = vmax.f32 %v2256, %v2455
      %v2501 = vmax.f32 %v2335, %v2456
      %v2502 = vmax.f32 %v2337, %v2457
      %v2503 = vmax.f32 %v2411, %v2458
      %v2504 = vmax.f32 %v2260, %v2459
      %v2505 = vmax.f32 %v2262, %v2460
      %v2506 = vmax.f32 %v2341, %v2461
      %v2507 = vmax.f32 %v2343, %v2462
      %v2508 = vmax.f32 %v2416, %v2463
      %v2509 = vmax.f32 %v2264, %v2464
      %v2510 = vmax.f32 %v2266, %v2465
      %v2511 = vmax.f32 %v2345, %v2466
      %v2512 = vmax.f32 %v2347, %v2467
      %v2513 = vmax.f32 %v2419, %v2468
      %v2514 = vmax.f32 %v2270, %v2469
      %v2515 = vmax.f32 %v2272, %v2470
      %v2516 = vmax.f32 %v2351, %v2471
      %v2517 = vmax.f32 %v2353, %v2472
      %v2518 = vmax.f32 %v2424, %v2473
      %v2519 = vpack.c.bf16 %v2479, %v2474
      %v2520 = vpack.c.bf16 %v2480, %v2475
      %v2521 = vpack.c.bf16 %v2481, %v2476
      %v2522 = vpack.c.bf16 %v2482, %v2477
      %v2523 = vpack.c.bf16 %v2483, %v2478
      %v2524 = vpack.c.bf16 %v2489, %v2484
      %v2525 = vpack.c.bf16 %v2490, %v2485
      %v2526 = vpack.c.bf16 %v2491, %v2486
      %v2527 = vpack.c.bf16 %v2492, %v2487
      %v2528 = vpack.c.bf16 %v2493, %v2488
      %v2529 = vpack.c.bf16 %v2499, %v2494
      %v2530 = vpack.c.bf16 %v2500, %v2495
      %v2531 = vpack.c.bf16 %v2501, %v2496
      %v2532 = vpack.c.bf16 %v2502, %v2497
      %v2533 = vpack.c.bf16 %v2503, %v2498
      %v2534 = vpack.c.bf16 %v2509, %v2504
      %v2535 = vpack.c.bf16 %v2510, %v2505
      %v2536 = vpack.c.bf16 %v2511, %v2506
      %v2537 = vpack.c.bf16 %v2512, %v2507
      %v2538 = vpack.c.bf16 %v2513, %v2508
      %v2539 = vpack.c.bf16 %v2514, %v2514
      %v2540 = vpack.c.bf16 %v2515, %v2515
      %v2541 = vpack.c.bf16 %v2516, %v2516
      %v2542 = vpack.c.bf16 %v2517, %v2517
      %v2543 = vpack.c.bf16 %v2518, %v2518
      %v2544 = vld [vmem:[%s3] sm:$0xf]
      %v2545 = vld [vmem:[%s3 + $0x4] sm:$0xf]
      %v2546 = vld [vmem:[%s3 + $0x8] sm:$0xf]
      %v2547 = vld [vmem:[%s3 + $0xc] sm:$0xf]
      %v2548 = vld [vmem:[%s3 + $0x10] sm:$0xf]
      %v2549 = vld [vmem:[%s3 + $0x14] sm:$0xf]
      %v2550 = vld [vmem:[%s3 + $0x18] sm:$0xf]
      %v2551 = vld [vmem:[%s3 + $0x1c] sm:$0xf]
      %v2552 = vld [vmem:[%s3 + $0x20] sm:$0xf]
      %v2553 = vld [vmem:[%s3 + $0x24] sm:$0xf]
      %v2554 = vld [vmem:[%s3 + $0x28] sm:$0xf]
      %v2555 = vld [vmem:[%s3 + $0x2c] sm:$0xf]
      %v2556 = vld [vmem:[%s3 + $0x30] sm:$0xf]
      %v2557 = vld [vmem:[%s3 + $0x34] sm:$0xf]
      %v2558 = vld [vmem:[%s3 + $0x38] sm:$0xf]
      %v2559 = vld [vmem:[%s3 + $0x3c] sm:$0xf]
      %v2560 = vld [vmem:[%s3 + $0x40] sm:$0xf]
      %v2561 = vld [vmem:[%s3 + $0x44] sm:$0xf]
      %v2562 = vld [vmem:[%s3 + $0x48] sm:$0xf]
      %v2563 = vld [vmem:[%s3 + $0x4c] sm:$0xf]
      %v2564 = vld [vmem:[%s3 + $0x50] sm:$0xf]
      %v2565 = vld [vmem:[%s3 + $0x54] sm:$0xf]
      %v2566 = vld [vmem:[%s3 + $0x58] sm:$0xf]
      %v2567 = vld [vmem:[%s3 + $0x5c] sm:$0xf]
      %v2568 = vld [vmem:[%s3 + $0x60] sm:$0xf]
      %v2569 = vld [vmem:[%s3 + $0x64] sm:$0xf]
      %v2570 = vld [vmem:[%s3 + $0x68] sm:$0xf]
      %v2571 = vld [vmem:[%s3 + $0x6c] sm:$0xf]
      %v2572 = vld [vmem:[%s3 + $0x70] sm:$0xf]
      %v2573 = vld [vmem:[%s3 + $0x74] sm:$0xf]
      %v2574 = vld [vmem:[%s3 + $0x78] sm:$0xf]
      %v2575 = vld [vmem:[%s3 + $0x7c] sm:$0xf]
      %v2576 = vld [vmem:[%s3 + $0x80] sm:$0xf]
      %v2577 = vld [vmem:[%s3 + $0x84] sm:$0xf]
      %v2578 = vld [vmem:[%s3 + $0x88] sm:$0xf]
      %v2579 = vld [vmem:[%s3 + $0x8c] sm:$0xf]
      %v2580 = vld [vmem:[%s3 + $0x90] sm:$0xf]
      %v2581 = vld [vmem:[%s3 + $0x94] sm:$0xf]
      %v2582 = vld [vmem:[%s3 + $0x98] sm:$0xf]
      %v2583 = vld [vmem:[%s3 + $0x9c] sm:$0xf]
      %v2584 = vld [vmem:[%s3 + $0xa0] sm:$0xf]
      %v2585 = vld [vmem:[%s3 + $0xa4] sm:$0xf]
      %v2586 = vld [vmem:[%s3 + $0xa8] sm:$0xf]
      %v2587 = vld [vmem:[%s3 + $0xac] sm:$0xf]
      %v2588 = vld [vmem:[%s3 + $0xb0] sm:$0xf]
      %v2589 = vld [vmem:[%s3 + $0xb4] sm:$0xf]
      %v2590 = vld [vmem:[%s3 + $0xb8] sm:$0xf]
      %v2591 = vld [vmem:[%s3 + $0xbc] sm:$0xf]
      %v2592 = vld [vmem:[%s3 + $0xc0] sm:$0xf]
      %v2593 = vld [vmem:[%s3 + $0xc4] sm:$0xf]
      %v2594 = vld [vmem:[%s3 + $0xc8] sm:$0xf]
      %v2595 = vld [vmem:[%s3 + $0xcc] sm:$0xf]
      %v2596 = vld [vmem:[%s3 + $0xd0] sm:$0xf]
      %v2597 = vld [vmem:[%s3 + $0xd4] sm:$0xf]
      %v2598 = vld [vmem:[%s3 + $0xd8] sm:$0xf]
      %v2599 = vld [vmem:[%s3 + $0xdc] sm:$0xf]
      %v2600 = vld [vmem:[%s3 + $0xe0] sm:$0xf]
      %v2601 = vld [vmem:[%s3 + $0xe4] sm:$0xf]
      %v2602 = vld [vmem:[%s3 + $0xe8] sm:$0xf]
      %v2603 = vld [vmem:[%s3 + $0xec] sm:$0xf]
      %v2604 = vld [vmem:[%s3 + $0xf0] sm:$0xf]
      %v2605 = vld [vmem:[%s3 + $0xf4] sm:$0xf]
      %v2606 = vld [vmem:[%s3 + $0xf8] sm:$0xf]
      %v2607 = vld [vmem:[%s3 + $0xfc] sm:$0xf]
      %v2608 = vld [vmem:[%s3 + $0x100] sm:$0xf]
      %v2609 = vld [vmem:[%s3 + $0x104] sm:$0xf]
      %v2610 = vld [vmem:[%s3 + $0x108] sm:$0xf]
      %v2611 = vld [vmem:[%s3 + $0x10c] sm:$0xf]
      %v2680 = vunpack.c.l.b16 %v2544
      %v2681 = vunpack.c.l.b16 %v2545
      %v2682 = vunpack.c.l.b16 %v2546
      %v2683 = vunpack.c.l.b16 %v2547
      %v2684 = vunpack.c.l.b16 %v2548
      %v2685 = vunpack.c.l.b16 %v2549
      %v2686 = vunpack.c.l.b16 %v2550
      %v2687 = vunpack.c.l.b16 %v2551
      %v2688 = vunpack.c.l.b16 %v2552
      %v2689 = vunpack.c.l.b16 %v2553
      %v2690 = vunpack.c.l.b16 %v2554
      %v2691 = vunpack.c.l.b16 %v2555
      %v2692 = vunpack.c.l.b16 %v2556
      %v2693 = vunpack.c.l.b16 %v2557
      %v2694 = vunpack.c.l.b16 %v2558
      %v2695 = vunpack.c.l.b16 %v2559
      %v2696 = vunpack.c.l.b16 %v2560
      %v2697 = vunpack.c.l.b16 %v2561
      %v2698 = vunpack.c.l.b16 %v2562
      %v2699 = vunpack.c.l.b16 %v2563
      %v2700 = vunpack.c.l.b16 %v2564
      %v2701 = vunpack.c.l.b16 %v2565
      %v2702 = vunpack.c.l.b16 %v2566
      %v2703 = vunpack.c.l.b16 %v2567
      %v2704 = vunpack.c.l.b16 %v2568
      %v2705 = vunpack.c.l.b16 %v2569
      %v2706 = vunpack.c.l.b16 %v2570
      %v2707 = vunpack.c.l.b16 %v2571
      %v2708 = vunpack.c.l.b16 %v2572
      %v2709 = vunpack.c.l.b16 %v2573
      %v2710 = vunpack.c.l.b16 %v2574
      %v2711 = vunpack.c.l.b16 %v2575
      %v2712 = vunpack.c.l.b16 %v2576
      %v2713 = vunpack.c.l.b16 %v2577
      %v2714 = vunpack.c.l.b16 %v2578
      %v2715 = vunpack.c.l.b16 %v2579
      %v2716 = vunpack.c.l.b16 %v2580
      %v2717 = vunpack.c.l.b16 %v2581
      %v2718 = vunpack.c.l.b16 %v2582
      %v2719 = vunpack.c.l.b16 %v2583
      %v2720 = vunpack.c.l.b16 %v2584
      %v2721 = vunpack.c.l.b16 %v2585
      %v2722 = vunpack.c.l.b16 %v2586
      %v2723 = vunpack.c.l.b16 %v2587
      %v2724 = vunpack.c.l.b16 %v2588
      %v2725 = vunpack.c.l.b16 %v2589
      %v2726 = vunpack.c.l.b16 %v2590
      %v2727 = vunpack.c.l.b16 %v2591
      %v2728 = vunpack.c.l.b16 %v2592
      %v2729 = vunpack.c.l.b16 %v2593
      %v2730 = vunpack.c.l.b16 %v2594
      %v2731 = vunpack.c.l.b16 %v2595
      %v2732 = vunpack.c.l.b16 %v2596
      %v2733 = vunpack.c.l.b16 %v2597
      %v2734 = vunpack.c.l.b16 %v2598
      %v2735 = vunpack.c.l.b16 %v2599
      %v2736 = vunpack.c.l.b16 %v2600
      %v2737 = vunpack.c.l.b16 %v2601
      %v2738 = vunpack.c.l.b16 %v2602
      %v2739 = vunpack.c.l.b16 %v2603
      %v2740 = vunpack.c.l.b16 %v2604
      %v2741 = vunpack.c.l.b16 %v2605
      %v2742 = vunpack.c.l.b16 %v2606
      %v2743 = vunpack.c.l.b16 %v2607
      %v2744 = vunpack.c.l.b16 %v2608
      %v2745 = vunpack.c.l.b16 %v2609
      %v2746 = vunpack.c.l.b16 %v2610
      %v2747 = vunpack.c.l.b16 %v2611
      %v2748 = vpack.c.b16 %v2681, %v2680
      %v2749 = vpack.c.b16 %v2683, %v2682
      %v2750 = vpack.c.b16 %v2685, %v2684
      %v2751 = vpack.c.b16 %v2687, %v2686
      %v2752 = vpack.c.b16 %v2689, %v2688
      %v2753 = vpack.c.b16 %v2691, %v2690
      %v2754 = vpack.c.b16 %v2693, %v2692
      %v2755 = vpack.c.b16 %v2695, %v2694
      %v2756 = vpack.c.b16 %v2697, %v2696
      %v2757 = vpack.c.b16 %v2699, %v2698
      %v2758 = vpack.c.b16 %v2701, %v2700
      %v2759 = vpack.c.b16 %v2703, %v2702
      %v2760 = vpack.c.b16 %v2705, %v2704
      %v2761 = vpack.c.b16 %v2707, %v2706
      %v2762 = vpack.c.b16 %v2709, %v2708
      %v2763 = vpack.c.b16 %v2711, %v2710
      %v2764 = vpack.c.b16 %v2713, %v2712
      %v2765 = vpack.c.b16 %v2715, %v2714
      %v2766 = vpack.c.b16 %v2717, %v2716
      %v2767 = vpack.c.b16 %v2719, %v2718
      %v2768 = vpack.c.b16 %v2721, %v2720
      %v2769 = vpack.c.b16 %v2723, %v2722
      %v2770 = vpack.c.b16 %v2725, %v2724
      %v2771 = vpack.c.b16 %v2727, %v2726
      %v2772 = vpack.c.b16 %v2729, %v2728
      %v2773 = vpack.c.b16 %v2731, %v2730
      %v2774 = vpack.c.b16 %v2733, %v2732
      %v2775 = vpack.c.b16 %v2735, %v2734
      %v2776 = vpack.c.b16 %v2737, %v2736
      %v2777 = vpack.c.b16 %v2739, %v2738
      %v2778 = vpack.c.b16 %v2741, %v2740
      %v2779 = vpack.c.b16 %v2743, %v2742
      %v2780 = vpack.c.b16 %v2745, %v2744
      %v2781 = vpack.c.b16 %v2747, %v2746
      %v2817 = vsel %vm1510, %v2523, 0
      %v2820 = vsel %vm1510, %v2528, 0
      %v2823 = vsel %vm1510, %v2533, 0
      %v2826 = vsel %vm1510, %v2538, 0
      %2828 = vmatprep.subr.bf16.mxu0 0
      %2829 = vmatpush1.bf16.msra.mxu0 %v2748
      %2830 = vmatprep.subr.bf16.mxu0 0
      %2831 = vmatpush1.bf16.msra.mxu0 %v2749
      %2832 = vmatprep.subr.bf16.mxu0 0
      %2833 = vmatpush1.bf16.msra.mxu0 %v2750
      %2834 = vmatprep.subr.bf16.mxu0 0
      %2835 = vmatpush1.bf16.msra.mxu0 %v2751
      %2836 = vmatprep.subr.bf16.mxu0 0
      %2837 = vmatpush1.bf16.msra.mxu0 %v2752
      %2838 = vmatprep.subr.bf16.mxu0 0
      %2839 = vmatpush1.bf16.msra.mxu0 %v2753
      %2840 = vmatprep.subr.bf16.mxu0 0
      %2841 = vmatpush1.bf16.msra.mxu0 %v2754
      %2842 = vmatprep.subr.bf16.mxu0 0
      %2843 = vmatpush1.bf16.msra.mxu0 %v2755
      %2844 = vmatprep.subr.bf16.mxu0 0
      %2845 = vmatpush1.bf16.msra.mxu0 %v2756
      %2846 = vmatprep.subr.bf16.mxu0 0
      %2847 = vmatpush1.bf16.msra.mxu0 %v2757
      %2848 = vmatprep.subr.bf16.mxu0 0
      %2849 = vmatpush1.bf16.msra.mxu0 %v2758
      %2850 = vmatprep.subr.bf16.mxu0 0
      %2851 = vmatpush1.bf16.msra.mxu0 %v2759
      %2852 = vmatprep.subr.bf16.mxu0 0
      %2853 = vmatpush1.bf16.msra.mxu0 %v2760
      %2854 = vmatprep.subr.bf16.mxu0 0
      %2855 = vmatpush1.bf16.msra.mxu0 %v2761
      %2856 = vmatprep.subr.bf16.mxu0 0
      %2857 = vmatpush1.bf16.msra.mxu0 %v2762
      %2858 = vmatprep.subr.bf16.mxu0 0
      %2859 = vmatpush1.bf16.msra.mxu0 %v2763
      %2860 = vmatprep.mubr.bf16.mxu0 %v2520
      %2861 = vmatmul.mubr.bf16.gmra.mrb[0].mxu0 %v2519
      %v2862 = vpop.f32.mrb[0].mxu0
      %v2863 = vadd.f32 0.0, %v2862
      %v2864 = vpop.f32.mrb[0].mxu0
      %v2865 = vpop.f32.mrb[0].mxu0
      %v2866 = vadd.f32 0.0, %v2865
      %v2867 = vpop.f32.mrb[0].mxu0
      %2868 = vmatprep.mubr.bf16.mxu0 %v2525
      %2869 = vmatmul.mubr.bf16.gmra.mrb[0].mxu0 %v2524
      %v2870 = vpop.f32.mrb[0].mxu0
      %v2871 = vadd.f32 0.0, %v2870
      %v2872 = vpop.f32.mrb[0].mxu0
      %v2873 = vpop.f32.mrb[0].mxu0
      %v2874 = vadd.f32 0.0, %v2873
      %v2875 = vpop.f32.mrb[0].mxu0
      %2876 = vmatprep.mubr.bf16.mxu0 %v2530
      %2877 = vmatmul.mubr.bf16.gmra.mrb[0].mxu0 %v2529
      %v2878 = vpop.f32.mrb[0].mxu0
      %v2879 = vadd.f32 0.0, %v2878
      %v2880 = vpop.f32.mrb[0].mxu0
      %v2881 = vpop.f32.mrb[0].mxu0
      %v2882 = vadd.f32 0.0, %v2881
      %v2883 = vpop.f32.mrb[0].mxu0
      %2884 = vmatprep.mubr.bf16.mxu0 %v2535
      %2885 = vmatmul.mubr.bf16.gmra.mrb[0].mxu0 %v2534
      %v2886 = vpop.f32.mrb[0].mxu0
      %v2887 = vadd.f32 0.0, %v2886
      %v2888 = vpop.f32.mrb[0].mxu0
      %v2889 = vpop.f32.mrb[0].mxu0
      %v2890 = vadd.f32 0.0, %v2889
      %v2891 = vpop.f32.mrb[0].mxu0
      %2892 = vdwg.mxu0
      %2893 = vmatprep.subr.bf16.mxu0 0
      %2894 = vmatpush1.bf16.msra.mxu0 %v2764
      %2895 = vmatprep.subr.bf16.mxu0 0
      %2896 = vmatpush1.bf16.msra.mxu0 %v2765
      %2897 = vmatprep.subr.bf16.mxu0 0
      %2898 = vmatpush1.bf16.msra.mxu0 %v2766
      %2899 = vmatprep.subr.bf16.mxu0 0
      %2900 = vmatpush1.bf16.msra.mxu0 %v2767
      %2901 = vmatprep.subr.bf16.mxu0 0
      %2902 = vmatpush1.bf16.msra.mxu0 %v2768
      %2903 = vmatprep.subr.bf16.mxu0 0
      %2904 = vmatpush1.bf16.msra.mxu0 %v2769
      %2905 = vmatprep.subr.bf16.mxu0 0
      %2906 = vmatpush1.bf16.msra.mxu0 %v2770
      %2907 = vmatprep.subr.bf16.mxu0 0
      %2908 = vmatpush1.bf16.msra.mxu0 %v2771
      %2909 = vmatprep.subr.bf16.mxu0 0
      %2910 = vmatpush1.bf16.msra.mxu0 %v2772
      %2911 = vmatprep.subr.bf16.mxu0 0
      %2912 = vmatpush1.bf16.msra.mxu0 %v2773
      %2913 = vmatprep.subr.bf16.mxu0 0
      %2914 = vmatpush1.bf16.msra.mxu0 %v2774
      %2915 = vmatprep.subr.bf16.mxu0 0
      %2916 = vmatpush1.bf16.msra.mxu0 %v2775
      %2917 = vmatprep.subr.bf16.mxu0 0
      %2918 = vmatpush1.bf16.msra.mxu0 %v2776
      %2919 = vmatprep.subr.bf16.mxu0 0
      %2920 = vmatpush1.bf16.msra.mxu0 %v2777
      %2921 = vmatprep.subr.bf16.mxu0 0
      %2922 = vmatpush1.bf16.msra.mxu0 %v2778
      %2923 = vmatprep.subr.bf16.mxu0 0
      %2924 = vmatpush1.bf16.msra.mxu0 %v2779
      %2925 = vmatprep.mubr.bf16.mxu0 %v2522
      %2926 = vmatmul.mubr.bf16.gmra.mrb[0].mxu0 %v2521
      %v2927 = vpop.f32.mrb[0].mxu0
      %v2928 = vadd.f32 %v2863, %v2927
      %v2929 = vpop.f32.mrb[0].mxu0
      %v2930 = vpop.f32.mrb[0].mxu0
      %v2931 = vadd.f32 %v2866, %v2930
      %v2932 = vpop.f32.mrb[0].mxu0
      %2933 = vmatprep.mubr.bf16.mxu0 %v2527
      %2934 = vmatmul.mubr.bf16.gmra.mrb[0].mxu0 %v2526
      %v2935 = vpop.f32.mrb[0].mxu0
      %v2936 = vadd.f32 %v2871, %v2935
      %v2937 = vpop.f32.mrb[0].mxu0
      %v2938 = vpop.f32.mrb[0].mxu0
      %v2939 = vadd.f32 %v2874, %v2938
      %v2940 = vpop.f32.mrb[0].mxu0
      %2941 = vmatprep.mubr.bf16.mxu0 %v2532
      %2942 = vmatmul.mubr.bf16.gmra.mrb[0].mxu0 %v2531
      %v2943 = vpop.f32.mrb[0].mxu0
      %v2944 = vadd.f32 %v2879, %v2943
      %v2945 = vpop.f32.mrb[0].mxu0
      %v2946 = vpop.f32.mrb[0].mxu0
      %v2947 = vadd.f32 %v2882, %v2946
      %v2948 = vpop.f32.mrb[0].mxu0
      %2949 = vmatprep.mubr.bf16.mxu0 %v2537
      %2950 = vmatmul.mubr.bf16.gmra.mrb[0].mxu0 %v2536
      %v2951 = vpop.f32.mrb[0].mxu0
      %v2952 = vadd.f32 %v2887, %v2951
      %v2953 = vpop.f32.mrb[0].mxu0
      %v2954 = vpop.f32.mrb[0].mxu0
      %v2955 = vadd.f32 %v2890, %v2954
      %v2956 = vpop.f32.mrb[0].mxu0
      %2957 = vdwg.mxu0
      %2958 = vmatprep.subr.bf16.mxu0 0
      %2959 = vmatpush1.bf16.msra.mxu0 %v2780
      %2960 = vmatprep.subr.bf16.mxu0 0
      %2961 = vmatpush1.bf16.msra.mxu0 %v2781
      %2962 = vmatprep.subr.bf16.mxu0 0
      %2963 = vmatpush1.bf16.msra.mxu0 0
      %2964 = vmatprep.subr.bf16.mxu0 0
      %2965 = vmatpush1.bf16.msra.mxu0 0
      %2966 = vmatprep.subr.bf16.mxu0 0
      %2967 = vmatpush1.bf16.msra.mxu0 0
      %2968 = vmatprep.subr.bf16.mxu0 0
      %2969 = vmatpush1.bf16.msra.mxu0 0
      %2970 = vmatprep.subr.bf16.mxu0 0
      %2971 = vmatpush1.bf16.msra.mxu0 0
      %2972 = vmatprep.subr.bf16.mxu0 0
      %2973 = vmatpush1.bf16.msra.mxu0 0
      %2974 = vmatprep.subr.bf16.mxu0 0
      %2975 = vmatpush1.bf16.msra.mxu0 0
      %2976 = vmatprep.subr.bf16.mxu0 0
      %2977 = vmatpush1.bf16.msra.mxu0 0
      %2978 = vmatprep.subr.bf16.mxu0 0
      %2979 = vmatpush1.bf16.msra.mxu0 0
      %2980 = vmatprep.subr.bf16.mxu0 0
      %2981 = vmatpush1.bf16.msra.mxu0 0
      %2982 = vmatprep.subr.bf16.mxu0 0
      %2983 = vmatpush1.bf16.msra.mxu0 0
      %2984 = vmatprep.subr.bf16.mxu0 0
      %2985 = vmatpush1.bf16.msra.mxu0 0
      %2986 = vmatprep.subr.bf16.mxu0 0
      %2987 = vmatpush1.bf16.msra.mxu0 0
      %2988 = vmatprep.subr.bf16.mxu0 0
      %2989 = vmatpush1.bf16.msra.mxu0 0
      %2990 = vmatprep.mubr.bf16.mxu0 0
      %2991 = vmatmul.mubr.bf16.gmra.mrb[0].mxu0 %v2817
      %v2992 = vpop.f32.mrb[0].mxu0
      %v2993 = vadd.f32 %v2928, %v2992
      %v2994 = vpop.f32.mrb[0].mxu0
      %v2995 = vpop.f32.mrb[0].mxu0
      %v2996 = vadd.f32 %v2931, %v2995
      %v2997 = vpop.f32.mrb[0].mxu0
      %2998 = vmatprep.mubr.bf16.mxu0 0
      %2999 = vmatmul.mubr.bf16.gmra.mrb[0].mxu0 %v2820
      %v3000 = vpop.f32.mrb[0].mxu0
      %v3001 = vadd.f32 %v2936, %v3000
      %v3002 = vpop.f32.mrb[0].mxu0
      %v3003 = vpop.f32.mrb[0].mxu0
      %v3004 = vadd.f32 %v2939, %v3003
      %v3005 = vpop.f32.mrb[0].mxu0
      %3006 = vmatprep.mubr.bf16.mxu0 0
      %3007 = vmatmul.mubr.bf16.gmra.mrb[0].mxu0 %v2823
      %v3008 = vpop.f32.mrb[0].mxu0
      %v3009 = vadd.f32 %v2944, %v3008
      %v3010 = vpop.f32.mrb[0].mxu0
      %v3011 = vpop.f32.mrb[0].mxu0
      %v3012 = vadd.f32 %v2947, %v3011
      %v3013 = vpop.f32.mrb[0].mxu0
      %3014 = vmatprep.mubr.bf16.mxu0 0
      %3015 = vmatmul.mubr.bf16.gmra.mrb[0].mxu0 %v2826
      %v3016 = vpop.f32.mrb[0].mxu0
      %v3017 = vadd.f32 %v2952, %v3016
      %v3018 = vpop.f32.mrb[0].mxu0
      %v3019 = vpop.f32.mrb[0].mxu0
      %v3020 = vadd.f32 %v2955, %v3019
      %v3021 = vpop.f32.mrb[0].mxu0
      %3022 = vdwg.mxu0
      %v3023 = vadd.f32 %v2099, %v2993
      %v3024 = vadd.f32 %v2102, %v2996
      %v3025 = vadd.f32 %v2107, %v3001
      %v3026 = vadd.f32 %v2110, %v3004
      %v3027 = vadd.f32 %v2115, %v3009
      %v3028 = vadd.f32 %v2118, %v3012
      %v3029 = vadd.f32 %v2123, %v3017
      %v3030 = vadd.f32 %v2126, %v3020
      %s3031 = scalar_lea.vmem %s3, 544
      %v3032 = vld [vmem:[%s3031] sm:$0xf]
      %v3033 = vld [vmem:[%s3031 + $0x4] sm:$0xf]
      %v3034 = vld [vmem:[%s3031 + $0x8] sm:$0xf]
      %v3035 = vld [vmem:[%s3031 + $0xc] sm:$0xf]
      %v3036 = vld [vmem:[%s3031 + $0x10] sm:$0xf]
      %v3037 = vld [vmem:[%s3031 + $0x14] sm:$0xf]
      %v3038 = vld [vmem:[%s3031 + $0x18] sm:$0xf]
      %v3039 = vld [vmem:[%s3031 + $0x1c] sm:$0xf]
      %v3040 = vld [vmem:[%s3031 + $0x20] sm:$0xf]
      %v3041 = vld [vmem:[%s3031 + $0x24] sm:$0xf]
      %v3042 = vld [vmem:[%s3031 + $0x28] sm:$0xf]
      %v3043 = vld [vmem:[%s3031 + $0x2c] sm:$0xf]
      %v3044 = vld [vmem:[%s3031 + $0x30] sm:$0xf]
      %v3045 = vld [vmem:[%s3031 + $0x34] sm:$0xf]
      %v3046 = vld [vmem:[%s3031 + $0x38] sm:$0xf]
      %v3047 = vld [vmem:[%s3031 + $0x3c] sm:$0xf]
      %v3048 = vld [vmem:[%s3031 + $0x40] sm:$0xf]
      %v3049 = vld [vmem:[%s3031 + $0x44] sm:$0xf]
      %v3050 = vld [vmem:[%s3031 + $0x48] sm:$0xf]
      %v3051 = vld [vmem:[%s3031 + $0x4c] sm:$0xf]
      %v3052 = vld [vmem:[%s3031 + $0x50] sm:$0xf]
      %v3053 = vld [vmem:[%s3031 + $0x54] sm:$0xf]
      %v3054 = vld [vmem:[%s3031 + $0x58] sm:$0xf]
      %v3055 = vld [vmem:[%s3031 + $0x5c] sm:$0xf]
      %v3056 = vld [vmem:[%s3031 + $0x60] sm:$0xf]
      %v3057 = vld [vmem:[%s3031 + $0x64] sm:$0xf]
      %v3058 = vld [vmem:[%s3031 + $0x68] sm:$0xf]
      %v3059 = vld [vmem:[%s3031 + $0x6c] sm:$0xf]
      %v3060 = vld [vmem:[%s3031 + $0x70] sm:$0xf]
      %v3061 = vld [vmem:[%s3031 + $0x74] sm:$0xf]
      %v3062 = vld [vmem:[%s3031 + $0x78] sm:$0xf]
      %v3063 = vld [vmem:[%s3031 + $0x7c] sm:$0xf]
      %v3064 = vld [vmem:[%s3031 + $0x80] sm:$0xf]
      %v3065 = vld [vmem:[%s3031 + $0x84] sm:$0xf]
      %v3066 = vld [vmem:[%s3031 + $0x88] sm:$0xf]
      %v3067 = vld [vmem:[%s3031 + $0x8c] sm:$0xf]
      %v3068 = vld [vmem:[%s3031 + $0x90] sm:$0xf]
      %v3069 = vld [vmem:[%s3031 + $0x94] sm:$0xf]
      %v3070 = vld [vmem:[%s3031 + $0x98] sm:$0xf]
      %v3071 = vld [vmem:[%s3031 + $0x9c] sm:$0xf]
      %v3072 = vld [vmem:[%s3031 + $0xa0] sm:$0xf]
      %v3073 = vld [vmem:[%s3031 + $0xa4] sm:$0xf]
      %v3074 = vld [vmem:[%s3031 + $0xa8] sm:$0xf]
      %v3075 = vld [vmem:[%s3031 + $0xac] sm:$0xf]
      %v3076 = vld [vmem:[%s3031 + $0xb0] sm:$0xf]
      %v3077 = vld [vmem:[%s3031 + $0xb4] sm:$0xf]
      %v3078 = vld [vmem:[%s3031 + $0xb8] sm:$0xf]
      %v3079 = vld [vmem:[%s3031 + $0xbc] sm:$0xf]
      %v3080 = vld [vmem:[%s3031 + $0xc0] sm:$0xf]
      %v3081 = vld [vmem:[%s3031 + $0xc4] sm:$0xf]
      %v3082 = vld [vmem:[%s3031 + $0xc8] sm:$0xf]
      %v3083 = vld [vmem:[%s3031 + $0xcc] sm:$0xf]
      %v3084 = vld [vmem:[%s3031 + $0xd0] sm:$0xf]
      %v3085 = vld [vmem:[%s3031 + $0xd4] sm:$0xf]
      %v3086 = vld [vmem:[%s3031 + $0xd8] sm:$0xf]
      %v3087 = vld [vmem:[%s3031 + $0xdc] sm:$0xf]
      %v3088 = vld [vmem:[%s3031 + $0xe0] sm:$0xf]
      %v3089 = vld [vmem:[%s3031 + $0xe4] sm:$0xf]
      %v3090 = vld [vmem:[%s3031 + $0xe8] sm:$0xf]
      %v3091 = vld [vmem:[%s3031 + $0xec] sm:$0xf]
      %v3092 = vld [vmem:[%s3031 + $0xf0] sm:$0xf]
      %v3093 = vld [vmem:[%s3031 + $0xf4] sm:$0xf]
      %v3094 = vld [vmem:[%s3031 + $0xf8] sm:$0xf]
      %v3095 = vld [vmem:[%s3031 + $0xfc] sm:$0xf]
      %v3096 = vld [vmem:[%s3031 + $0x100] sm:$0xf]
      %v3097 = vld [vmem:[%s3031 + $0x104] sm:$0xf]
      %v3098 = vld [vmem:[%s3031 + $0x108] sm:$0xf]
      %v3099 = vld [vmem:[%s3031 + $0x10c] sm:$0xf]
      %v3125 = vrot.slane %v2519, 4
      %v3126 = vrot.slane %v2524, 4
      %v3127 = vsel %vm1244, %v3125, %v3126
      %v3128 = vrot.slane %v2520, 4
      %v3129 = vrot.slane %v2525, 4
      %v3130 = vsel %vm1244, %v3128, %v3129
      %v3131 = vrot.slane %v2521, 4
      %v3132 = vrot.slane %v2526, 4
      %v3133 = vsel %vm1244, %v3131, %v3132
      %v3134 = vrot.slane %v2522, 4
      %v3135 = vrot.slane %v2527, 4
      %v3136 = vsel %vm1244, %v3134, %v3135
      %v3137 = vrot.slane %v2523, 4
      %v3138 = vrot.slane %v2528, 4
      %v3139 = vsel %vm1244, %v3137, %v3138
      %v3140 = vrot.slane %v2529, 4
      %v3141 = vsel %vm1244, %v3126, %v3140
      %v3142 = vrot.slane %v2530, 4
      %v3143 = vsel %vm1244, %v3129, %v3142
      %v3144 = vrot.slane %v2531, 4
      %v3145 = vsel %vm1244, %v3132, %v3144
      %v3146 = vrot.slane %v2532, 4
      %v3147 = vsel %vm1244, %v3135, %v3146
      %v3148 = vrot.slane %v2533, 4
      %v3149 = vsel %vm1244, %v3138, %v3148
      %v3150 = vrot.slane %v2534, 4
      %v3151 = vsel %vm1244, %v3140, %v3150
      %v3152 = vrot.slane %v2535, 4
      %v3153 = vsel %vm1244, %v3142, %v3152
      %v3154 = vrot.slane %v2536, 4
      %v3155 = vsel %vm1244, %v3144, %v3154
      %v3156 = vrot.slane %v2537, 4
      %v3157 = vsel %vm1244, %v3146, %v3156
      %v3158 = vrot.slane %v2538, 4
      %v3159 = vsel %vm1244, %v3148, %v3158
      %v3160 = vrot.slane %v2539, 4
      %v3161 = vsel %vm1244, %v3150, %v3160
      %v3162 = vrot.slane %v2540, 4
      %v3163 = vsel %vm1244, %v3152, %v3162
      %v3164 = vrot.slane %v2541, 4
      %v3165 = vsel %vm1244, %v3154, %v3164
      %v3166 = vrot.slane %v2542, 4
      %v3167 = vsel %vm1244, %v3156, %v3166
      %v3168 = vrot.slane %v2543, 4
      %v3169 = vsel %vm1244, %v3158, %v3168
      %v3254 = vunpack.c.l.b16 %v3032
      %v3255 = vunpack.c.l.b16 %v3033
      %v3256 = vunpack.c.l.b16 %v3034
      %v3257 = vunpack.c.l.b16 %v3035
      %v3258 = vunpack.c.l.b16 %v3036
      %v3259 = vunpack.c.l.b16 %v3037
      %v3260 = vunpack.c.l.b16 %v3038
      %v3261 = vunpack.c.l.b16 %v3039
      %v3262 = vunpack.c.l.b16 %v3040
      %v3263 = vunpack.c.l.b16 %v3041
      %v3264 = vunpack.c.l.b16 %v3042
      %v3265 = vunpack.c.l.b16 %v3043
      %v3266 = vunpack.c.l.b16 %v3044
      %v3267 = vunpack.c.l.b16 %v3045
      %v3268 = vunpack.c.l.b16 %v3046
      %v3269 = vunpack.c.l.b16 %v3047
      %v3270 = vunpack.c.l.b16 %v3048
      %v3271 = vunpack.c.l.b16 %v3049
      %v3272 = vunpack.c.l.b16 %v3050
      %v3273 = vunpack.c.l.b16 %v3051
      %v3274 = vunpack.c.l.b16 %v3052
      %v3275 = vunpack.c.l.b16 %v3053
      %v3276 = vunpack.c.l.b16 %v3054
      %v3277 = vunpack.c.l.b16 %v3055
      %v3278 = vunpack.c.l.b16 %v3056
      %v3279 = vunpack.c.l.b16 %v3057
      %v3280 = vunpack.c.l.b16 %v3058
      %v3281 = vunpack.c.l.b16 %v3059
      %v3282 = vunpack.c.l.b16 %v3060
      %v3283 = vunpack.c.l.b16 %v3061
      %v3284 = vunpack.c.l.b16 %v3062
      %v3285 = vunpack.c.l.b16 %v3063
      %v3286 = vunpack.c.l.b16 %v3064
      %v3287 = vunpack.c.l.b16 %v3065
      %v3288 = vunpack.c.l.b16 %v3066
      %v3289 = vunpack.c.l.b16 %v3067
      %v3290 = vunpack.c.l.b16 %v3068
      %v3291 = vunpack.c.l.b16 %v3069
      %v3292 = vunpack.c.l.b16 %v3070
      %v3293 = vunpack.c.l.b16 %v3071
      %v3294 = vunpack.c.l.b16 %v3072
      %v3295 = vunpack.c.l.b16 %v3073
      %v3296 = vunpack.c.l.b16 %v3074
      %v3297 = vunpack.c.l.b16 %v3075
      %v3298 = vunpack.c.l.b16 %v3076
      %v3299 = vunpack.c.l.b16 %v3077
      %v3300 = vunpack.c.l.b16 %v3078
      %v3301 = vunpack.c.l.b16 %v3079
      %v3302 = vunpack.c.l.b16 %v3080
      %v3303 = vunpack.c.l.b16 %v3081
      %v3304 = vunpack.c.l.b16 %v3082
      %v3305 = vunpack.c.l.b16 %v3083
      %v3306 = vunpack.c.l.b16 %v3084
      %v3307 = vunpack.c.l.b16 %v3085
      %v3308 = vunpack.c.l.b16 %v3086
      %v3309 = vunpack.c.l.b16 %v3087
      %v3310 = vunpack.c.l.b16 %v3088
      %v3311 = vunpack.c.l.b16 %v3089
      %v3312 = vunpack.c.l.b16 %v3090
      %v3313 = vunpack.c.l.b16 %v3091
      %v3314 = vunpack.c.l.b16 %v3092
      %v3315 = vunpack.c.l.b16 %v3093
      %v3316 = vunpack.c.l.b16 %v3094
      %v3317 = vunpack.c.l.b16 %v3095
      %v3318 = vunpack.c.l.b16 %v3096
      %v3319 = vunpack.c.l.b16 %v3097
      %v3320 = vunpack.c.l.b16 %v3098
      %v3321 = vunpack.c.l.b16 %v3099
      %v3322 = vpack.c.b16 %v3255, %v3254
      %v3323 = vpack.c.b16 %v3257, %v3256
      %v3324 = vpack.c.b16 %v3259, %v3258
      %v3325 = vpack.c.b16 %v3261, %v3260
      %v3326 = vpack.c.b16 %v3263, %v3262
      %v3327 = vpack.c.b16 %v3265, %v3264
      %v3328 = vpack.c.b16 %v3267, %v3266
      %v3329 = vpack.c.b16 %v3269, %v3268
      %v3330 = vpack.c.b16 %v3271, %v3270
      %v3331 = vpack.c.b16 %v3273, %v3272
      %v3332 = vpack.c.b16 %v3275, %v3274
      %v3333 = vpack.c.b16 %v3277, %v3276
      %v3334 = vpack.c.b16 %v3279, %v3278
      %v3335 = vpack.c.b16 %v3281, %v3280
      %v3336 = vpack.c.b16 %v3283, %v3282
      %v3337 = vpack.c.b16 %v3285, %v3284
      %v3338 = vpack.c.b16 %v3287, %v3286
      %v3339 = vpack.c.b16 %v3289, %v3288
      %v3340 = vpack.c.b16 %v3291, %v3290
      %v3341 = vpack.c.b16 %v3293, %v3292
      %v3342 = vpack.c.b16 %v3295, %v3294
      %v3343 = vpack.c.b16 %v3297, %v3296
      %v3344 = vpack.c.b16 %v3299, %v3298
      %v3345 = vpack.c.b16 %v3301, %v3300
      %v3346 = vpack.c.b16 %v3303, %v3302
      %v3347 = vpack.c.b16 %v3305, %v3304
      %v3348 = vpack.c.b16 %v3307, %v3306
      %v3349 = vpack.c.b16 %v3309, %v3308
      %v3350 = vpack.c.b16 %v3311, %v3310
      %v3351 = vpack.c.b16 %v3313, %v3312
      %v3352 = vpack.c.b16 %v3315, %v3314
      %v3353 = vpack.c.b16 %v3317, %v3316
      %v3354 = vpack.c.b16 %v3319, %v3318
      %v3355 = vpack.c.b16 %v3321, %v3320
      %v3391 = vsel %vm1510, %v3139, 0
      %v3394 = vsel %vm1510, %v3149, 0
      %v3397 = vsel %vm1510, %v3159, 0
      %v3400 = vsel %vm1510, %v3169, 0
      %3402 = vmatprep.subr.bf16.mxu0 0
      %3403 = vmatpush1.bf16.msra.mxu0 %v3322
      %3404 = vmatprep.subr.bf16.mxu0 0
      %3405 = vmatpush1.bf16.msra.mxu0 %v3323
      %3406 = vmatprep.subr.bf16.mxu0 0
      %3407 = vmatpush1.bf16.msra.mxu0 %v3324
      %3408 = vmatprep.subr.bf16.mxu0 0
      %3409 = vmatpush1.bf16.msra.mxu0 %v3325
      %3410 = vmatprep.subr.bf16.mxu0 0
      %3411 = vmatpush1.bf16.msra.mxu0 %v3326
      %3412 = vmatprep.subr.bf16.mxu0 0
      %3413 = vmatpush1.bf16.msra.mxu0 %v3327
      %3414 = vmatprep.subr.bf16.mxu0 0
      %3415 = vmatpush1.bf16.msra.mxu0 %v3328
      %3416 = vmatprep.subr.bf16.mxu0 0
      %3417 = vmatpush1.bf16.msra.mxu0 %v3329
      %3418 = vmatprep.subr.bf16.mxu0 0
      %3419 = vmatpush1.bf16.msra.mxu0 %v3330
      %3420 = vmatprep.subr.bf16.mxu0 0
      %3421 = vmatpush1.bf16.msra.mxu0 %v3331
      %3422 = vmatprep.subr.bf16.mxu0 0
      %3423 = vmatpush1.bf16.msra.mxu0 %v3332
      %3424 = vmatprep.subr.bf16.mxu0 0
      %3425 = vmatpush1.bf16.msra.mxu0 %v3333
      %3426 = vmatprep.subr.bf16.mxu0 0
      %3427 = vmatpush1.bf16.msra.mxu0 %v3334
      %3428 = vmatprep.subr.bf16.mxu0 0
      %3429 = vmatpush1.bf16.msra.mxu0 %v3335
      %3430 = vmatprep.subr.bf16.mxu0 0
      %3431 = vmatpush1.bf16.msra.mxu0 %v3336
      %3432 = vmatprep.subr.bf16.mxu0 0
      %3433 = vmatpush1.bf16.msra.mxu0 %v3337
      %3434 = vmatprep.mubr.bf16.mxu0 %v3130
      %3435 = vmatmul.mubr.bf16.gmra.mrb[0].mxu0 %v3127
      %v3436 = vpop.f32.mrb[0].mxu0
      %v3437 = vadd.f32 0.0, %v3436
      %v3438 = vpop.f32.mrb[0].mxu0
      %v3439 = vpop.f32.mrb[0].mxu0
      %v3440 = vadd.f32 0.0, %v3439
      %v3441 = vpop.f32.mrb[0].mxu0
      %3442 = vmatprep.mubr.bf16.mxu0 %v3143
      %3443 = vmatmul.mubr.bf16.gmra.mrb[0].mxu0 %v3141
      %v3444 = vpop.f32.mrb[0].mxu0
      %v3445 = vadd.f32 0.0, %v3444
      %v3446 = vpop.f32.mrb[0].mxu0
      %v3447 = vpop.f32.mrb[0].mxu0
      %v3448 = vadd.f32 0.0, %v3447
      %v3449 = vpop.f32.mrb[0].mxu0
      %3450 = vmatprep.mubr.bf16.mxu0 %v3153
      %3451 = vmatmul.mubr.bf16.gmra.mrb[0].mxu0 %v3151
      %v3452 = vpop.f32.mrb[0].mxu0
      %v3453 = vadd.f32 0.0, %v3452
      %v3454 = vpop.f32.mrb[0].mxu0
      %v3455 = vpop.f32.mrb[0].mxu0
      %v3456 = vadd.f32 0.0, %v3455
      %v3457 = vpop.f32.mrb[0].mxu0
      %3458 = vmatprep.mubr.bf16.mxu0 %v3163
      %3459 = vmatmul.mubr.bf16.gmra.mrb[0].mxu0 %v3161
      %v3460 = vpop.f32.mrb[0].mxu0
      %v3461 = vadd.f32 0.0, %v3460
      %v3462 = vpop.f32.mrb[0].mxu0
      %v3463 = vpop.f32.mrb[0].mxu0
      %v3464 = vadd.f32 0.0, %v3463
      %v3465 = vpop.f32.mrb[0].mxu0
      %3466 = vdwg.mxu0
      %3467 = vmatprep.subr.bf16.mxu0 0
      %3468 = vmatpush1.bf16.msra.mxu0 %v3338
      %3469 = vmatprep.subr.bf16.mxu0 0
      %3470 = vmatpush1.bf16.msra.mxu0 %v3339
      %3471 = vmatprep.subr.bf16.mxu0 0
      %3472 = vmatpush1.bf16.msra.mxu0 %v3340
      %3473 = vmatprep.subr.bf16.mxu0 0
      %3474 = vmatpush1.bf16.msra.mxu0 %v3341
      %3475 = vmatprep.subr.bf16.mxu0 0
      %3476 = vmatpush1.bf16.msra.mxu0 %v3342
      %3477 = vmatprep.subr.bf16.mxu0 0
      %3478 = vmatpush1.bf16.msra.mxu0 %v3343
      %3479 = vmatprep.subr.bf16.mxu0 0
      %3480 = vmatpush1.bf16.msra.mxu0 %v3344
      %3481 = vmatprep.subr.bf16.mxu0 0
      %3482 = vmatpush1.bf16.msra.mxu0 %v3345
      %3483 = vmatprep.subr.bf16.mxu0 0
      %3484 = vmatpush1.bf16.msra.mxu0 %v3346
      %3485 = vmatprep.subr.bf16.mxu0 0
      %3486 = vmatpush1.bf16.msra.mxu0 %v3347
      %3487 = vmatprep.subr.bf16.mxu0 0
      %3488 = vmatpush1.bf16.msra.mxu0 %v3348
      %3489 = vmatprep.subr.bf16.mxu0 0
      %3490 = vmatpush1.bf16.msra.mxu0 %v3349
      %3491 = vmatprep.subr.bf16.mxu0 0
      %3492 = vmatpush1.bf16.msra.mxu0 %v3350
      %3493 = vmatprep.subr.bf16.mxu0 0
      %3494 = vmatpush1.bf16.msra.mxu0 %v3351
      %3495 = vmatprep.subr.bf16.mxu0 0
      %3496 = vmatpush1.bf16.msra.mxu0 %v3352
      %3497 = vmatprep.subr.bf16.mxu0 0
      %3498 = vmatpush1.bf16.msra.mxu0 %v3353
      %3499 = vmatprep.mubr.bf16.mxu0 %v3136
      %3500 = vmatmul.mubr.bf16.gmra.mrb[0].mxu0 %v3133
      %v3501 = vpop.f32.mrb[0].mxu0
      %v3502 = vadd.f32 %v3437, %v3501
      %v3503 = vpop.f32.mrb[0].mxu0
      %v3504 = vpop.f32.mrb[0].mxu0
      %v3505 = vadd.f32 %v3440, %v3504
      %v3506 = vpop.f32.mrb[0].mxu0
      %3507 = vmatprep.mubr.bf16.mxu0 %v3147
      %3508 = vmatmul.mubr.bf16.gmra.mrb[0].mxu0 %v3145
      %v3509 = vpop.f32.mrb[0].mxu0
      %v3510 = vadd.f32 %v3445, %v3509
      %v3511 = vpop.f32.mrb[0].mxu0
      %v3512 = vpop.f32.mrb[0].mxu0
      %v3513 = vadd.f32 %v3448, %v3512
      %v3514 = vpop.f32.mrb[0].mxu0
      %3515 = vmatprep.mubr.bf16.mxu0 %v3157
      %3516 = vmatmul.mubr.bf16.gmra.mrb[0].mxu0 %v3155
      %v3517 = vpop.f32.mrb[0].mxu0
      %v3518 = vadd.f32 %v3453, %v3517
      %v3519 = vpop.f32.mrb[0].mxu0
      %v3520 = vpop.f32.mrb[0].mxu0
      %v3521 = vadd.f32 %v3456, %v3520
      %v3522 = vpop.f32.mrb[0].mxu0
      %3523 = vmatprep.mubr.bf16.mxu0 %v3167
      %3524 = vmatmul.mubr.bf16.gmra.mrb[0].mxu0 %v3165
      %v3525 = vpop.f32.mrb[0].mxu0
      %v3526 = vadd.f32 %v3461, %v3525
      %v3527 = vpop.f32.mrb[0].mxu0
      %v3528 = vpop.f32.mrb[0].mxu0
      %v3529 = vadd.f32 %v3464, %v3528
      %v3530 = vpop.f32.mrb[0].mxu0
      %3531 = vdwg.mxu0
      %3532 = vmatprep.subr.bf16.mxu0 0
      %3533 = vmatpush1.bf16.msra.mxu0 %v3354
      %3534 = vmatprep.subr.bf16.mxu0 0
      %3535 = vmatpush1.bf16.msra.mxu0 %v3355
      %3536 = vmatprep.subr.bf16.mxu0 0
      %3537 = vmatpush1.bf16.msra.mxu0 0
      %3538 = vmatprep.subr.bf16.mxu0 0
      %3539 = vmatpush1.bf16.msra.mxu0 0
      %3540 = vmatprep.subr.bf16.mxu0 0
      %3541 = vmatpush1.bf16.msra.mxu0 0
      %3542 = vmatprep.subr.bf16.mxu0 0
      %3543 = vmatpush1.bf16.msra.mxu0 0
      %3544 = vmatprep.subr.bf16.mxu0 0
      %3545 = vmatpush1.bf16.msra.mxu0 0
      %3546 = vmatprep.subr.bf16.mxu0 0
      %3547 = vmatpush1.bf16.msra.mxu0 0
      %3548 = vmatprep.subr.bf16.mxu0 0
      %3549 = vmatpush1.bf16.msra.mxu0 0
      %3550 = vmatprep.subr.bf16.mxu0 0
      %3551 = vmatpush1.bf16.msra.mxu0 0
      %3552 = vmatprep.subr.bf16.mxu0 0
      %3553 = vmatpush1.bf16.msra.mxu0 0
      %3554 = vmatprep.subr.bf16.mxu0 0
      %3555 = vmatpush1.bf16.msra.mxu0 0
      %3556 = vmatprep.subr.bf16.mxu0 0
      %3557 = vmatpush1.bf16.msra.mxu0 0
      %3558 = vmatprep.subr.bf16.mxu0 0
      %3559 = vmatpush1.bf16.msra.mxu0 0
      %3560 = vmatprep.subr.bf16.mxu0 0
      %3561 = vmatpush1.bf16.msra.mxu0 0
      %3562 = vmatprep.subr.bf16.mxu0 0
      %3563 = vmatpush1.bf16.msra.mxu0 0
      %3564 = vmatprep.mubr.bf16.mxu0 0
      %3565 = vmatmul.mubr.bf16.gmra.mrb[0].mxu0 %v3391
      %v3566 = vpop.f32.mrb[0].mxu0
      %v3567 = vadd.f32 %v3502, %v3566
      %v3568 = vpop.f32.mrb[0].mxu0
      %v3569 = vpop.f32.mrb[0].mxu0
      %v3570 = vadd.f32 %v3505, %v3569
      %v3571 = vpop.f32.mrb[0].mxu0
      %3572 = vmatprep.mubr.bf16.mxu0 0
      %3573 = vmatmul.mubr.bf16.gmra.mrb[0].mxu0 %v3394
      %v3574 = vpop.f32.mrb[0].mxu0
      %v3575 = vadd.f32 %v3510, %v3574
      %v3576 = vpop.f32.mrb[0].mxu0
      %v3577 = vpop.f32.mrb[0].mxu0
      %v3578 = vadd.f32 %v3513, %v3577
      %v3579 = vpop.f32.mrb[0].mxu0
      %3580 = vmatprep.mubr.bf16.mxu0 0
      %3581 = vmatmul.mubr.bf16.gmra.mrb[0].mxu0 %v3397
      %v3582 = vpop.f32.mrb[0].mxu0
      %v3583 = vadd.f32 %v3518, %v3582
      %v3584 = vpop.f32.mrb[0].mxu0
      %v3585 = vpop.f32.mrb[0].mxu0
      %v3586 = vadd.f32 %v3521, %v3585
      %v3587 = vpop.f32.mrb[0].mxu0
      %3588 = vmatprep.mubr.bf16.mxu0 0
      %3589 = vmatmul.mubr.bf16.gmra.mrb[0].mxu0 %v3400
      %v3590 = vpop.f32.mrb[0].mxu0
      %v3591 = vadd.f32 %v3526, %v3590
      %v3592 = vpop.f32.mrb[0].mxu0
      %v3593 = vpop.f32.mrb[0].mxu0
      %v3594 = vadd.f32 %v3529, %v3593
      %v3595 = vpop.f32.mrb[0].mxu0
      %3596 = vdwg.mxu0
      %v3597 = vadd.f32 %v3023, %v3567
      %v3598 = vadd.f32 %v3024, %v3570
      %v3599 = vadd.f32 %v3025, %v3575
      %v3600 = vadd.f32 %v3026, %v3578
      %v3601 = vadd.f32 %v3027, %v3583
      %v3602 = vadd.f32 %v3028, %v3586
      %v3603 = vadd.f32 %v3029, %v3591
      %v3604 = vadd.f32 %v3030, %v3594
      %v3605 = vmul.f32 %v3597, 0.2
      %v3606 = vmul.f32 %v3598, 0.2
      %v3607 = vmul.f32 %v3599, 0.2
      %v3608 = vmul.f32 %v3600, 0.2
      %v3609 = vmul.f32 %v3601, 0.2
      %v3610 = vmul.f32 %v3602, 0.2
      %v3611 = vmul.f32 %v3603, 0.2
      %v3612 = vmul.f32 %v3604, 0.2
      %v3613 = vmax.f32 %v3597, %v3605
      %v3614 = vmax.f32 %v3598, %v3606
      %v3615 = vmax.f32 %v3599, %v3607
      %v3616 = vmax.f32 %v3600, %v3608
      %v3617 = vmax.f32 %v3601, %v3609
      %v3618 = vmax.f32 %v3602, %v3610
      %v3619 = vmax.f32 %v3603, %v3611
      %v3620 = vmax.f32 %v3604, %v3612
      %v3621 = vpack.c.bf16 %v3614, %v3613
      %v3622 = vpack.c.bf16 %v3616, %v3615
      %v3623 = vpack.c.bf16 %v3618, %v3617
      %v3624 = vpack.c.bf16 %v3620, %v3619
      %v3626 = vrot.slane %v3621, 4
      %v3629 = vrot.slane %v3622, 4
      %v3632 = vrot.slane %v3623, 4
      %v3635 = vrot.slane %v3624, 4
      %v3637 = vld [vmem:[%s4] sm:$0xff]
      %v3638 = vld [vmem:[%s4 + $0x8] sm:$0xff]
      %v3639 = vld [vmem:[%s4 + $0x10] sm:$0xff]
      %v3640 = vld [vmem:[%s4 + $0x18] sm:$0xff]
      %v3641 = vld [vmem:[%s4 + $0x20] sm:$0xff]
      %v3642 = vld [vmem:[%s4 + $0x28] sm:$0xff]
      %v3643 = vld [vmem:[%s4 + $0x30] sm:$0xff]
      %v3644 = vld [vmem:[%s4 + $0x38] sm:$0xff]
      %v3645 = vld [vmem:[%s4 + $0x40] sm:$0xff]
      %v3646 = vld [vmem:[%s4 + $0x48] sm:$0xff]
      %v3647 = vld [vmem:[%s4 + $0x50] sm:$0xff]
      %v3648 = vld [vmem:[%s4 + $0x58] sm:$0xff]
      %v3649 = vld [vmem:[%s4 + $0x60] sm:$0xff]
      %v3650 = vld [vmem:[%s4 + $0x68] sm:$0xff]
      %v3651 = vld [vmem:[%s4 + $0x70] sm:$0xff]
      %v3652 = vld [vmem:[%s4 + $0x78] sm:$0xff]
      %v3653 = vld [vmem:[%s4 + $0x80] sm:$0xff]
      %v3654 = vld [vmem:[%s4 + $0x88] sm:$0xff]
      %v3655 = vld [vmem:[%s4 + $0x90] sm:$0xff]
      %v3656 = vld [vmem:[%s4 + $0x98] sm:$0xff]
      %v3657 = vld [vmem:[%s4 + $0xa0] sm:$0xff]
      %v3658 = vld [vmem:[%s4 + $0xa8] sm:$0xff]
      %v3659 = vld [vmem:[%s4 + $0xb0] sm:$0xff]
      %v3660 = vld [vmem:[%s4 + $0xb8] sm:$0xff]
      %v3661 = vld [vmem:[%s4 + $0xc0] sm:$0xff]
      %v3662 = vld [vmem:[%s4 + $0xc8] sm:$0xff]
      %v3663 = vld [vmem:[%s4 + $0xd0] sm:$0xff]
      %v3664 = vld [vmem:[%s4 + $0xd8] sm:$0xff]
      %v3665 = vld [vmem:[%s4 + $0xe0] sm:$0xff]
      %v3666 = vld [vmem:[%s4 + $0xe8] sm:$0xff]
      %v3667 = vld [vmem:[%s4 + $0xf0] sm:$0xff]
      %v3668 = vld [vmem:[%s4 + $0xf8] sm:$0xff]
      %v3669 = vld [vmem:[%s4 + $0x100] sm:$0xff]
      %v3670 = vld [vmem:[%s4 + $0x108] sm:$0xff]
      %v3671 = vld [vmem:[%s4 + $0x110] sm:$0xff]
      %v3672 = vld [vmem:[%s4 + $0x118] sm:$0xff]
      %v3673 = vld [vmem:[%s4 + $0x120] sm:$0xff]
      %v3674 = vld [vmem:[%s4 + $0x128] sm:$0xff]
      %v3675 = vld [vmem:[%s4 + $0x130] sm:$0xff]
      %v3676 = vld [vmem:[%s4 + $0x138] sm:$0xff]
      %v3677 = vld [vmem:[%s4 + $0x140] sm:$0xff]
      %v3678 = vld [vmem:[%s4 + $0x148] sm:$0xff]
      %v3679 = vld [vmem:[%s4 + $0x150] sm:$0xff]
      %v3680 = vld [vmem:[%s4 + $0x158] sm:$0xff]
      %v3681 = vld [vmem:[%s4 + $0x160] sm:$0xff]
      %v3682 = vld [vmem:[%s4 + $0x168] sm:$0xff]
      %v3683 = vld [vmem:[%s4 + $0x170] sm:$0xff]
      %v3684 = vld [vmem:[%s4 + $0x178] sm:$0xff]
      %v3685 = vld [vmem:[%s4 + $0x180] sm:$0xff]
      %v3686 = vld [vmem:[%s4 + $0x188] sm:$0xff]
      %v3687 = vld [vmem:[%s4 + $0x190] sm:$0xff]
      %v3688 = vld [vmem:[%s4 + $0x198] sm:$0xff]
      %v3689 = vld [vmem:[%s4 + $0x1a0] sm:$0xff]
      %v3690 = vld [vmem:[%s4 + $0x1a8] sm:$0xff]
      %v3691 = vld [vmem:[%s4 + $0x1b0] sm:$0xff]
      %v3692 = vld [vmem:[%s4 + $0x1b8] sm:$0xff]
      %v3693 = vld [vmem:[%s4 + $0x1c0] sm:$0xff]
      %v3694 = vld [vmem:[%s4 + $0x1c8] sm:$0xff]
      %v3695 = vld [vmem:[%s4 + $0x1d0] sm:$0xff]
      %v3696 = vld [vmem:[%s4 + $0x1d8] sm:$0xff]
      %v3697 = vld [vmem:[%s4 + $0x1e0] sm:$0xff]
      %v3698 = vld [vmem:[%s4 + $0x1e8] sm:$0xff]
      %v3699 = vld [vmem:[%s4 + $0x1f0] sm:$0xff]
      %v3700 = vld [vmem:[%s4 + $0x1f8] sm:$0xff]
      %v3701 = vld [vmem:[%s4 + $0x200] sm:$0xff]
      %v3702 = vld [vmem:[%s4 + $0x208] sm:$0xff]
      %v3703 = vld [vmem:[%s4 + $0x210] sm:$0xff]
      %v3704 = vld [vmem:[%s4 + $0x218] sm:$0xff]
      %v3705 = vld [vmem:[%s4 + $0x220] sm:$0xff]
      %v3706 = vld [vmem:[%s4 + $0x228] sm:$0xff]
      %v3707 = vld [vmem:[%s4 + $0x230] sm:$0xff]
      %v3708 = vld [vmem:[%s4 + $0x238] sm:$0xff]
      %v3709 = vld [vmem:[%s4 + $0x240] sm:$0xff]
      %v3710 = vld [vmem:[%s4 + $0x248] sm:$0xff]
      %v3711 = vld [vmem:[%s4 + $0x250] sm:$0xff]
      %v3712 = vld [vmem:[%s4 + $0x258] sm:$0xff]
      %v3713 = vld [vmem:[%s4 + $0x260] sm:$0xff]
      %v3714 = vld [vmem:[%s4 + $0x268] sm:$0xff]
      %v3715 = vld [vmem:[%s4 + $0x270] sm:$0xff]
      %v3716 = vld [vmem:[%s4 + $0x278] sm:$0xff]
      %v3717 = vld [vmem:[%s4 + $0x280] sm:$0xff]
      %v3718 = vld [vmem:[%s4 + $0x288] sm:$0xff]
      %v3719 = vld [vmem:[%s4 + $0x290] sm:$0xff]
      %v3720 = vld [vmem:[%s4 + $0x298] sm:$0xff]
      %v3721 = vld [vmem:[%s4 + $0x2a0] sm:$0xff]
      %v3722 = vld [vmem:[%s4 + $0x2a8] sm:$0xff]
      %v3723 = vld [vmem:[%s4 + $0x2b0] sm:$0xff]
      %v3724 = vld [vmem:[%s4 + $0x2b8] sm:$0xff]
      %v3725 = vld [vmem:[%s4 + $0x2c0] sm:$0xff]
      %v3726 = vld [vmem:[%s4 + $0x2c8] sm:$0xff]
      %v3727 = vld [vmem:[%s4 + $0x2d0] sm:$0xff]
      %v3728 = vld [vmem:[%s4 + $0x2d8] sm:$0xff]
      %v3729 = vld [vmem:[%s4 + $0x2e0] sm:$0xff]
      %v3730 = vld [vmem:[%s4 + $0x2e8] sm:$0xff]
      %v3731 = vld [vmem:[%s4 + $0x2f0] sm:$0xff]
      %v3732 = vld [vmem:[%s4 + $0x2f8] sm:$0xff]
      %v3733 = vld [vmem:[%s4 + $0x300] sm:$0xff]
      %v3734 = vld [vmem:[%s4 + $0x308] sm:$0xff]
      %v3735 = vld [vmem:[%s4 + $0x310] sm:$0xff]
      %v3736 = vld [vmem:[%s4 + $0x318] sm:$0xff]
      %v3737 = vld [vmem:[%s4 + $0x320] sm:$0xff]
      %v3738 = vld [vmem:[%s4 + $0x328] sm:$0xff]
      %v3739 = vld [vmem:[%s4 + $0x330] sm:$0xff]
      %v3740 = vld [vmem:[%s4 + $0x338] sm:$0xff]
      %v3741 = vld [vmem:[%s4 + $0x340] sm:$0xff]
      %v3742 = vld [vmem:[%s4 + $0x348] sm:$0xff]
      %v3743 = vld [vmem:[%s4 + $0x350] sm:$0xff]
      %v3744 = vld [vmem:[%s4 + $0x358] sm:$0xff]
      %v3745 = vld [vmem:[%s4 + $0x360] sm:$0xff]
      %v3746 = vld [vmem:[%s4 + $0x368] sm:$0xff]
      %v3747 = vld [vmem:[%s4 + $0x370] sm:$0xff]
      %v3748 = vld [vmem:[%s4 + $0x378] sm:$0xff]
      %v3749 = vld [vmem:[%s4 + $0x380] sm:$0xff]
      %v3750 = vld [vmem:[%s4 + $0x388] sm:$0xff]
      %v3751 = vld [vmem:[%s4 + $0x390] sm:$0xff]
      %v3752 = vld [vmem:[%s4 + $0x398] sm:$0xff]
      %v3753 = vld [vmem:[%s4 + $0x3a0] sm:$0xff]
      %v3754 = vld [vmem:[%s4 + $0x3a8] sm:$0xff]
      %v3755 = vld [vmem:[%s4 + $0x3b0] sm:$0xff]
      %v3756 = vld [vmem:[%s4 + $0x3b8] sm:$0xff]
      %v3757 = vld [vmem:[%s4 + $0x3c0] sm:$0xff]
      %v3758 = vld [vmem:[%s4 + $0x3c8] sm:$0xff]
      %v3759 = vld [vmem:[%s4 + $0x3d0] sm:$0xff]
      %v3760 = vld [vmem:[%s4 + $0x3d8] sm:$0xff]
      %v3761 = vld [vmem:[%s4 + $0x3e0] sm:$0xff]
      %v3762 = vld [vmem:[%s4 + $0x3e8] sm:$0xff]
      %v3763 = vld [vmem:[%s4 + $0x3f0] sm:$0xff]
      %v3764 = vld [vmem:[%s4 + $0x3f8] sm:$0xff]
      %v3765 = vld [vmem:[%s4 + $0x400] sm:$0xff]
      %v3766 = vld [vmem:[%s4 + $0x408] sm:$0xff]
      %v3767 = vld [vmem:[%s4 + $0x410] sm:$0xff]
      %v3768 = vld [vmem:[%s4 + $0x418] sm:$0xff]
      %v3769 = vld [vmem:[%s4 + $0x420] sm:$0xff]
      %v3770 = vld [vmem:[%s4 + $0x428] sm:$0xff]
      %v3771 = vld [vmem:[%s4 + $0x430] sm:$0xff]
      %v3772 = vld [vmem:[%s4 + $0x438] sm:$0xff]
      %v3773 = vld [vmem:[%s4 + $0x440] sm:$0xff]
      %v3774 = vld [vmem:[%s4 + $0x448] sm:$0xff]
      %v3775 = vld [vmem:[%s4 + $0x450] sm:$0xff]
      %v3776 = vld [vmem:[%s4 + $0x458] sm:$0xff]
      %v3777 = vld [vmem:[%s4 + $0x460] sm:$0xff]
      %v3778 = vld [vmem:[%s4 + $0x468] sm:$0xff]
      %v3779 = vld [vmem:[%s4 + $0x470] sm:$0xff]
      %v3780 = vld [vmem:[%s4 + $0x478] sm:$0xff]
      %v3781 = vld [vmem:[%s4 + $0x480] sm:$0xff]
      %v3782 = vld [vmem:[%s4 + $0x488] sm:$0xff]
      %v3783 = vld [vmem:[%s4 + $0x490] sm:$0xff]
      %v3784 = vld [vmem:[%s4 + $0x498] sm:$0xff]
      %v3785 = vld [vmem:[%s4 + $0x4a0] sm:$0xff]
      %v3786 = vld [vmem:[%s4 + $0x4a8] sm:$0xff]
      %v3787 = vld [vmem:[%s4 + $0x4b0] sm:$0xff]
      %v3788 = vld [vmem:[%s4 + $0x4b8] sm:$0xff]
      %v3789 = vld [vmem:[%s4 + $0x4c0] sm:$0xff]
      %v3790 = vld [vmem:[%s4 + $0x4c8] sm:$0xff]
      %v3791 = vld [vmem:[%s4 + $0x4d0] sm:$0xff]
      %v3792 = vld [vmem:[%s4 + $0x4d8] sm:$0xff]
      %v3793 = vld [vmem:[%s4 + $0x4e0] sm:$0xff]
      %v3794 = vld [vmem:[%s4 + $0x4e8] sm:$0xff]
      %v3795 = vld [vmem:[%s4 + $0x4f0] sm:$0xff]
      %v3796 = vld [vmem:[%s4 + $0x4f8] sm:$0xff]
      %v3797 = vld [vmem:[%s4 + $0x500] sm:$0xff]
      %v3798 = vld [vmem:[%s4 + $0x508] sm:$0xff]
      %v3799 = vld [vmem:[%s4 + $0x510] sm:$0xff]
      %v3800 = vld [vmem:[%s4 + $0x518] sm:$0xff]
      %v3801 = vld [vmem:[%s4 + $0x520] sm:$0xff]
      %v3802 = vld [vmem:[%s4 + $0x528] sm:$0xff]
      %v3803 = vld [vmem:[%s4 + $0x530] sm:$0xff]
      %v3804 = vld [vmem:[%s4 + $0x538] sm:$0xff]
      %v3805 = vld [vmem:[%s4 + $0x540] sm:$0xff]
      %v3806 = vld [vmem:[%s4 + $0x548] sm:$0xff]
      %v3807 = vld [vmem:[%s4 + $0x550] sm:$0xff]
      %v3808 = vld [vmem:[%s4 + $0x558] sm:$0xff]
      %v3809 = vld [vmem:[%s4 + $0x560] sm:$0xff]
      %v3810 = vld [vmem:[%s4 + $0x568] sm:$0xff]
      %v3811 = vld [vmem:[%s4 + $0x570] sm:$0xff]
      %v3812 = vld [vmem:[%s4 + $0x578] sm:$0xff]
      %v3813 = vld [vmem:[%s4 + $0x580] sm:$0xff]
      %v3814 = vld [vmem:[%s4 + $0x588] sm:$0xff]
      %v3815 = vld [vmem:[%s4 + $0x590] sm:$0xff]
      %v3816 = vld [vmem:[%s4 + $0x598] sm:$0xff]
      %v3817 = vld [vmem:[%s4 + $0x5a0] sm:$0xff]
      %v3818 = vld [vmem:[%s4 + $0x5a8] sm:$0xff]
      %v3819 = vld [vmem:[%s4 + $0x5b0] sm:$0xff]
      %v3820 = vld [vmem:[%s4 + $0x5b8] sm:$0xff]
      %v3821 = vld [vmem:[%s4 + $0x5c0] sm:$0xff]
      %v3822 = vld [vmem:[%s4 + $0x5c8] sm:$0xff]
      %v3823 = vld [vmem:[%s4 + $0x5d0] sm:$0xff]
      %v3824 = vld [vmem:[%s4 + $0x5d8] sm:$0xff]
      %v3825 = vld [vmem:[%s4 + $0x5e0] sm:$0xff]
      %v3826 = vld [vmem:[%s4 + $0x5e8] sm:$0xff]
      %v3827 = vld [vmem:[%s4 + $0x5f0] sm:$0xff]
      %v3828 = vld [vmem:[%s4 + $0x5f8] sm:$0xff]
      %v3829 = vld [vmem:[%s4 + $0x600] sm:$0xff]
      %v3830 = vld [vmem:[%s4 + $0x608] sm:$0xff]
      %v3831 = vld [vmem:[%s4 + $0x610] sm:$0xff]
      %v3832 = vld [vmem:[%s4 + $0x618] sm:$0xff]
      %v3833 = vld [vmem:[%s4 + $0x620] sm:$0xff]
      %v3834 = vld [vmem:[%s4 + $0x628] sm:$0xff]
      %v3835 = vld [vmem:[%s4 + $0x630] sm:$0xff]
      %v3836 = vld [vmem:[%s4 + $0x638] sm:$0xff]
      %v3837 = vld [vmem:[%s4 + $0x640] sm:$0xff]
      %v3838 = vld [vmem:[%s4 + $0x648] sm:$0xff]
      %v3839 = vld [vmem:[%s4 + $0x650] sm:$0xff]
      %v3840 = vld [vmem:[%s4 + $0x658] sm:$0xff]
      %v3841 = vld [vmem:[%s4 + $0x660] sm:$0xff]
      %v3842 = vld [vmem:[%s4 + $0x668] sm:$0xff]
      %v3843 = vld [vmem:[%s4 + $0x670] sm:$0xff]
      %v3844 = vld [vmem:[%s4 + $0x678] sm:$0xff]
      %v3845 = vld [vmem:[%s4 + $0x680] sm:$0xff]
      %v3846 = vld [vmem:[%s4 + $0x688] sm:$0xff]
      %v3847 = vld [vmem:[%s4 + $0x690] sm:$0xff]
      %v3848 = vld [vmem:[%s4 + $0x698] sm:$0xff]
      %v3849 = vld [vmem:[%s4 + $0x6a0] sm:$0xff]
      %v3850 = vld [vmem:[%s4 + $0x6a8] sm:$0xff]
      %v3851 = vld [vmem:[%s4 + $0x6b0] sm:$0xff]
      %v3852 = vld [vmem:[%s4 + $0x6b8] sm:$0xff]
      %v3853 = vld [vmem:[%s4 + $0x6c0] sm:$0xff]
      %v3854 = vld [vmem:[%s4 + $0x6c8] sm:$0xff]
      %v3855 = vld [vmem:[%s4 + $0x6d0] sm:$0xff]
      %v3856 = vld [vmem:[%s4 + $0x6d8] sm:$0xff]
      %v3857 = vld [vmem:[%s4 + $0x6e0] sm:$0xff]
      %v3858 = vld [vmem:[%s4 + $0x6e8] sm:$0xff]
      %v3859 = vld [vmem:[%s4 + $0x6f0] sm:$0xff]
      %v3860 = vld [vmem:[%s4 + $0x6f8] sm:$0xff]
      %v3861 = vld [vmem:[%s4 + $0x700] sm:$0xff]
      %v3862 = vld [vmem:[%s4 + $0x708] sm:$0xff]
      %v3863 = vld [vmem:[%s4 + $0x710] sm:$0xff]
      %v3864 = vld [vmem:[%s4 + $0x718] sm:$0xff]
      %v3865 = vld [vmem:[%s4 + $0x720] sm:$0xff]
      %v3866 = vld [vmem:[%s4 + $0x728] sm:$0xff]
      %v3867 = vld [vmem:[%s4 + $0x730] sm:$0xff]
      %v3868 = vld [vmem:[%s4 + $0x738] sm:$0xff]
      %v3869 = vld [vmem:[%s4 + $0x740] sm:$0xff]
      %v3870 = vld [vmem:[%s4 + $0x748] sm:$0xff]
      %v3871 = vld [vmem:[%s4 + $0x750] sm:$0xff]
      %v3872 = vld [vmem:[%s4 + $0x758] sm:$0xff]
      %v3873 = vld [vmem:[%s4 + $0x760] sm:$0xff]
      %v3874 = vld [vmem:[%s4 + $0x768] sm:$0xff]
      %v3875 = vld [vmem:[%s4 + $0x770] sm:$0xff]
      %v3876 = vld [vmem:[%s4 + $0x778] sm:$0xff]
      %v3877 = vld [vmem:[%s4 + $0x780] sm:$0xff]
      %v3878 = vld [vmem:[%s4 + $0x788] sm:$0xff]
      %v3879 = vld [vmem:[%s4 + $0x790] sm:$0xff]
      %v3880 = vld [vmem:[%s4 + $0x798] sm:$0xff]
      %v3881 = vld [vmem:[%s4 + $0x7a0] sm:$0xff]
      %v3882 = vld [vmem:[%s4 + $0x7a8] sm:$0xff]
      %v3883 = vld [vmem:[%s4 + $0x7b0] sm:$0xff]
      %v3884 = vld [vmem:[%s4 + $0x7b8] sm:$0xff]
      %v3885 = vld [vmem:[%s4 + $0x7c0] sm:$0xff]
      %v3886 = vld [vmem:[%s4 + $0x7c8] sm:$0xff]
      %v3887 = vld [vmem:[%s4 + $0x7d0] sm:$0xff]
      %v3888 = vld [vmem:[%s4 + $0x7d8] sm:$0xff]
      %v3889 = vld [vmem:[%s4 + $0x7e0] sm:$0xff]
      %v3890 = vld [vmem:[%s4 + $0x7e8] sm:$0xff]
      %v3891 = vld [vmem:[%s4 + $0x7f0] sm:$0xff]
      %v3892 = vld [vmem:[%s4 + $0x7f8] sm:$0xff]
      %v4149 = vunpack.c.l.b16 %v3637
      %v4150 = vunpack.c.h.b16 %v3637
      %v4151 = vunpack.c.l.b16 %v3638
      %v4152 = vunpack.c.h.b16 %v3638
      %v4153 = vunpack.c.l.b16 %v3639
      %v4154 = vunpack.c.h.b16 %v3639
      %v4155 = vunpack.c.l.b16 %v3640
      %v4156 = vunpack.c.h.b16 %v3640
      %v4157 = vunpack.c.l.b16 %v3641
      %v4158 = vunpack.c.h.b16 %v3641
      %v4159 = vunpack.c.l.b16 %v3642
      %v4160 = vunpack.c.h.b16 %v3642
      %v4161 = vunpack.c.l.b16 %v3643
      %v4162 = vunpack.c.h.b16 %v3643
      %v4163 = vunpack.c.l.b16 %v3644
      %v4164 = vunpack.c.h.b16 %v3644
      %v4165 = vunpack.c.l.b16 %v3645
      %v4166 = vunpack.c.h.b16 %v3645
      %v4167 = vunpack.c.l.b16 %v3646
      %v4168 = vunpack.c.h.b16 %v3646
      %v4169 = vunpack.c.l.b16 %v3647
      %v4170 = vunpack.c.h.b16 %v3647
      %v4171 = vunpack.c.l.b16 %v3648
      %v4172 = vunpack.c.h.b16 %v3648
      %v4173 = vunpack.c.l.b16 %v3649
      %v4174 = vunpack.c.h.b16 %v3649
      %v4175 = vunpack.c.l.b16 %v3650
      %v4176 = vunpack.c.h.b16 %v3650
      %v4177 = vunpack.c.l.b16 %v3651
      %v4178 = vunpack.c.h.b16 %v3651
      %v4179 = vunpack.c.l.b16 %v3652
      %v4180 = vunpack.c.h.b16 %v3652
      %v4181 = vunpack.c.l.b16 %v3653
      %v4182 = vunpack.c.h.b16 %v3653
      %v4183 = vunpack.c.l.b16 %v3654
      %v4184 = vunpack.c.h.b16 %v3654
      %v4185 = vunpack.c.l.b16 %v3655
      %v4186 = vunpack.c.h.b16 %v3655
      %v4187 = vunpack.c.l.b16 %v3656
      %v4188 = vunpack.c.h.b16 %v3656
      %v4189 = vunpack.c.l.b16 %v3657
      %v4190 = vunpack.c.h.b16 %v3657
      %v4191 = vunpack.c.l.b16 %v3658
      %v4192 = vunpack.c.h.b16 %v3658
      %v4193 = vunpack.c.l.b16 %v3659
      %v4194 = vunpack.c.h.b16 %v3659
      %v4195 = vunpack.c.l.b16 %v3660
      %v4196 = vunpack.c.h.b16 %v3660
      %v4197 = vunpack.c.l.b16 %v3661
      %v4198 = vunpack.c.h.b16 %v3661
      %v4199 = vunpack.c.l.b16 %v3662
      %v4200 = vunpack.c.h.b16 %v3662
      %v4201 = vunpack.c.l.b16 %v3663
      %v4202 = vunpack.c.h.b16 %v3663
      %v4203 = vunpack.c.l.b16 %v3664
      %v4204 = vunpack.c.h.b16 %v3664
      %v4205 = vunpack.c.l.b16 %v3665
      %v4206 = vunpack.c.h.b16 %v3665
      %v4207 = vunpack.c.l.b16 %v3666
      %v4208 = vunpack.c.h.b16 %v3666
      %v4209 = vunpack.c.l.b16 %v3667
      %v4210 = vunpack.c.h.b16 %v3667
      %v4211 = vunpack.c.l.b16 %v3668
      %v4212 = vunpack.c.h.b16 %v3668
      %v4213 = vunpack.c.l.b16 %v3669
      %v4214 = vunpack.c.h.b16 %v3669
      %v4215 = vunpack.c.l.b16 %v3670
      %v4216 = vunpack.c.h.b16 %v3670
      %v4217 = vunpack.c.l.b16 %v3671
      %v4218 = vunpack.c.h.b16 %v3671
      %v4219 = vunpack.c.l.b16 %v3672
      %v4220 = vunpack.c.h.b16 %v3672
      %v4221 = vunpack.c.l.b16 %v3673
      %v4222 = vunpack.c.h.b16 %v3673
      %v4223 = vunpack.c.l.b16 %v3674
      %v4224 = vunpack.c.h.b16 %v3674
      %v4225 = vunpack.c.l.b16 %v3675
      %v4226 = vunpack.c.h.b16 %v3675
      %v4227 = vunpack.c.l.b16 %v3676
      %v4228 = vunpack.c.h.b16 %v3676
      %v4229 = vunpack.c.l.b16 %v3677
      %v4230 = vunpack.c.h.b16 %v3677
      %v4231 = vunpack.c.l.b16 %v3678
      %v4232 = vunpack.c.h.b16 %v3678
      %v4233 = vunpack.c.l.b16 %v3679
      %v4234 = vunpack.c.h.b16 %v3679
      %v4235 = vunpack.c.l.b16 %v3680
      %v4236 = vunpack.c.h.b16 %v3680
      %v4237 = vunpack.c.l.b16 %v3681
      %v4238 = vunpack.c.h.b16 %v3681
      %v4239 = vunpack.c.l.b16 %v3682
      %v4240 = vunpack.c.h.b16 %v3682
      %v4241 = vunpack.c.l.b16 %v3683
      %v4242 = vunpack.c.h.b16 %v3683
      %v4243 = vunpack.c.l.b16 %v3684
      %v4244 = vunpack.c.h.b16 %v3684
      %v4245 = vunpack.c.l.b16 %v3685
      %v4246 = vunpack.c.h.b16 %v3685
      %v4247 = vunpack.c.l.b16 %v3686
      %v4248 = vunpack.c.h.b16 %v3686
      %v4249 = vunpack.c.l.b16 %v3687
      %v4250 = vunpack.c.h.b16 %v3687
      %v4251 = vunpack.c.l.b16 %v3688
      %v4252 = vunpack.c.h.b16 %v3688
      %v4253 = vunpack.c.l.b16 %v3689
      %v4254 = vunpack.c.h.b16 %v3689
      %v4255 = vunpack.c.l.b16 %v3690
      %v4256 = vunpack.c.h.b16 %v3690
      %v4257 = vunpack.c.l.b16 %v3691
      %v4258 = vunpack.c.h.b16 %v3691
      %v4259 = vunpack.c.l.b16 %v3692
      %v4260 = vunpack.c.h.b16 %v3692
      %v4261 = vunpack.c.l.b16 %v3693
      %v4262 = vunpack.c.h.b16 %v3693
      %v4263 = vunpack.c.l.b16 %v3694
      %v4264 = vunpack.c.h.b16 %v3694
      %v4265 = vunpack.c.l.b16 %v3695
      %v4266 = vunpack.c.h.b16 %v3695
      %v4267 = vunpack.c.l.b16 %v3696
      %v4268 = vunpack.c.h.b16 %v3696
      %v4269 = vunpack.c.l.b16 %v3697
      %v4270 = vunpack.c.h.b16 %v3697
      %v4271 = vunpack.c.l.b16 %v3698
      %v4272 = vunpack.c.h.b16 %v3698
      %v4273 = vunpack.c.l.b16 %v3699
      %v4274 = vunpack.c.h.b16 %v3699
      %v4275 = vunpack.c.l.b16 %v3700
      %v4276 = vunpack.c.h.b16 %v3700
      %v4277 = vunpack.c.l.b16 %v3701
      %v4278 = vunpack.c.h.b16 %v3701
      %v4279 = vunpack.c.l.b16 %v3702
      %v4280 = vunpack.c.h.b16 %v3702
      %v4281 = vunpack.c.l.b16 %v3703
      %v4282 = vunpack.c.h.b16 %v3703
      %v4283 = vunpack.c.l.b16 %v3704
      %v4284 = vunpack.c.h.b16 %v3704
      %v4285 = vunpack.c.l.b16 %v3705
      %v4286 = vunpack.c.h.b16 %v3705
      %v4287 = vunpack.c.l.b16 %v3706
      %v4288 = vunpack.c.h.b16 %v3706
      %v4289 = vunpack.c.l.b16 %v3707
      %v4290 = vunpack.c.h.b16 %v3707
      %v4291 = vunpack.c.l.b16 %v3708
      %v4292 = vunpack.c.h.b16 %v3708
      %v4293 = vunpack.c.l.b16 %v3709
      %v4294 = vunpack.c.h.b16 %v3709
      %v4295 = vunpack.c.l.b16 %v3710
      %v4296 = vunpack.c.h.b16 %v3710
      %v4297 = vunpack.c.l.b16 %v3711
      %v4298 = vunpack.c.h.b16 %v3711
      %v4299 = vunpack.c.l.b16 %v3712
      %v4300 = vunpack.c.h.b16 %v3712
      %v4301 = vunpack.c.l.b16 %v3713
      %v4302 = vunpack.c.h.b16 %v3713
      %v4303 = vunpack.c.l.b16 %v3714
      %v4304 = vunpack.c.h.b16 %v3714
      %v4305 = vunpack.c.l.b16 %v3715
      %v4306 = vunpack.c.h.b16 %v3715
      %v4307 = vunpack.c.l.b16 %v3716
      %v4308 = vunpack.c.h.b16 %v3716
      %v4309 = vunpack.c.l.b16 %v3717
      %v4310 = vunpack.c.h.b16 %v3717
      %v4311 = vunpack.c.l.b16 %v3718
      %v4312 = vunpack.c.h.b16 %v3718
      %v4313 = vunpack.c.l.b16 %v3719
      %v4314 = vunpack.c.h.b16 %v3719
      %v4315 = vunpack.c.l.b16 %v3720
      %v4316 = vunpack.c.h.b16 %v3720
      %v4317 = vunpack.c.l.b16 %v3721
      %v4318 = vunpack.c.h.b16 %v3721
      %v4319 = vunpack.c.l.b16 %v3722
      %v4320 = vunpack.c.h.b16 %v3722
      %v4321 = vunpack.c.l.b16 %v3723
      %v4322 = vunpack.c.h.b16 %v3723
      %v4323 = vunpack.c.l.b16 %v3724
      %v4324 = vunpack.c.h.b16 %v3724
      %v4325 = vunpack.c.l.b16 %v3725
      %v4326 = vunpack.c.h.b16 %v3725
      %v4327 = vunpack.c.l.b16 %v3726
      %v4328 = vunpack.c.h.b16 %v3726
      %v4329 = vunpack.c.l.b16 %v3727
      %v4330 = vunpack.c.h.b16 %v3727
      %v4331 = vunpack.c.l.b16 %v3728
      %v4332 = vunpack.c.h.b16 %v3728
      %v4333 = vunpack.c.l.b16 %v3729
      %v4334 = vunpack.c.h.b16 %v3729
      %v4335 = vunpack.c.l.b16 %v3730
      %v4336 = vunpack.c.h.b16 %v3730
      %v4337 = vunpack.c.l.b16 %v3731
      %v4338 = vunpack.c.h.b16 %v3731
      %v4339 = vunpack.c.l.b16 %v3732
      %v4340 = vunpack.c.h.b16 %v3732
      %v4341 = vunpack.c.l.b16 %v3733
      %v4342 = vunpack.c.h.b16 %v3733
      %v4343 = vunpack.c.l.b16 %v3734
      %v4344 = vunpack.c.h.b16 %v3734
      %v4345 = vunpack.c.l.b16 %v3735
      %v4346 = vunpack.c.h.b16 %v3735
      %v4347 = vunpack.c.l.b16 %v3736
      %v4348 = vunpack.c.h.b16 %v3736
      %v4349 = vunpack.c.l.b16 %v3737
      %v4350 = vunpack.c.h.b16 %v3737
      %v4351 = vunpack.c.l.b16 %v3738
      %v4352 = vunpack.c.h.b16 %v3738
      %v4353 = vunpack.c.l.b16 %v3739
      %v4354 = vunpack.c.h.b16 %v3739
      %v4355 = vunpack.c.l.b16 %v3740
      %v4356 = vunpack.c.h.b16 %v3740
      %v4357 = vunpack.c.l.b16 %v3741
      %v4358 = vunpack.c.h.b16 %v3741
      %v4359 = vunpack.c.l.b16 %v3742
      %v4360 = vunpack.c.h.b16 %v3742
      %v4361 = vunpack.c.l.b16 %v3743
      %v4362 = vunpack.c.h.b16 %v3743
      %v4363 = vunpack.c.l.b16 %v3744
      %v4364 = vunpack.c.h.b16 %v3744
      %v4365 = vunpack.c.l.b16 %v3745
      %v4366 = vunpack.c.h.b16 %v3745
      %v4367 = vunpack.c.l.b16 %v3746
      %v4368 = vunpack.c.h.b16 %v3746
      %v4369 = vunpack.c.l.b16 %v3747
      %v4370 = vunpack.c.h.b16 %v3747
      %v4371 = vunpack.c.l.b16 %v3748
      %v4372 = vunpack.c.h.b16 %v3748
      %v4373 = vunpack.c.l.b16 %v3749
      %v4374 = vunpack.c.h.b16 %v3749
      %v4375 = vunpack.c.l.b16 %v3750
      %v4376 = vunpack.c.h.b16 %v3750
      %v4377 = vunpack.c.l.b16 %v3751
      %v4378 = vunpack.c.h.b16 %v3751
      %v4379 = vunpack.c.l.b16 %v3752
      %v4380 = vunpack.c.h.b16 %v3752
      %v4381 = vunpack.c.l.b16 %v3753
      %v4382 = vunpack.c.h.b16 %v3753
      %v4383 = vunpack.c.l.b16 %v3754
      %v4384 = vunpack.c.h.b16 %v3754
      %v4385 = vunpack.c.l.b16 %v3755
      %v4386 = vunpack.c.h.b16 %v3755
      %v4387 = vunpack.c.l.b16 %v3756
      %v4388 = vunpack.c.h.b16 %v3756
      %v4389 = vunpack.c.l.b16 %v3757
      %v4390 = vunpack.c.h.b16 %v3757
      %v4391 = vunpack.c.l.b16 %v3758
      %v4392 = vunpack.c.h.b16 %v3758
      %v4393 = vunpack.c.l.b16 %v3759
      %v4394 = vunpack.c.h.b16 %v3759
      %v4395 = vunpack.c.l.b16 %v3760
      %v4396 = vunpack.c.h.b16 %v3760
      %v4397 = vunpack.c.l.b16 %v3761
      %v4398 = vunpack.c.h.b16 %v3761
      %v4399 = vunpack.c.l.b16 %v3762
      %v4400 = vunpack.c.h.b16 %v3762
      %v4401 = vunpack.c.l.b16 %v3763
      %v4402 = vunpack.c.h.b16 %v3763
      %v4403 = vunpack.c.l.b16 %v3764
      %v4404 = vunpack.c.h.b16 %v3764
      %v4405 = vunpack.c.l.b16 %v3765
      %v4406 = vunpack.c.h.b16 %v3765
      %v4407 = vunpack.c.l.b16 %v3766
      %v4408 = vunpack.c.h.b16 %v3766
      %v4409 = vunpack.c.l.b16 %v3767
      %v4410 = vunpack.c.h.b16 %v3767
      %v4411 = vunpack.c.l.b16 %v3768
      %v4412 = vunpack.c.h.b16 %v3768
      %v4413 = vunpack.c.l.b16 %v3769
      %v4414 = vunpack.c.h.b16 %v3769
      %v4415 = vunpack.c.l.b16 %v3770
      %v4416 = vunpack.c.h.b16 %v3770
      %v4417 = vunpack.c.l.b16 %v3771
      %v4418 = vunpack.c.h.b16 %v3771
      %v4419 = vunpack.c.l.b16 %v3772
      %v4420 = vunpack.c.h.b16 %v3772
      %v4421 = vunpack.c.l.b16 %v3773
      %v4422 = vunpack.c.h.b16 %v3773
      %v4423 = vunpack.c.l.b16 %v3774
      %v4424 = vunpack.c.h.b16 %v3774
      %v4425 = vunpack.c.l.b16 %v3775
      %v4426 = vunpack.c.h.b16 %v3775
      %v4427 = vunpack.c.l.b16 %v3776
      %v4428 = vunpack.c.h.b16 %v3776
      %v4429 = vunpack.c.l.b16 %v3777
      %v4430 = vunpack.c.h.b16 %v3777
      %v4431 = vunpack.c.l.b16 %v3778
      %v4432 = vunpack.c.h.b16 %v3778
      %v4433 = vunpack.c.l.b16 %v3779
      %v4434 = vunpack.c.h.b16 %v3779
      %v4435 = vunpack.c.l.b16 %v3780
      %v4436 = vunpack.c.h.b16 %v3780
      %v4437 = vunpack.c.l.b16 %v3781
      %v4438 = vunpack.c.h.b16 %v3781
      %v4439 = vunpack.c.l.b16 %v3782
      %v4440 = vunpack.c.h.b16 %v3782
      %v4441 = vunpack.c.l.b16 %v3783
      %v4442 = vunpack.c.h.b16 %v3783
      %v4443 = vunpack.c.l.b16 %v3784
      %v4444 = vunpack.c.h.b16 %v3784
      %v4445 = vunpack.c.l.b16 %v3785
      %v4446 = vunpack.c.h.b16 %v3785
      %v4447 = vunpack.c.l.b16 %v3786
      %v4448 = vunpack.c.h.b16 %v3786
      %v4449 = vunpack.c.l.b16 %v3787
      %v4450 = vunpack.c.h.b16 %v3787
      %v4451 = vunpack.c.l.b16 %v3788
      %v4452 = vunpack.c.h.b16 %v3788
      %v4453 = vunpack.c.l.b16 %v3789
      %v4454 = vunpack.c.h.b16 %v3789
      %v4455 = vunpack.c.l.b16 %v3790
      %v4456 = vunpack.c.h.b16 %v3790
      %v4457 = vunpack.c.l.b16 %v3791
      %v4458 = vunpack.c.h.b16 %v3791
      %v4459 = vunpack.c.l.b16 %v3792
      %v4460 = vunpack.c.h.b16 %v3792
      %v4461 = vunpack.c.l.b16 %v3793
      %v4462 = vunpack.c.h.b16 %v3793
      %v4463 = vunpack.c.l.b16 %v3794
      %v4464 = vunpack.c.h.b16 %v3794
      %v4465 = vunpack.c.l.b16 %v3795
      %v4466 = vunpack.c.h.b16 %v3795
      %v4467 = vunpack.c.l.b16 %v3796
      %v4468 = vunpack.c.h.b16 %v3796
      %v4469 = vunpack.c.l.b16 %v3797
      %v4470 = vunpack.c.h.b16 %v3797
      %v4471 = vunpack.c.l.b16 %v3798
      %v4472 = vunpack.c.h.b16 %v3798
      %v4473 = vunpack.c.l.b16 %v3799
      %v4474 = vunpack.c.h.b16 %v3799
      %v4475 = vunpack.c.l.b16 %v3800
      %v4476 = vunpack.c.h.b16 %v3800
      %v4477 = vunpack.c.l.b16 %v3801
      %v4478 = vunpack.c.h.b16 %v3801
      %v4479 = vunpack.c.l.b16 %v3802
      %v4480 = vunpack.c.h.b16 %v3802
      %v4481 = vunpack.c.l.b16 %v3803
      %v4482 = vunpack.c.h.b16 %v3803
      %v4483 = vunpack.c.l.b16 %v3804
      %v4484 = vunpack.c.h.b16 %v3804
      %v4485 = vunpack.c.l.b16 %v3805
      %v4486 = vunpack.c.h.b16 %v3805
      %v4487 = vunpack.c.l.b16 %v3806
      %v4488 = vunpack.c.h.b16 %v3806
      %v4489 = vunpack.c.l.b16 %v3807
      %v4490 = vunpack.c.h.b16 %v3807
      %v4491 = vunpack.c.l.b16 %v3808
      %v4492 = vunpack.c.h.b16 %v3808
      %v4493 = vunpack.c.l.b16 %v3809
      %v4494 = vunpack.c.h.b16 %v3809
      %v4495 = vunpack.c.l.b16 %v3810
      %v4496 = vunpack.c.h.b16 %v3810
      %v4497 = vunpack.c.l.b16 %v3811
      %v4498 = vunpack.c.h.b16 %v3811
      %v4499 = vunpack.c.l.b16 %v3812
      %v4500 = vunpack.c.h.b16 %v3812
      %v4501 = vunpack.c.l.b16 %v3813
      %v4502 = vunpack.c.h.b16 %v3813
      %v4503 = vunpack.c.l.b16 %v3814
      %v4504 = vunpack.c.h.b16 %v3814
      %v4505 = vunpack.c.l.b16 %v3815
      %v4506 = vunpack.c.h.b16 %v3815
      %v4507 = vunpack.c.l.b16 %v3816
      %v4508 = vunpack.c.h.b16 %v3816
      %v4509 = vunpack.c.l.b16 %v3817
      %v4510 = vunpack.c.h.b16 %v3817
      %v4511 = vunpack.c.l.b16 %v3818
      %v4512 = vunpack.c.h.b16 %v3818
      %v4513 = vunpack.c.l.b16 %v3819
      %v4514 = vunpack.c.h.b16 %v3819
      %v4515 = vunpack.c.l.b16 %v3820
      %v4516 = vunpack.c.h.b16 %v3820
      %v4517 = vunpack.c.l.b16 %v3821
      %v4518 = vunpack.c.h.b16 %v3821
      %v4519 = vunpack.c.l.b16 %v3822
      %v4520 = vunpack.c.h.b16 %v3822
      %v4521 = vunpack.c.l.b16 %v3823
      %v4522 = vunpack.c.h.b16 %v3823
      %v4523 = vunpack.c.l.b16 %v3824
      %v4524 = vunpack.c.h.b16 %v3824
      %v4525 = vunpack.c.l.b16 %v3825
      %v4526 = vunpack.c.h.b16 %v3825
      %v4527 = vunpack.c.l.b16 %v3826
      %v4528 = vunpack.c.h.b16 %v3826
      %v4529 = vunpack.c.l.b16 %v3827
      %v4530 = vunpack.c.h.b16 %v3827
      %v4531 = vunpack.c.l.b16 %v3828
      %v4532 = vunpack.c.h.b16 %v3828
      %v4533 = vunpack.c.l.b16 %v3829
      %v4534 = vunpack.c.h.b16 %v3829
      %v4535 = vunpack.c.l.b16 %v3830
      %v4536 = vunpack.c.h.b16 %v3830
      %v4537 = vunpack.c.l.b16 %v3831
      %v4538 = vunpack.c.h.b16 %v3831
      %v4539 = vunpack.c.l.b16 %v3832
      %v4540 = vunpack.c.h.b16 %v3832
      %v4541 = vunpack.c.l.b16 %v3833
      %v4542 = vunpack.c.h.b16 %v3833
      %v4543 = vunpack.c.l.b16 %v3834
      %v4544 = vunpack.c.h.b16 %v3834
      %v4545 = vunpack.c.l.b16 %v3835
      %v4546 = vunpack.c.h.b16 %v3835
      %v4547 = vunpack.c.l.b16 %v3836
      %v4548 = vunpack.c.h.b16 %v3836
      %v4549 = vunpack.c.l.b16 %v3837
      %v4550 = vunpack.c.h.b16 %v3837
      %v4551 = vunpack.c.l.b16 %v3838
      %v4552 = vunpack.c.h.b16 %v3838
      %v4553 = vunpack.c.l.b16 %v3839
      %v4554 = vunpack.c.h.b16 %v3839
      %v4555 = vunpack.c.l.b16 %v3840
      %v4556 = vunpack.c.h.b16 %v3840
      %v4557 = vunpack.c.l.b16 %v3841
      %v4558 = vunpack.c.h.b16 %v3841
      %v4559 = vunpack.c.l.b16 %v3842
      %v4560 = vunpack.c.h.b16 %v3842
      %v4561 = vunpack.c.l.b16 %v3843
      %v4562 = vunpack.c.h.b16 %v3843
      %v4563 = vunpack.c.l.b16 %v3844
      %v4564 = vunpack.c.h.b16 %v3844
      %v4565 = vunpack.c.l.b16 %v3845
      %v4566 = vunpack.c.h.b16 %v3845
      %v4567 = vunpack.c.l.b16 %v3846
      %v4568 = vunpack.c.h.b16 %v3846
      %v4569 = vunpack.c.l.b16 %v3847
      %v4570 = vunpack.c.h.b16 %v3847
      %v4571 = vunpack.c.l.b16 %v3848
      %v4572 = vunpack.c.h.b16 %v3848
      %v4573 = vunpack.c.l.b16 %v3849
      %v4574 = vunpack.c.h.b16 %v3849
      %v4575 = vunpack.c.l.b16 %v3850
      %v4576 = vunpack.c.h.b16 %v3850
      %v4577 = vunpack.c.l.b16 %v3851
      %v4578 = vunpack.c.h.b16 %v3851
      %v4579 = vunpack.c.l.b16 %v3852
      %v4580 = vunpack.c.h.b16 %v3852
      %v4581 = vunpack.c.l.b16 %v3853
      %v4582 = vunpack.c.h.b16 %v3853
      %v4583 = vunpack.c.l.b16 %v3854
      %v4584 = vunpack.c.h.b16 %v3854
      %v4585 = vunpack.c.l.b16 %v3855
      %v4586 = vunpack.c.h.b16 %v3855
      %v4587 = vunpack.c.l.b16 %v3856
      %v4588 = vunpack.c.h.b16 %v3856
      %v4589 = vunpack.c.l.b16 %v3857
      %v4590 = vunpack.c.h.b16 %v3857
      %v4591 = vunpack.c.l.b16 %v3858
      %v4592 = vunpack.c.h.b16 %v3858
      %v4593 = vunpack.c.l.b16 %v3859
      %v4594 = vunpack.c.h.b16 %v3859
      %v4595 = vunpack.c.l.b16 %v3860
      %v4596 = vunpack.c.h.b16 %v3860
      %v4597 = vunpack.c.l.b16 %v3861
      %v4598 = vunpack.c.h.b16 %v3861
      %v4599 = vunpack.c.l.b16 %v3862
      %v4600 = vunpack.c.h.b16 %v3862
      %v4601 = vunpack.c.l.b16 %v3863
      %v4602 = vunpack.c.h.b16 %v3863
      %v4603 = vunpack.c.l.b16 %v3864
      %v4604 = vunpack.c.h.b16 %v3864
      %v4605 = vunpack.c.l.b16 %v3865
      %v4606 = vunpack.c.h.b16 %v3865
      %v4607 = vunpack.c.l.b16 %v3866
      %v4608 = vunpack.c.h.b16 %v3866
      %v4609 = vunpack.c.l.b16 %v3867
      %v4610 = vunpack.c.h.b16 %v3867
      %v4611 = vunpack.c.l.b16 %v3868
      %v4612 = vunpack.c.h.b16 %v3868
      %v4613 = vunpack.c.l.b16 %v3869
      %v4614 = vunpack.c.h.b16 %v3869
      %v4615 = vunpack.c.l.b16 %v3870
      %v4616 = vunpack.c.h.b16 %v3870
      %v4617 = vunpack.c.l.b16 %v3871
      %v4618 = vunpack.c.h.b16 %v3871
      %v4619 = vunpack.c.l.b16 %v3872
      %v4620 = vunpack.c.h.b16 %v3872
      %v4621 = vunpack.c.l.b16 %v3873
      %v4622 = vunpack.c.h.b16 %v3873
      %v4623 = vunpack.c.l.b16 %v3874
      %v4624 = vunpack.c.h.b16 %v3874
      %v4625 = vunpack.c.l.b16 %v3875
      %v4626 = vunpack.c.h.b16 %v3875
      %v4627 = vunpack.c.l.b16 %v3876
      %v4628 = vunpack.c.h.b16 %v3876
      %v4629 = vunpack.c.l.b16 %v3877
      %v4630 = vunpack.c.h.b16 %v3877
      %v4631 = vunpack.c.l.b16 %v3878
      %v4632 = vunpack.c.h.b16 %v3878
      %v4633 = vunpack.c.l.b16 %v3879
      %v4634 = vunpack.c.h.b16 %v3879
      %v4635 = vunpack.c.l.b16 %v3880
      %v4636 = vunpack.c.h.b16 %v3880
      %v4637 = vunpack.c.l.b16 %v3881
      %v4638 = vunpack.c.h.b16 %v3881
      %v4639 = vunpack.c.l.b16 %v3882
      %v4640 = vunpack.c.h.b16 %v3882
      %v4641 = vunpack.c.l.b16 %v3883
      %v4642 = vunpack.c.h.b16 %v3883
      %v4643 = vunpack.c.l.b16 %v3884
      %v4644 = vunpack.c.h.b16 %v3884
      %v4645 = vunpack.c.l.b16 %v3885
      %v4646 = vunpack.c.h.b16 %v3885
      %v4647 = vunpack.c.l.b16 %v3886
      %v4648 = vunpack.c.h.b16 %v3886
      %v4649 = vunpack.c.l.b16 %v3887
      %v4650 = vunpack.c.h.b16 %v3887
      %v4651 = vunpack.c.l.b16 %v3888
      %v4652 = vunpack.c.h.b16 %v3888
      %v4653 = vunpack.c.l.b16 %v3889
      %v4654 = vunpack.c.h.b16 %v3889
      %v4655 = vunpack.c.l.b16 %v3890
      %v4656 = vunpack.c.h.b16 %v3890
      %v4657 = vunpack.c.l.b16 %v3891
      %v4658 = vunpack.c.h.b16 %v3891
      %v4659 = vunpack.c.l.b16 %v3892
      %v4660 = vunpack.c.h.b16 %v3892
      %v4661 = vpack.c.b16 %v4153, %v4149
      %v4662 = vpack.c.b16 %v4154, %v4150
      %v4663 = vpack.c.b16 %v4155, %v4151
      %v4664 = vpack.c.b16 %v4156, %v4152
      %v4665 = vpack.c.b16 %v4161, %v4157
      %v4666 = vpack.c.b16 %v4162, %v4158
      %v4667 = vpack.c.b16 %v4163, %v4159
      %v4668 = vpack.c.b16 %v4164, %v4160
      %v4669 = vpack.c.b16 %v4169, %v4165
      %v4670 = vpack.c.b16 %v4170, %v4166
      %v4671 = vpack.c.b16 %v4171, %v4167
      %v4672 = vpack.c.b16 %v4172, %v4168
      %v4673 = vpack.c.b16 %v4177, %v4173
      %v4674 = vpack.c.b16 %v4178, %v4174
      %v4675 = vpack.c.b16 %v4179, %v4175
      %v4676 = vpack.c.b16 %v4180, %v4176
      %v4677 = vpack.c.b16 %v4185, %v4181
      %v4678 = vpack.c.b16 %v4186, %v4182
      %v4679 = vpack.c.b16 %v4187, %v4183
      %v4680 = vpack.c.b16 %v4188, %v4184
      %v4681 = vpack.c.b16 %v4193, %v4189
      %v4682 = vpack.c.b16 %v4194, %v4190
      %v4683 = vpack.c.b16 %v4195, %v4191
      %v4684 = vpack.c.b16 %v4196, %v4192
      %v4685 = vpack.c.b16 %v4201, %v4197
      %v4686 = vpack.c.b16 %v4202, %v4198
      %v4687 = vpack.c.b16 %v4203, %v4199
      %v4688 = vpack.c.b16 %v4204, %v4200
      %v4689 = vpack.c.b16 %v4209, %v4205
      %v4690 = vpack.c.b16 %v4210, %v4206
      %v4691 = vpack.c.b16 %v4211, %v4207
      %v4692 = vpack.c.b16 %v4212, %v4208
      %v4693 = vpack.c.b16 %v4217, %v4213
      %v4694 = vpack.c.b16 %v4218, %v4214
      %v4695 = vpack.c.b16 %v4219, %v4215
      %v4696 = vpack.c.b16 %v4220, %v4216
      %v4697 = vpack.c.b16 %v4225, %v4221
      %v4698 = vpack.c.b16 %v4226, %v4222
      %v4699 = vpack.c.b16 %v4227, %v4223
      %v4700 = vpack.c.b16 %v4228, %v4224
      %v4701 = vpack.c.b16 %v4233, %v4229
      %v4702 = vpack.c.b16 %v4234, %v4230
      %v4703 = vpack.c.b16 %v4235, %v4231
      %v4704 = vpack.c.b16 %v4236, %v4232
      %v4705 = vpack.c.b16 %v4241, %v4237
      %v4706 = vpack.c.b16 %v4242, %v4238
      %v4707 = vpack.c.b16 %v4243, %v4239
      %v4708 = vpack.c.b16 %v4244, %v4240
      %v4709 = vpack.c.b16 %v4249, %v4245
      %v4710 = vpack.c.b16 %v4250, %v4246
      %v4711 = vpack.c.b16 %v4251, %v4247
      %v4712 = vpack.c.b16 %v4252, %v4248
      %v4713 = vpack.c.b16 %v4257, %v4253
      %v4714 = vpack.c.b16 %v4258, %v4254
      %v4715 = vpack.c.b16 %v4259, %v4255
      %v4716 = vpack.c.b16 %v4260, %v4256
      %v4717 = vpack.c.b16 %v4265, %v4261
      %v4718 = vpack.c.b16 %v4266, %v4262
      %v4719 = vpack.c.b16 %v4267, %v4263
      %v4720 = vpack.c.b16 %v4268, %v4264
      %v4721 = vpack.c.b16 %v4273, %v4269
      %v4722 = vpack.c.b16 %v4274, %v4270
      %v4723 = vpack.c.b16 %v4275, %v4271
      %v4724 = vpack.c.b16 %v4276, %v4272
      %v4725 = vpack.c.b16 %v4281, %v4277
      %v4726 = vpack.c.b16 %v4282, %v4278
      %v4727 = vpack.c.b16 %v4283, %v4279
      %v4728 = vpack.c.b16 %v4284, %v4280
      %v4729 = vpack.c.b16 %v4289, %v4285
      %v4730 = vpack.c.b16 %v4290, %v4286
      %v4731 = vpack.c.b16 %v4291, %v4287
      %v4732 = vpack.c.b16 %v4292, %v4288
      %v4733 = vpack.c.b16 %v4297, %v4293
      %v4734 = vpack.c.b16 %v4298, %v4294
      %v4735 = vpack.c.b16 %v4299, %v4295
      %v4736 = vpack.c.b16 %v4300, %v4296
      %v4737 = vpack.c.b16 %v4305, %v4301
      %v4738 = vpack.c.b16 %v4306, %v4302
      %v4739 = vpack.c.b16 %v4307, %v4303
      %v4740 = vpack.c.b16 %v4308, %v4304
      %v4741 = vpack.c.b16 %v4313, %v4309
      %v4742 = vpack.c.b16 %v4314, %v4310
      %v4743 = vpack.c.b16 %v4315, %v4311
      %v4744 = vpack.c.b16 %v4316, %v4312
      %v4745 = vpack.c.b16 %v4321, %v4317
      %v4746 = vpack.c.b16 %v4322, %v4318
      %v4747 = vpack.c.b16 %v4323, %v4319
      %v4748 = vpack.c.b16 %v4324, %v4320
      %v4749 = vpack.c.b16 %v4329, %v4325
      %v4750 = vpack.c.b16 %v4330, %v4326
      %v4751 = vpack.c.b16 %v4331, %v4327
      %v4752 = vpack.c.b16 %v4332, %v4328
      %v4753 = vpack.c.b16 %v4337, %v4333
      %v4754 = vpack.c.b16 %v4338, %v4334
      %v4755 = vpack.c.b16 %v4339, %v4335
      %v4756 = vpack.c.b16 %v4340, %v4336
      %v4757 = vpack.c.b16 %v4345, %v4341
      %v4758 = vpack.c.b16 %v4346, %v4342
      %v4759 = vpack.c.b16 %v4347, %v4343
      %v4760 = vpack.c.b16 %v4348, %v4344
      %v4761 = vpack.c.b16 %v4353, %v4349
      %v4762 = vpack.c.b16 %v4354, %v4350
      %v4763 = vpack.c.b16 %v4355, %v4351
      %v4764 = vpack.c.b16 %v4356, %v4352
      %v4765 = vpack.c.b16 %v4361, %v4357
      %v4766 = vpack.c.b16 %v4362, %v4358
      %v4767 = vpack.c.b16 %v4363, %v4359
      %v4768 = vpack.c.b16 %v4364, %v4360
      %v4769 = vpack.c.b16 %v4369, %v4365
      %v4770 = vpack.c.b16 %v4370, %v4366
      %v4771 = vpack.c.b16 %v4371, %v4367
      %v4772 = vpack.c.b16 %v4372, %v4368
      %v4773 = vpack.c.b16 %v4377, %v4373
      %v4774 = vpack.c.b16 %v4378, %v4374
      %v4775 = vpack.c.b16 %v4379, %v4375
      %v4776 = vpack.c.b16 %v4380, %v4376
      %v4777 = vpack.c.b16 %v4385, %v4381
      %v4778 = vpack.c.b16 %v4386, %v4382
      %v4779 = vpack.c.b16 %v4387, %v4383
      %v4780 = vpack.c.b16 %v4388, %v4384
      %v4781 = vpack.c.b16 %v4393, %v4389
      %v4782 = vpack.c.b16 %v4394, %v4390
      %v4783 = vpack.c.b16 %v4395, %v4391
      %v4784 = vpack.c.b16 %v4396, %v4392
      %v4785 = vpack.c.b16 %v4401, %v4397
      %v4786 = vpack.c.b16 %v4402, %v4398
      %v4787 = vpack.c.b16 %v4403, %v4399
      %v4788 = vpack.c.b16 %v4404, %v4400
      %v4789 = vpack.c.b16 %v4409, %v4405
      %v4790 = vpack.c.b16 %v4410, %v4406
      %v4791 = vpack.c.b16 %v4411, %v4407
      %v4792 = vpack.c.b16 %v4412, %v4408
      %v4793 = vpack.c.b16 %v4417, %v4413
      %v4794 = vpack.c.b16 %v4418, %v4414
      %v4795 = vpack.c.b16 %v4419, %v4415
      %v4796 = vpack.c.b16 %v4420, %v4416
      %v4797 = vpack.c.b16 %v4425, %v4421
      %v4798 = vpack.c.b16 %v4426, %v4422
      %v4799 = vpack.c.b16 %v4427, %v4423
      %v4800 = vpack.c.b16 %v4428, %v4424
      %v4801 = vpack.c.b16 %v4433, %v4429
      %v4802 = vpack.c.b16 %v4434, %v4430
      %v4803 = vpack.c.b16 %v4435, %v4431
      %v4804 = vpack.c.b16 %v4436, %v4432
      %v4805 = vpack.c.b16 %v4441, %v4437
      %v4806 = vpack.c.b16 %v4442, %v4438
      %v4807 = vpack.c.b16 %v4443, %v4439
      %v4808 = vpack.c.b16 %v4444, %v4440
      %v4809 = vpack.c.b16 %v4449, %v4445
      %v4810 = vpack.c.b16 %v4450, %v4446
      %v4811 = vpack.c.b16 %v4451, %v4447
      %v4812 = vpack.c.b16 %v4452, %v4448
      %v4813 = vpack.c.b16 %v4457, %v4453
      %v4814 = vpack.c.b16 %v4458, %v4454
      %v4815 = vpack.c.b16 %v4459, %v4455
      %v4816 = vpack.c.b16 %v4460, %v4456
      %v4817 = vpack.c.b16 %v4465, %v4461
      %v4818 = vpack.c.b16 %v4466, %v4462
      %v4819 = vpack.c.b16 %v4467, %v4463
      %v4820 = vpack.c.b16 %v4468, %v4464
      %v4821 = vpack.c.b16 %v4473, %v4469
      %v4822 = vpack.c.b16 %v4474, %v4470
      %v4823 = vpack.c.b16 %v4475, %v4471
      %v4824 = vpack.c.b16 %v4476, %v4472
      %v4825 = vpack.c.b16 %v4481, %v4477
      %v4826 = vpack.c.b16 %v4482, %v4478
      %v4827 = vpack.c.b16 %v4483, %v4479
      %v4828 = vpack.c.b16 %v4484, %v4480
      %v4829 = vpack.c.b16 %v4489, %v4485
      %v4830 = vpack.c.b16 %v4490, %v4486
      %v4831 = vpack.c.b16 %v4491, %v4487
      %v4832 = vpack.c.b16 %v4492, %v4488
      %v4833 = vpack.c.b16 %v4497, %v4493
      %v4834 = vpack.c.b16 %v4498, %v4494
      %v4835 = vpack.c.b16 %v4499, %v4495
      %v4836 = vpack.c.b16 %v4500, %v4496
      %v4837 = vpack.c.b16 %v4505, %v4501
      %v4838 = vpack.c.b16 %v4506, %v4502
      %v4839 = vpack.c.b16 %v4507, %v4503
      %v4840 = vpack.c.b16 %v4508, %v4504
      %v4841 = vpack.c.b16 %v4513, %v4509
      %v4842 = vpack.c.b16 %v4514, %v4510
      %v4843 = vpack.c.b16 %v4515, %v4511
      %v4844 = vpack.c.b16 %v4516, %v4512
      %v4845 = vpack.c.b16 %v4521, %v4517
      %v4846 = vpack.c.b16 %v4522, %v4518
      %v4847 = vpack.c.b16 %v4523, %v4519
      %v4848 = vpack.c.b16 %v4524, %v4520
      %v4849 = vpack.c.b16 %v4529, %v4525
      %v4850 = vpack.c.b16 %v4530, %v4526
      %v4851 = vpack.c.b16 %v4531, %v4527
      %v4852 = vpack.c.b16 %v4532, %v4528
      %v4853 = vpack.c.b16 %v4537, %v4533
      %v4854 = vpack.c.b16 %v4538, %v4534
      %v4855 = vpack.c.b16 %v4539, %v4535
      %v4856 = vpack.c.b16 %v4540, %v4536
      %v4857 = vpack.c.b16 %v4545, %v4541
      %v4858 = vpack.c.b16 %v4546, %v4542
      %v4859 = vpack.c.b16 %v4547, %v4543
      %v4860 = vpack.c.b16 %v4548, %v4544
      %v4861 = vpack.c.b16 %v4553, %v4549
      %v4862 = vpack.c.b16 %v4554, %v4550
      %v4863 = vpack.c.b16 %v4555, %v4551
      %v4864 = vpack.c.b16 %v4556, %v4552
      %v4865 = vpack.c.b16 %v4561, %v4557
      %v4866 = vpack.c.b16 %v4562, %v4558
      %v4867 = vpack.c.b16 %v4563, %v4559
      %v4868 = vpack.c.b16 %v4564, %v4560
      %v4869 = vpack.c.b16 %v4569, %v4565
      %v4870 = vpack.c.b16 %v4570, %v4566
      %v4871 = vpack.c.b16 %v4571, %v4567
      %v4872 = vpack.c.b16 %v4572, %v4568
      %v4873 = vpack.c.b16 %v4577, %v4573
      %v4874 = vpack.c.b16 %v4578, %v4574
      %v4875 = vpack.c.b16 %v4579, %v4575
      %v4876 = vpack.c.b16 %v4580, %v4576
      %v4877 = vpack.c.b16 %v4585, %v4581
      %v4878 = vpack.c.b16 %v4586, %v4582
      %v4879 = vpack.c.b16 %v4587, %v4583
      %v4880 = vpack.c.b16 %v4588, %v4584
      %v4881 = vpack.c.b16 %v4593, %v4589
      %v4882 = vpack.c.b16 %v4594, %v4590
      %v4883 = vpack.c.b16 %v4595, %v4591
      %v4884 = vpack.c.b16 %v4596, %v4592
      %v4885 = vpack.c.b16 %v4601, %v4597
      %v4886 = vpack.c.b16 %v4602, %v4598
      %v4887 = vpack.c.b16 %v4603, %v4599
      %v4888 = vpack.c.b16 %v4604, %v4600
      %v4889 = vpack.c.b16 %v4609, %v4605
      %v4890 = vpack.c.b16 %v4610, %v4606
      %v4891 = vpack.c.b16 %v4611, %v4607
      %v4892 = vpack.c.b16 %v4612, %v4608
      %v4893 = vpack.c.b16 %v4617, %v4613
      %v4894 = vpack.c.b16 %v4618, %v4614
      %v4895 = vpack.c.b16 %v4619, %v4615
      %v4896 = vpack.c.b16 %v4620, %v4616
      %v4897 = vpack.c.b16 %v4625, %v4621
      %v4898 = vpack.c.b16 %v4626, %v4622
      %v4899 = vpack.c.b16 %v4627, %v4623
      %v4900 = vpack.c.b16 %v4628, %v4624
      %v4901 = vpack.c.b16 %v4633, %v4629
      %v4902 = vpack.c.b16 %v4634, %v4630
      %v4903 = vpack.c.b16 %v4635, %v4631
      %v4904 = vpack.c.b16 %v4636, %v4632
      %v4905 = vpack.c.b16 %v4641, %v4637
      %v4906 = vpack.c.b16 %v4642, %v4638
      %v4907 = vpack.c.b16 %v4643, %v4639
      %v4908 = vpack.c.b16 %v4644, %v4640
      %v4909 = vpack.c.b16 %v4649, %v4645
      %v4910 = vpack.c.b16 %v4650, %v4646
      %v4911 = vpack.c.b16 %v4651, %v4647
      %v4912 = vpack.c.b16 %v4652, %v4648
      %v4913 = vpack.c.b16 %v4657, %v4653
      %v4914 = vpack.c.b16 %v4658, %v4654
      %v4915 = vpack.c.b16 %v4659, %v4655
      %v4916 = vpack.c.b16 %v4660, %v4656
      %5173 = vmatprep.subr.bf16.mxu0 %v4662
      %5174 = vmatpush1.bf16.msra.mxu0 %v4661
      %5175 = vmatprep.subr.bf16.mxu0 %v4666
      %5176 = vmatpush1.bf16.msra.mxu0 %v4665
      %5177 = vmatprep.subr.bf16.mxu0 %v4670
      %5178 = vmatpush1.bf16.msra.mxu0 %v4669
      %5179 = vmatprep.subr.bf16.mxu0 %v4674
      %5180 = vmatpush1.bf16.msra.mxu0 %v4673
      %5181 = vmatprep.subr.bf16.mxu0 %v4678
      %5182 = vmatpush1.bf16.msra.mxu0 %v4677
      %5183 = vmatprep.subr.bf16.mxu0 %v4682
      %5184 = vmatpush1.bf16.msra.mxu0 %v4681
      %5185 = vmatprep.subr.bf16.mxu0 %v4686
      %5186 = vmatpush1.bf16.msra.mxu0 %v4685
      %5187 = vmatprep.subr.bf16.mxu0 %v4690
      %5188 = vmatpush1.bf16.msra.mxu0 %v4689
      %5189 = vmatprep.subr.bf16.mxu0 %v4694
      %5190 = vmatpush1.bf16.msra.mxu0 %v4693
      %5191 = vmatprep.subr.bf16.mxu0 %v4698
      %5192 = vmatpush1.bf16.msra.mxu0 %v4697
      %5193 = vmatprep.subr.bf16.mxu0 %v4702
      %5194 = vmatpush1.bf16.msra.mxu0 %v4701
      %5195 = vmatprep.subr.bf16.mxu0 %v4706
      %5196 = vmatpush1.bf16.msra.mxu0 %v4705
      %5197 = vmatprep.subr.bf16.mxu0 %v4710
      %5198 = vmatpush1.bf16.msra.mxu0 %v4709
      %5199 = vmatprep.subr.bf16.mxu0 %v4714
      %5200 = vmatpush1.bf16.msra.mxu0 %v4713
      %5201 = vmatprep.subr.bf16.mxu0 %v4718
      %5202 = vmatpush1.bf16.msra.mxu0 %v4717
      %5203 = vmatprep.subr.bf16.mxu0 %v4722
      %5204 = vmatpush1.bf16.msra.mxu0 %v4721
      %5205 = vmatprep.mubr.bf16.mxu0 %v3626
      %5206 = vmatmul.mubr.bf16.gmra.mrb[0].mxu0 %v3621
      %v5207 = vpop.f32.mrb[0].mxu0
      %v5208 = vadd.f32 0.0, %v5207
      %v5209 = vpop.f32.mrb[0].mxu0
      %v5210 = vadd.f32 0.0, %v5209
      %v5211 = vpop.f32.mrb[0].mxu0
      %v5212 = vpop.f32.mrb[0].mxu0
      %5213 = vdwg.mxu0
      %5214 = vmatprep.subr.bf16.mxu0 %v4726
      %5215 = vmatpush1.bf16.msra.mxu0 %v4725
      %5216 = vmatprep.subr.bf16.mxu0 %v4730
      %5217 = vmatpush1.bf16.msra.mxu0 %v4729
      %5218 = vmatprep.subr.bf16.mxu0 %v4734
      %5219 = vmatpush1.bf16.msra.mxu0 %v4733
      %5220 = vmatprep.subr.bf16.mxu0 %v4738
      %5221 = vmatpush1.bf16.msra.mxu0 %v4737
      %5222 = vmatprep.subr.bf16.mxu0 %v4742
      %5223 = vmatpush1.bf16.msra.mxu0 %v4741
      %5224 = vmatprep.subr.bf16.mxu0 %v4746
      %5225 = vmatpush1.bf16.msra.mxu0 %v4745
      %5226 = vmatprep.subr.bf16.mxu0 %v4750
      %5227 = vmatpush1.bf16.msra.mxu0 %v4749
      %5228 = vmatprep.subr.bf16.mxu0 %v4754
      %5229 = vmatpush1.bf16.msra.mxu0 %v4753
      %5230 = vmatprep.subr.bf16.mxu0 %v4758
      %5231 = vmatpush1.bf16.msra.mxu0 %v4757
      %5232 = vmatprep.subr.bf16.mxu0 %v4762
      %5233 = vmatpush1.bf16.msra.mxu0 %v4761
      %5234 = vmatprep.subr.bf16.mxu0 %v4766
      %5235 = vmatpush1.bf16.msra.mxu0 %v4765
      %5236 = vmatprep.subr.bf16.mxu0 %v4770
      %5237 = vmatpush1.bf16.msra.mxu0 %v4769
      %5238 = vmatprep.subr.bf16.mxu0 %v4774
      %5239 = vmatpush1.bf16.msra.mxu0 %v4773
      %5240 = vmatprep.subr.bf16.mxu0 %v4778
      %5241 = vmatpush1.bf16.msra.mxu0 %v4777
      %5242 = vmatprep.subr.bf16.mxu0 %v4782
      %5243 = vmatpush1.bf16.msra.mxu0 %v4781
      %5244 = vmatprep.subr.bf16.mxu0 %v4786
      %5245 = vmatpush1.bf16.msra.mxu0 %v4785
      %5246 = vmatprep.mubr.bf16.mxu0 %v3629
      %5247 = vmatmul.mubr.bf16.gmra.mrb[0].mxu0 %v3622
      %v5248 = vpop.f32.mrb[0].mxu0
      %v5249 = vadd.f32 %v5208, %v5248
      %v5250 = vpop.f32.mrb[0].mxu0
      %v5251 = vadd.f32 %v5210, %v5250
      %v5252 = vpop.f32.mrb[0].mxu0
      %v5253 = vpop.f32.mrb[0].mxu0
      %5254 = vdwg.mxu0
      %5255 = vmatprep.subr.bf16.mxu0 %v4790
      %5256 = vmatpush1.bf16.msra.mxu0 %v4789
      %5257 = vmatprep.subr.bf16.mxu0 %v4794
      %5258 = vmatpush1.bf16.msra.mxu0 %v4793
      %5259 = vmatprep.subr.bf16.mxu0 %v4798
      %5260 = vmatpush1.bf16.msra.mxu0 %v4797
      %5261 = vmatprep.subr.bf16.mxu0 %v4802
      %5262 = vmatpush1.bf16.msra.mxu0 %v4801
      %5263 = vmatprep.subr.bf16.mxu0 %v4806
      %5264 = vmatpush1.bf16.msra.mxu0 %v4805
      %5265 = vmatprep.subr.bf16.mxu0 %v4810
      %5266 = vmatpush1.bf16.msra.mxu0 %v4809
      %5267 = vmatprep.subr.bf16.mxu0 %v4814
      %5268 = vmatpush1.bf16.msra.mxu0 %v4813
      %5269 = vmatprep.subr.bf16.mxu0 %v4818
      %5270 = vmatpush1.bf16.msra.mxu0 %v4817
      %5271 = vmatprep.subr.bf16.mxu0 %v4822
      %5272 = vmatpush1.bf16.msra.mxu0 %v4821
      %5273 = vmatprep.subr.bf16.mxu0 %v4826
      %5274 = vmatpush1.bf16.msra.mxu0 %v4825
      %5275 = vmatprep.subr.bf16.mxu0 %v4830
      %5276 = vmatpush1.bf16.msra.mxu0 %v4829
      %5277 = vmatprep.subr.bf16.mxu0 %v4834
      %5278 = vmatpush1.bf16.msra.mxu0 %v4833
      %5279 = vmatprep.subr.bf16.mxu0 %v4838
      %5280 = vmatpush1.bf16.msra.mxu0 %v4837
      %5281 = vmatprep.subr.bf16.mxu0 %v4842
      %5282 = vmatpush1.bf16.msra.mxu0 %v4841
      %5283 = vmatprep.subr.bf16.mxu0 %v4846
      %5284 = vmatpush1.bf16.msra.mxu0 %v4845
      %5285 = vmatprep.subr.bf16.mxu0 %v4850
      %5286 = vmatpush1.bf16.msra.mxu0 %v4849
      %5287 = vmatprep.mubr.bf16.mxu0 %v3632
      %5288 = vmatmul.mubr.bf16.gmra.mrb[0].mxu0 %v3623
      %v5289 = vpop.f32.mrb[0].mxu0
      %v5290 = vadd.f32 %v5249, %v5289
      %v5291 = vpop.f32.mrb[0].mxu0
      %v5292 = vadd.f32 %v5251, %v5291
      %v5293 = vpop.f32.mrb[0].mxu0
      %v5294 = vpop.f32.mrb[0].mxu0
      %5295 = vdwg.mxu0
      %5296 = vmatprep.subr.bf16.mxu0 %v4854
      %5297 = vmatpush1.bf16.msra.mxu0 %v4853
      %5298 = vmatprep.subr.bf16.mxu0 %v4858
      %5299 = vmatpush1.bf16.msra.mxu0 %v4857
      %5300 = vmatprep.subr.bf16.mxu0 %v4862
      %5301 = vmatpush1.bf16.msra.mxu0 %v4861
      %5302 = vmatprep.subr.bf16.mxu0 %v4866
      %5303 = vmatpush1.bf16.msra.mxu0 %v4865
      %5304 = vmatprep.subr.bf16.mxu0 %v4870
      %5305 = vmatpush1.bf16.msra.mxu0 %v4869
      %5306 = vmatprep.subr.bf16.mxu0 %v4874
      %5307 = vmatpush1.bf16.msra.mxu0 %v4873
      %5308 = vmatprep.subr.bf16.mxu0 %v4878
      %5309 = vmatpush1.bf16.msra.mxu0 %v4877
      %5310 = vmatprep.subr.bf16.mxu0 %v4882
      %5311 = vmatpush1.bf16.msra.mxu0 %v4881
      %5312 = vmatprep.subr.bf16.mxu0 %v4886
      %5313 = vmatpush1.bf16.msra.mxu0 %v4885
      %5314 = vmatprep.subr.bf16.mxu0 %v4890
      %5315 = vmatpush1.bf16.msra.mxu0 %v4889
      %5316 = vmatprep.subr.bf16.mxu0 %v4894
      %5317 = vmatpush1.bf16.msra.mxu0 %v4893
      %5318 = vmatprep.subr.bf16.mxu0 %v4898
      %5319 = vmatpush1.bf16.msra.mxu0 %v4897
      %5320 = vmatprep.subr.bf16.mxu0 %v4902
      %5321 = vmatpush1.bf16.msra.mxu0 %v4901
      %5322 = vmatprep.subr.bf16.mxu0 %v4906
      %5323 = vmatpush1.bf16.msra.mxu0 %v4905
      %5324 = vmatprep.subr.bf16.mxu0 %v4910
      %5325 = vmatpush1.bf16.msra.mxu0 %v4909
      %5326 = vmatprep.subr.bf16.mxu0 %v4914
      %5327 = vmatpush1.bf16.msra.mxu0 %v4913
      %5328 = vmatprep.mubr.bf16.mxu0 %v3635
      %5329 = vmatmul.mubr.bf16.gmra.mrb[0].mxu0 %v3624
      %v5330 = vpop.f32.mrb[0].mxu0
      %v5331 = vadd.f32 %v5290, %v5330
      %v5332 = vpop.f32.mrb[0].mxu0
      %v5333 = vadd.f32 %v5292, %v5332
      %v5334 = vpop.f32.mrb[0].mxu0
      %v5335 = vpop.f32.mrb[0].mxu0
      %5336 = vdwg.mxu0
      %5337 = vmatprep.subr.bf16.mxu0 %v4664
      %5338 = vmatpush1.bf16.msra.mxu0 %v4663
      %5339 = vmatprep.subr.bf16.mxu0 %v4668
      %5340 = vmatpush1.bf16.msra.mxu0 %v4667
      %5341 = vmatprep.subr.bf16.mxu0 %v4672
      %5342 = vmatpush1.bf16.msra.mxu0 %v4671
      %5343 = vmatprep.subr.bf16.mxu0 %v4676
      %5344 = vmatpush1.bf16.msra.mxu0 %v4675
      %5345 = vmatprep.subr.bf16.mxu0 %v4680
      %5346 = vmatpush1.bf16.msra.mxu0 %v4679
      %5347 = vmatprep.subr.bf16.mxu0 %v4684
      %5348 = vmatpush1.bf16.msra.mxu0 %v4683
      %5349 = vmatprep.subr.bf16.mxu0 %v4688
      %5350 = vmatpush1.bf16.msra.mxu0 %v4687
      %5351 = vmatprep.subr.bf16.mxu0 %v4692
      %5352 = vmatpush1.bf16.msra.mxu0 %v4691
      %5353 = vmatprep.subr.bf16.mxu0 %v4696
      %5354 = vmatpush1.bf16.msra.mxu0 %v4695
      %5355 = vmatprep.subr.bf16.mxu0 %v4700
      %5356 = vmatpush1.bf16.msra.mxu0 %v4699
      %5357 = vmatprep.subr.bf16.mxu0 %v4704
      %5358 = vmatpush1.bf16.msra.mxu0 %v4703
      %5359 = vmatprep.subr.bf16.mxu0 %v4708
      %5360 = vmatpush1.bf16.msra.mxu0 %v4707
      %5361 = vmatprep.subr.bf16.mxu0 %v4712
      %5362 = vmatpush1.bf16.msra.mxu0 %v4711
      %5363 = vmatprep.subr.bf16.mxu0 %v4716
      %5364 = vmatpush1.bf16.msra.mxu0 %v4715
      %5365 = vmatprep.subr.bf16.mxu0 %v4720
      %5366 = vmatpush1.bf16.msra.mxu0 %v4719
      %5367 = vmatprep.subr.bf16.mxu0 %v4724
      %5368 = vmatpush1.bf16.msra.mxu0 %v4723
      %5369 = vmatprep.mubr.bf16.mxu0 %v3626
      %5370 = vmatmul.mubr.bf16.gmra.mrb[0].mxu0 %v3621
      %v5371 = vpop.f32.mrb[0].mxu0
      %v5372 = vadd.f32 0.0, %v5371
      %v5373 = vpop.f32.mrb[0].mxu0
      %v5374 = vadd.f32 0.0, %v5373
      %v5375 = vpop.f32.mrb[0].mxu0
      %v5376 = vpop.f32.mrb[0].mxu0
      %5377 = vdwg.mxu0
      %5378 = vmatprep.subr.bf16.mxu0 %v4728
      %5379 = vmatpush1.bf16.msra.mxu0 %v4727
      %5380 = vmatprep.subr.bf16.mxu0 %v4732
      %5381 = vmatpush1.bf16.msra.mxu0 %v4731
      %5382 = vmatprep.subr.bf16.mxu0 %v4736
      %5383 = vmatpush1.bf16.msra.mxu0 %v4735
      %5384 = vmatprep.subr.bf16.mxu0 %v4740
      %5385 = vmatpush1.bf16.msra.mxu0 %v4739
      %5386 = vmatprep.subr.bf16.mxu0 %v4744
      %5387 = vmatpush1.bf16.msra.mxu0 %v4743
      %5388 = vmatprep.subr.bf16.mxu0 %v4748
      %5389 = vmatpush1.bf16.msra.mxu0 %v4747
      %5390 = vmatprep.subr.bf16.mxu0 %v4752
      %5391 = vmatpush1.bf16.msra.mxu0 %v4751
      %5392 = vmatprep.subr.bf16.mxu0 %v4756
      %5393 = vmatpush1.bf16.msra.mxu0 %v4755
      %5394 = vmatprep.subr.bf16.mxu0 %v4760
      %5395 = vmatpush1.bf16.msra.mxu0 %v4759
      %5396 = vmatprep.subr.bf16.mxu0 %v4764
      %5397 = vmatpush1.bf16.msra.mxu0 %v4763
      %5398 = vmatprep.subr.bf16.mxu0 %v4768
      %5399 = vmatpush1.bf16.msra.mxu0 %v4767
      %5400 = vmatprep.subr.bf16.mxu0 %v4772
      %5401 = vmatpush1.bf16.msra.mxu0 %v4771
      %5402 = vmatprep.subr.bf16.mxu0 %v4776
      %5403 = vmatpush1.bf16.msra.mxu0 %v4775
      %5404 = vmatprep.subr.bf16.mxu0 %v4780
      %5405 = vmatpush1.bf16.msra.mxu0 %v4779
      %5406 = vmatprep.subr.bf16.mxu0 %v4784
      %5407 = vmatpush1.bf16.msra.mxu0 %v4783
      %5408 = vmatprep.subr.bf16.mxu0 %v4788
      %5409 = vmatpush1.bf16.msra.mxu0 %v4787
      %5410 = vmatprep.mubr.bf16.mxu0 %v3629
      %5411 = vmatmul.mubr.bf16.gmra.mrb[0].mxu0 %v3622
      %v5412 = vpop.f32.mrb[0].mxu0
      %v5413 = vadd.f32 %v5372, %v5412
      %v5414 = vpop.f32.mrb[0].mxu0
      %v5415 = vadd.f32 %v5374, %v5414
      %v5416 = vpop.f32.mrb[0].mxu0
      %v5417 = vpop.f32.mrb[0].mxu0
      %5418 = vdwg.mxu0
      %5419 = vmatprep.subr.bf16.mxu0 %v4792
      %5420 = vmatpush1.bf16.msra.mxu0 %v4791
      %5421 = vmatprep.subr.bf16.mxu0 %v4796
      %5422 = vmatpush1.bf16.msra.mxu0 %v4795
      %5423 = vmatprep.subr.bf16.mxu0 %v4800
      %5424 = vmatpush1.bf16.msra.mxu0 %v4799
      %5425 = vmatprep.subr.bf16.mxu0 %v4804
      %5426 = vmatpush1.bf16.msra.mxu0 %v4803
      %5427 = vmatprep.subr.bf16.mxu0 %v4808
      %5428 = vmatpush1.bf16.msra.mxu0 %v4807
      %5429 = vmatprep.subr.bf16.mxu0 %v4812
      %5430 = vmatpush1.bf16.msra.mxu0 %v4811
      %5431 = vmatprep.subr.bf16.mxu0 %v4816
      %5432 = vmatpush1.bf16.msra.mxu0 %v4815
      %5433 = vmatprep.subr.bf16.mxu0 %v4820
      %5434 = vmatpush1.bf16.msra.mxu0 %v4819
      %5435 = vmatprep.subr.bf16.mxu0 %v4824
      %5436 = vmatpush1.bf16.msra.mxu0 %v4823
      %5437 = vmatprep.subr.bf16.mxu0 %v4828
      %5438 = vmatpush1.bf16.msra.mxu0 %v4827
      %5439 = vmatprep.subr.bf16.mxu0 %v4832
      %5440 = vmatpush1.bf16.msra.mxu0 %v4831
      %5441 = vmatprep.subr.bf16.mxu0 %v4836
      %5442 = vmatpush1.bf16.msra.mxu0 %v4835
      %5443 = vmatprep.subr.bf16.mxu0 %v4840
      %5444 = vmatpush1.bf16.msra.mxu0 %v4839
      %5445 = vmatprep.subr.bf16.mxu0 %v4844
      %5446 = vmatpush1.bf16.msra.mxu0 %v4843
      %5447 = vmatprep.subr.bf16.mxu0 %v4848
      %5448 = vmatpush1.bf16.msra.mxu0 %v4847
      %5449 = vmatprep.subr.bf16.mxu0 %v4852
      %5450 = vmatpush1.bf16.msra.mxu0 %v4851
      %5451 = vmatprep.mubr.bf16.mxu0 %v3632
      %5452 = vmatmul.mubr.bf16.gmra.mrb[0].mxu0 %v3623
      %v5453 = vpop.f32.mrb[0].mxu0
      %v5454 = vadd.f32 %v5413, %v5453
      %v5455 = vpop.f32.mrb[0].mxu0
      %v5456 = vadd.f32 %v5415, %v5455
      %v5457 = vpop.f32.mrb[0].mxu0
      %v5458 = vpop.f32.mrb[0].mxu0
      %5459 = vdwg.mxu0
      %5460 = vmatprep.subr.bf16.mxu0 %v4856
      %5461 = vmatpush1.bf16.msra.mxu0 %v4855
      %5462 = vmatprep.subr.bf16.mxu0 %v4860
      %5463 = vmatpush1.bf16.msra.mxu0 %v4859
      %5464 = vmatprep.subr.bf16.mxu0 %v4864
      %5465 = vmatpush1.bf16.msra.mxu0 %v4863
      %5466 = vmatprep.subr.bf16.mxu0 %v4868
      %5467 = vmatpush1.bf16.msra.mxu0 %v4867
      %5468 = vmatprep.subr.bf16.mxu0 %v4872
      %5469 = vmatpush1.bf16.msra.mxu0 %v4871
      %5470 = vmatprep.subr.bf16.mxu0 %v4876
      %5471 = vmatpush1.bf16.msra.mxu0 %v4875
      %5472 = vmatprep.subr.bf16.mxu0 %v4880
      %5473 = vmatpush1.bf16.msra.mxu0 %v4879
      %5474 = vmatprep.subr.bf16.mxu0 %v4884
      %5475 = vmatpush1.bf16.msra.mxu0 %v4883
      %5476 = vmatprep.subr.bf16.mxu0 %v4888
      %5477 = vmatpush1.bf16.msra.mxu0 %v4887
      %5478 = vmatprep.subr.bf16.mxu0 %v4892
      %5479 = vmatpush1.bf16.msra.mxu0 %v4891
      %5480 = vmatprep.subr.bf16.mxu0 %v4896
      %5481 = vmatpush1.bf16.msra.mxu0 %v4895
      %5482 = vmatprep.subr.bf16.mxu0 %v4900
      %5483 = vmatpush1.bf16.msra.mxu0 %v4899
      %5484 = vmatprep.subr.bf16.mxu0 %v4904
      %5485 = vmatpush1.bf16.msra.mxu0 %v4903
      %5486 = vmatprep.subr.bf16.mxu0 %v4908
      %5487 = vmatpush1.bf16.msra.mxu0 %v4907
      %5488 = vmatprep.subr.bf16.mxu0 %v4912
      %5489 = vmatpush1.bf16.msra.mxu0 %v4911
      %5490 = vmatprep.subr.bf16.mxu0 %v4916
      %5491 = vmatpush1.bf16.msra.mxu0 %v4915
      %5492 = vmatprep.mubr.bf16.mxu0 %v3635
      %5493 = vmatmul.mubr.bf16.gmra.mrb[0].mxu0 %v3624
      %v5494 = vpop.f32.mrb[0].mxu0
      %v5495 = vadd.f32 %v5454, %v5494
      %v5496 = vpop.f32.mrb[0].mxu0
      %v5497 = vadd.f32 %v5456, %v5496
      %v5498 = vpop.f32.mrb[0].mxu0
      %v5499 = vpop.f32.mrb[0].mxu0
      %5500 = vdwg.mxu0
      %v5501 = vmul.f32 %v5331, 0.2
      %v5502 = vmul.f32 %v5333, 0.2
      %v5503 = vmul.f32 %v5495, 0.2
      %v5504 = vmul.f32 %v5497, 0.2
      %v5505 = vmax.f32 %v5331, %v5501
      %v5506 = vmax.f32 %v5333, %v5502
      %v5507 = vmax.f32 %v5495, %v5503
      %v5508 = vmax.f32 %v5497, %v5504
      %v5509 = vld [vmem:[%s5] sm:$0xf]
      %v5511 = vlaneseq
      %v5512 = vshrl.u32 %v5511, 7
      %v5513 = vsub.s32 0, %v5512
      %v5514 = vrot.slane %v5509, %v5513
      %v5515 = vlaneseq
      %v5516 = vshrl.u32 %v5515, 7
      %v5517 = vsub.s32 1, %v5516
      %v5518 = vrot.slane %v5509, %v5517
      %v5519 = vlaneseq
      %v5520 = vshrl.u32 %v5519, 7
      %v5521 = vsub.s32 2, %v5520
      %v5522 = vrot.slane %v5509, %v5521
      %v5523 = vlaneseq
      %v5524 = vshrl.u32 %v5523, 7
      %v5525 = vsub.s32 3, %v5524
      %v5526 = vrot.slane %v5509, %v5525
      %v5531 = vmul.f32 %v5505, %v5514
      %v5532 = vmul.f32 %v5506, %v5518
      %v5533 = vmul.f32 %v5507, %v5522
      %v5534 = vmul.f32 %v5508, %v5526
      %v5535 = vadd.f32 %v5531, %v5532
      %v5536 = vadd.f32 %v5535, %v5533
      %v5537 = vadd.f32 %v5536, %v5534
      %5538 = vadd.xlane.f32.xlu0 %v5537
      %v5539 = vpop.xlane.xlu0 %5538
      %v5540 = vand.u32 2147483647, %v5539
      %v5541 = vsub.f32 0.0, %v5540
      %v5542 = vmul.f32 %v5541, 1.442695
      %v5543 = vpow.pop %v5542
      %vm5544 = vcmp.ge.f32.partialorder %v5539, 0.0
      %v5545 = vadd.f32 %v5543, 1.0
      %v5546 = vrcp.pop %v5545
      %v5547 = vmul.f32 1.0, %v5546
      %v5548 = vmul.f32 %v5543, %v5546
      %v5549 = vsel %vm5544, %v5547, %v5548
      %vm5550 = vcmask 7168
      %5551 = vst.msk [vmem:[%s279] sm:$0xff] %vm5550, %v5549
      %p5552 = scmp.lt.s32.totalorder %s17, 1
      %s5553 = scalar_select %p5552, %s17, 1
      %s5554 = smul.addr %s5553, 8
      %s5555 = scalar_lea.vmem %s6, %s5554
      // Predicated region
      $region45: #{forward.1} parent=43 // pred_check
        %p5556 = pneg %p171
      $region46: #{forward.1} parent=43 // pred_check_branch
        %5558 = sbr.rel (%p5556) target = $region48
      $region47: #{forward.1} parent=43 // pred_region
        _
      $region48: #{forward.1} parent=43 // pred_fallthru
        _
    $region44: #{forward.1} parent=5 // pred_fallthru
      _
    %p5559 = scmp.le.s32.totalorder 2, %s12
    // Predicated region
    $region49: #{forward.1} parent=5 // pred_check
      %p5560 = pneg %p5559
    $region50: #{forward.1} parent=5 // pred_check_branch
      %5562 = sbr.rel (%p5560) target = $region52
    $region51: #{forward.1} parent=5 // pred_region
      %s5563 = ssub.s32 %s12, 2
      // Predicated region
      $region53: #{forward.1} parent=51 // pred_check
        %p5564 = pneg %p177
      $region54: #{forward.1} parent=51 // pred_check_branch
        %5566 = sbr.rel (%p5564) target = $region56
      $region55: #{forward.1} parent=51 // pred_region
        %p5567 = scmp.lt.s32.totalorder %s18, 1
        %s5568 = scalar_select %p5567, %s18, 1
        %s5569 = smul.addr %s5568, 8
        %s5570 = scalar_lea.vmem %s6, %s5569
      $region56: #{forward.1} parent=51 // pred_fallthru
        _
    $region52: #{forward.1} parent=5 // pred_fallthru
      _
  $region6: #{forward.1} parent=0 // loop_footer
    %s16 = sadd.s32 1, %s12
  $region7: #{forward.1} parent=0 // loop_footer_branch
    %11 = sbr.rel target = $region3
  $region8: #{forward.1} parent=0 // loop_exit
    _

</llo_original>
